<compile_context>
chip_gen: v7x
topology: tpu7x:2x2x1
jax: 0.10.0
libtpu: 0.0.40
codegen_flags: <defaults>
</compile_context>

<pallas_src>
import functools
import math

import jax
import jax.numpy as jnp
from jax import lax
from jax.experimental import pallas as pl
from jax.experimental.pallas import tpu as pltpu


# ----------------------------------------------------------------------------
# small helpers
# ----------------------------------------------------------------------------
def _round_up(x, m):
    return (x + m - 1) // m * m


def _pad_axis(x, axis, new_size):
    if x.shape[axis] == new_size:
        return x
    pads = [(0, 0)] * x.ndim
    pads[axis] = (0, new_size - x.shape[axis])
    return jnp.pad(x, pads)


def _pick_tile(dim, candidates):
    for t in candidates:
        if dim % t == 0:
            return t
    return dim


# ----------------------------------------------------------------------------
# Pallas kernels (single K block: no scratch accumulator, epilogue fused)
# ----------------------------------------------------------------------------
def _gemm_bn_kernel(a_ref, b_ref, t_ref, o_ref, *, relu):
    """o = act(a @ b + shift); bf16 operands, f32 accumulate on the MXU."""
    y = jnp.dot(a_ref[...], b_ref[...], preferred_element_type=jnp.float32) + t_ref[...]
    if relu:
        y = jnp.maximum(y, 0.0)
    o_ref[...] = y.astype(o_ref.dtype)


def _gemm_bn_res_kernel(a_ref, b_ref, t_ref, r_ref, o_ref, *, relu):
    """o = act(a @ b + shift + residual)  (identity-residual path)."""
    y = (jnp.dot(a_ref[...], b_ref[...], preferred_element_type=jnp.float32)
         + t_ref[...] + r_ref[...].astype(jnp.float32))
    if relu:
        y = jnp.maximum(y, 0.0)
    o_ref[...] = y.astype(o_ref.dtype)


def _gemm2_bn_kernel(a_ref, b_ref, t_ref, a2_ref, b2_ref, o_ref, *, relu):
    """o = act(a @ b + a2 @ b2 + shift)  (conv3 fused with the downsample branch)."""
    y = jnp.dot(a_ref[...], b_ref[...], preferred_element_type=jnp.float32)
    y = y + jnp.dot(a2_ref[...], b2_ref[...], preferred_element_type=jnp.float32)
    y = y + t_ref[...]
    if relu:
        y = jnp.maximum(y, 0.0)
    o_ref[...] = y.astype(o_ref.dtype)


def _conv3x3_bn_kernel(x_ref, w_ref, t_ref, o_ref, *, stride, Ho, Wo, relu):
    """Implicit-GEMM 3x3 conv (stride s, pad 1) for one image.

    x_ref: (P, L, Cin)   phase-split, spatially-flattened, zero-padded input
                         (P = s*s).  Tap (di, dj) is the contiguous row range
                         [start, start + Ho*(Wo+2)) of phase (di%s)*s + (dj%s),
                         start = (di//s)*(Wo+2) + (dj//s).
    w_ref: (9, Cin, Nt)  per-tap weights with the BN scale folded in.
    t_ref: (1, Nt)       BN shift.
    o_ref: (1, Ho*(Wo+2), Nt)  output incl. 2 garbage columns/row (dropped host-side).
    """
    s = stride
    Wg = Wo + 2
    Mg = Ho * Wg
    acc = jnp.zeros((Mg, o_ref.shape[-1]), jnp.float32)
    for di in range(3):
        for dj in range(3):
            p = (di % s) * s + (dj % s)
            start = (di // s) * Wg + (dj // s)
            a = x_ref[p, start:start + Mg, :]
            acc = acc + jnp.dot(a, w_ref[3 * di + dj],
                                preferred_element_type=jnp.float32)
    y = acc + t_ref[...]
    if relu:
        y = jnp.maximum(y, 0.0)
    o_ref[0] = y.astype(o_ref.dtype)


# ----------------------------------------------------------------------------
# Wrappers around pallas_call
# ----------------------------------------------------------------------------
def fused_gemm(a, b, shift, *, a2=None, b2=None, residual=None, relu=False):
    """out[M, Nout] = act(a @ b + shift [+ a2 @ b2] [+ residual]).

    Single-K-block GEMM: no K grid axis, no f32 scratch, epilogue fused.
    bf16 operands on the MXU, f32 accumulation, bf16 output.
    If the producer left lane padding on `a` (a.shape[1] > b.shape[0]), `b`
    gets zero K rows appended instead of slicing/re-padding the activation.
    """
    M, K1 = a.shape
    if b.shape[0] < K1:                       # consume lane-padded producer output
        b = _pad_axis(b, 0, K1)
    Nout = b.shape[1]

    Mp = _round_up(M, 8)
    Np = Nout if Nout < 128 else _round_up(Nout, 128)

    a_p = _pad_axis(a.astype(jnp.bfloat16), 0, Mp)
    b_p = _pad_axis(b.astype(jnp.bfloat16), 1, Np)
    t_p = _pad_axis(shift.astype(jnp.float32).reshape(1, Nout), 1, Np)

    # Lane-dense N tiles; split M only when N does not already give >=2 parallel
    # tiles (v7x megacore); on 1-TC chips the extra grid step is ~0.35us, negligible.
    tn = Np if Np <= 256 else _pick_tile(Np, (512, 256, 128))
    if Np // tn >= 2 or Mp < 16:
        tm_cap = 512
    else:
        tm_cap = max(8, Mp // 2)
    tm = next((t for t in (512, 256, 128, 64, 32, 16, 8)
               if t <= tm_cap and Mp % t == 0), Mp)

    in_specs = [pl.BlockSpec((tm, K1), lambda i, j: (i, 0)),
                pl.BlockSpec((K1, tn), lambda i, j: (0, j)),
                pl.BlockSpec((1, tn), lambda i, j: (0, j))]
    args = [a_p, b_p, t_p]

    if a2 is not None:
        K2 = a2.shape[1]
        if b2.shape[0] < K2:
            b2 = _pad_axis(b2, 0, K2)
        a2_p = _pad_axis(a2.astype(jnp.bfloat16), 0, Mp)
        b2_p = _pad_axis(b2.astype(jnp.bfloat16), 1, Np)
        in_specs += [pl.BlockSpec((tm, K2), lambda i, j: (i, 0)),
                     pl.BlockSpec((K2, tn), lambda i, j: (0, j))]
        args += [a2_p, b2_p]
        kernel = functools.partial(_gemm2_bn_kernel, relu=relu)
    elif residual is not None:
        r_p = _pad_axis(_pad_axis(residual.astype(jnp.bfloat16), 0, Mp), 1, Np)
        in_specs += [pl.BlockSpec((tm, tn), lambda i, j: (i, j))]
        args += [r_p]
        kernel = functools.partial(_gemm_bn_res_kernel, relu=relu)
    else:
        kernel = functools.partial(_gemm_bn_kernel, relu=relu)

    out = pl.pallas_call(
        kernel,
        out_shape=jax.ShapeDtypeStruct((Mp, Np), jnp.bfloat16),
        grid_spec=pltpu.PrefetchScalarGridSpec(
            num_scalar_prefetch=0,
            grid=(Mp // tm, Np // tn),
            in_specs=in_specs,
            out_specs=pl.BlockSpec((tm, tn), lambda i, j: (i, j)),
        ),
        compiler_params=pltpu.CompilerParams(
            dimension_semantics=("parallel", "parallel")),
    )(*args)

    if (Mp, Np) != (M, Nout):
        out = out[:M, :Nout]
    return out


def _phase_split_flat(x_nhwc, stride, Ho, Wo):
    """(N,H,W,C) -> (N*P, L, C) phase-split, flattened, zero-padded view of the
    1-padded input such that every 3x3/stride-s tap is a contiguous row range.
    Total size ~= the activation itself (vs. 9x for an im2col patch tensor)."""
    N, H, W, C = x_nhwc.shape
    s = stride
    Wg = Wo + 2
    rows_ph = Ho + 2 + (1 if s == 1 else 0)   # enough rows for the wrap-around tail
    xp = jnp.pad(x_nhwc, ((0, 0), (1, 1), (1, 1), (0, 0)))
    phases = []
    for p in range(s):
        for q in range(s):
            ph = xp[:, p::s, q::s, :]
            ph = ph[:, :rows_ph, :Wg, :]
            ph = _pad_axis(_pad_axis(ph, 1, rows_ph), 2, Wg)
            phases.append(ph)
    xph = jnp.stack(phases, axis=1)                       # (N, P, rows_ph, Wg, C)
    return xph.reshape(N * s * s, rows_ph * Wg, C)


def conv3x3_bn(x_nhwc, w_taps, shift, *, stride, relu=True):
    """3x3 conv (stride, pad=1) + BN shift + ReLU as one implicit-GEMM pallas_call."""
    N, H, W, Cin = x_nhwc.shape
    Ho = (H - 1) // stride + 1
    Wo = (W - 1) // stride + 1
    Cout = w_taps.shape[-1]
    assert w_taps.shape == (9, Cin, Cout)

    xph = _phase_split_flat(x_nhwc.astype(jnp.bfloat16), stride, Ho, Wo)
    P = stride * stride
    L = xph.shape[1]
    Wg = Wo + 2
    Mg = Ho * Wg

    Np = Cout if Cout < 128 else _round_up(Cout, 128)
    w_p = _pad_axis(w_taps.astype(jnp.bfloat16), 2, Np)
    t_p = _pad_axis(shift.astype(jnp.float32).reshape(1, Cout), 1, Np)
    tn = Np if Np <= 256 else _pick_tile(Np, (256, 128))

    out = pl.pallas_call(
        functools.partial(_conv3x3_bn_kernel, stride=stride, Ho=Ho, Wo=Wo, relu=relu),
        out_shape=jax.ShapeDtypeStruct((N, Mg, Np), jnp.bfloat16),
        grid_spec=pltpu.PrefetchScalarGridSpec(
            num_scalar_prefetch=0,
            grid=(N, Np // tn),
            in_specs=[
                pl.BlockSpec((P, L, Cin), lambda n, j: (n, 0, 0)),
                pl.BlockSpec((9, Cin, tn), lambda n, j: (0, 0, j)),
                pl.BlockSpec((1, tn), lambda n, j: (0, j)),
            ],
            out_specs=pl.BlockSpec((1, Mg, tn), lambda n, j: (n, 0, j)),
        ),
        compiler_params=pltpu.CompilerParams(
            dimension_semantics=("parallel", "parallel")),
    )(xph, w_p, t_p)

    # Drop the 2 garbage columns per row introduced by the flat-spatial trick.
    out = out.reshape(N, Ho, Wg, Np)[:, :, :Wo, :Cout]
    return out, Ho, Wo


# ----------------------------------------------------------------------------
# Host-side weight preparation (BN folding, GEMM/tap layout, bf16 cast)
# ----------------------------------------------------------------------------
def _bn_fold(bn, eps=1e-5):
    scale = bn["gamma"] / jnp.sqrt(bn["var"] + eps)
    shift = bn["beta"] - bn["mean"] * scale
    return scale, shift


def _conv1x1_to_gemm(w_oihw, scale):
    w = jnp.transpose(w_oihw[:, :, 0, 0], (1, 0))          # (Cin, Cout)
    return (w * scale[None, :]).astype(jnp.bfloat16)


def _conv3x3_to_taps(w_oihw, scale):
    cout, cin, kh, kw = w_oihw.shape
    w = jnp.transpose(w_oihw, (2, 3, 1, 0)).reshape(kh * kw, cin, cout)  # tap = 3*di+dj
    return (w * scale[None, None, :]).astype(jnp.bfloat16)


def prepare_bottleneck_params(raw):
    p = {}
    s1, t1 = _bn_fold(raw["bn1"])
    p["w1"], p["t1"] = _conv1x1_to_gemm(raw["conv1_w"], s1), t1.astype(jnp.float32)
    s2, t2 = _bn_fold(raw["bn2"])
    p["w2"], p["t2"] = _conv3x3_to_taps(raw["conv2_w"], s2), t2.astype(jnp.float32)
    s3, t3 = _bn_fold(raw["bn3"])
    p["w3"], p["t3"] = _conv1x1_to_gemm(raw["conv3_w"], s3), t3.astype(jnp.float32)
    if "down_w" in raw:
        sd, td = _bn_fold(raw["down_bn"])
        p["wd"] = _conv1x1_to_gemm(raw["down_w"], sd)
        p["t3d"] = (t3 + td).astype(jnp.float32)   # combined shift for the fused conv3+downsample kernel
    return p


# ----------------------------------------------------------------------------
# Bottleneck forward (expansion = 4)
# ----------------------------------------------------------------------------
def bottleneck_forward_nhwc(prep, x, *, stride, has_downsample):
    """One Bottleneck block, NHWC bf16 in -> NHWC bf16 out (chainable)."""
    N, H, W, Cin = x.shape
    x = x.astype(jnp.bfloat16)

    # conv1 (1x1) + bn1 + relu : one fused GEMM (no padding at these sizes).
    h1 = fused_gemm(x.reshape(N * H * W, Cin), prep["w1"], prep["t1"], relu=True)
    planes = prep["w1"].shape[1]
    h1 = h1.reshape(N, H, W, planes)

    # conv2 (3x3, stride, pad=1) + bn2 + relu : in-kernel implicit GEMM (no im2col).
    h2, Ho, Wo = conv3x3_bn(h1, prep["w2"], prep["t2"], stride=stride, relu=True)
    M = N * Ho * Wo
    a1 = h2.reshape(M, h2.shape[-1])

    cout = prep["w3"].shape[1]
    if has_downsample:
        # conv3+bn3, downsample conv+bn, residual add and final relu in ONE kernel.
        xs = x[:, ::stride, ::stride, :].reshape(M, Cin)
        out = fused_gemm(a1, prep["w3"], prep["t3d"], a2=xs, b2=prep["wd"], relu=True)
    else:
        res = x.reshape(M, Cin)
        out = fused_gemm(a1, prep["w3"], prep["t3"], residual=res, relu=True)
    return out.reshape(N, Ho, Wo, cout)


def bottleneck_forward(prep, x_nchw, *, stride, has_downsample):
    # Thin NCHW/f32 wrapper; in a full network these conversions sit at the edges,
    # not per block (the block itself is NHWC bf16 in / NHWC bf16 out).
    x = jnp.transpose(x_nchw, (0, 2, 3, 1))
    out = bottleneck_forward_nhwc(prep, x, stride=stride, has_downsample=has_downsample)
    return jnp.transpose(out, (0, 3, 1, 2)).astype(jnp.float32)


# ----------------------------------------------------------------------------
# Parameter init (PyTorch-style) and plain-JAX f32 reference
# ----------------------------------------------------------------------------
def init_bottleneck_params(key, inplanes, planes, stride, expansion=4):
    ks = list(jax.random.split(key, 8))

    def conv_w(k, cout, cin, kh, kw):
        n = kh * kw * cout
        return jax.random.normal(k, (cout, cin, kh, kw), jnp.float32) * math.sqrt(2.0 / n)

    def bn_p(k, c):
        kg, kb, km, kv = jax.random.split(k, 4)
        return dict(gamma=jax.random.uniform(kg, (c,), jnp.float32, 0.5, 1.5),
                    beta=0.1 * jax.random.normal(kb, (c,), jnp.float32),
                    mean=0.1 * jax.random.normal(km, (c,), jnp.float32),
                    var=jax.random.uniform(kv, (c,), jnp.float32, 0.5, 1.5))

    p = {
        "conv1_w": conv_w(ks[0], planes, inplanes, 1, 1), "bn1": bn_p(ks[1], planes),
        "conv2_w": conv_w(ks[2], planes, planes, 3, 3),   "bn2": bn_p(ks[3], planes),
        "conv3_w": conv_w(ks[4], planes * expansion, planes, 1, 1),
        "bn3": bn_p(ks[5], planes * expansion),
    }
    if stride != 1 or inplanes != planes * expansion:
        p["down_w"] = conv_w(ks[6], planes * expansion, inplanes, 1, 1)
        p["down_bn"] = bn_p(ks[7], planes * expansion)
    return p


def bottleneck_reference(raw, x, stride, has_downsample, eps=1e-5):
    def conv(v, w, s, p):
        return lax.conv_general_dilated(v, w, (s, s), [(p, p), (p, p)],
                                        dimension_numbers=("NCHW", "OIHW", "NCHW"))

    def bn(v, b):
        sc = b["gamma"] / jnp.sqrt(b["var"] + eps)
        sh = b["beta"] - b["mean"] * sc
        return v * sc[None, :, None, None] + sh[None, :, None, None]

    out = jax.nn.relu(bn(conv(x, raw["conv1_w"], 1, 0), raw["bn1"]))
    out = jax.nn.relu(bn(conv(out, raw["conv2_w"], stride, 1), raw["bn2"]))
    out = bn(conv(out, raw["conv3_w"], 1, 0), raw["bn3"])
    res = bn(conv(x, raw["down_w"], stride, 0), raw["down_bn"]) if has_downsample else x
    return jax.nn.relu(out + res)


# ----------------------------------------------------------------------------
if __name__ == "__main__":
    inplanes, planes, stride = 64, 32, 2          # Bottleneck(inplanes, planes, stride, downsample)
    N, H, W = 2, 16, 16

    key = jax.random.PRNGKey(0)
    kp, kx = jax.random.split(key)

    raw = init_bottleneck_params(kp, inplanes, planes, stride)
    prep = prepare_bottleneck_params(raw)          # BN folded, bf16 kernel weights
    has_down = "wd" in prep

    x = jax.random.normal(kx, (N, inplanes, H, W), jnp.float32)   # NCHW like PyTorch

    fwd = jax.jit(functools.partial(bottleneck_forward,
                                    stride=stride, has_downsample=has_down))
    out = fwd(prep, x)
    jax.block_until_ready(out)

    assert out.shape == (N, planes * 4, H // stride, W // stride), out.shape

    # Numerical sanity check vs a plain-JAX f32 reference (generous bf16 tolerance).
    ref = bottleneck_reference(raw, x, stride, has_down)
    err = float(jnp.max(jnp.abs(out - ref)) / (jnp.max(jnp.abs(ref)) + 1e-6))
    assert err < 5e-2, f"max error (relative to peak) too large: {err}"

    print("KERNEL_OK")
</pallas_src>

<mosaic_0001>
module attributes {stable_mosaic.version = 11 : i64} {
  func.func @_gemm_bn_kernel(%arg0: i32, %arg1: i32, %arg2: memref<256x64xbf16, #tpu.memory_space<vmem>>, %arg3: memref<64x32xbf16, #tpu.memory_space<vmem>>, %arg4: memref<1x32xf32, #tpu.memory_space<vmem>>, %arg5: memref<256x32xbf16, #tpu.memory_space<vmem>>) attributes {dimension_semantics = [#tpu.dimension_semantics<parallel>, #tpu.dimension_semantics<parallel>], iteration_bounds = array<i64: 2, 1>, scalar_prefetch = 0 : i64, scratch_operands = 0 : i64, tpu.core_type = #tpu.core_type<tc>, window_params = [{transform_indices = @transform_0, window_bounds = array<i64: 256, 64>}, {transform_indices = @transform_1, window_bounds = array<i64: 64, 32>}, {transform_indices = @transform_2, window_bounds = array<i64: 1, 32>}, {transform_indices = @transform_3, window_bounds = array<i64: 256, 32>}]} {
    %c0 = arith.constant 0 : index
    %c0_0 = arith.constant 0 : index
    %0 = vector.load %arg2[%c0, %c0_0] : memref<256x64xbf16, #tpu.memory_space<vmem>>, vector<256x64xbf16>
    %c0_1 = arith.constant 0 : index
    %c0_2 = arith.constant 0 : index
    %1 = vector.load %arg3[%c0_1, %c0_2] : memref<64x32xbf16, #tpu.memory_space<vmem>>, vector<64x32xbf16>
    %cst = arith.constant dense<0.000000e+00> : vector<256x32xf32>
    %2 = tpu.matmul %0, %1, %cst {dimension_numbers = #tpu.dot_dimension_numbers<[1], [0], [0], [1], [0, 0, 1, 1], [], []>} : vector<256x64xbf16>, vector<64x32xbf16>, vector<256x32xf32> -> vector<256x32xf32>
    %c0_3 = arith.constant 0 : index
    %c0_4 = arith.constant 0 : index
    %3 = vector.load %arg4[%c0_3, %c0_4] : memref<1x32xf32, #tpu.memory_space<vmem>>, vector<1x32xf32>
    %4 = vector.broadcast %3 : vector<1x32xf32> to vector<256x32xf32>
    %5 = arith.addf %2, %4 : vector<256x32xf32>
    %cst_5 = arith.constant 0.000000e+00 : f32
    %6 = vector.broadcast %cst_5 : f32 to vector<256x32xf32>
    %7 = arith.maximumf %5, %6 : vector<256x32xf32>
    %8 = arith.truncf %7 : vector<256x32xf32> to vector<256x32xbf16>
    %c0_6 = arith.constant 0 : index
    %c0_7 = arith.constant 0 : index
    %9 = vector.load %arg5[%c0_6, %c0_7] : memref<256x32xbf16, #tpu.memory_space<vmem>>, vector<256x32xbf16>
    tpu.vector_store %arg5[%c0_6, %c0_7], %8 {strides = array<i32>} : memref<256x32xbf16, #tpu.memory_space<vmem>>, vector<256x32xbf16>,
    return
  }
  func.func @transform_0(%arg0: i32, %arg1: i32) -> (i32, i32) {
    %c0_i32 = arith.constant 0 : i32
    %c0_i32_0 = arith.constant 0 : i32
    return %arg0, %c0_i32 : i32, i32
  }
  func.func @transform_1(%arg0: i32, %arg1: i32) -> (i32, i32) {
    %c0_i32 = arith.constant 0 : i32
    %c0_i32_0 = arith.constant 0 : i32
    return %c0_i32, %arg1 : i32, i32
  }
  func.func @transform_2(%arg0: i32, %arg1: i32) -> (i32, i32) {
    %c0_i32 = arith.constant 0 : i32
    %c0_i32_0 = arith.constant 0 : i32
    return %c0_i32, %arg1 : i32, i32
  }
  func.func @transform_3(%arg0: i32, %arg1: i32) -> (i32, i32) {
    %c0_i32 = arith.constant 0 : i32
    return %arg0, %arg1 : i32, i32
  }
}

module attributes {stable_mosaic.version = 11 : i64} {
  func.func @_conv3x3_bn_kernel(%arg0: i32, %arg1: i32, %arg2: memref<4x100x32xbf16, #tpu.memory_space<vmem>>, %arg3: memref<9x32x32xbf16, #tpu.memory_space<vmem>>, %arg4: memref<1x32xf32, #tpu.memory_space<vmem>>, %arg5: memref<1x80x32xbf16, #tpu.memory_space<vmem>>) attributes {dimension_semantics = [#tpu.dimension_semantics<parallel>, #tpu.dimension_semantics<parallel>], iteration_bounds = array<i64: 2, 1>, scalar_prefetch = 0 : i64, scratch_operands = 0 : i64, tpu.core_type = #tpu.core_type<tc>, window_params = [{transform_indices = @transform_0, window_bounds = array<i64: 4, 100, 32>}, {transform_indices = @transform_1, window_bounds = array<i64: 9, 32, 32>}, {transform_indices = @transform_2, window_bounds = array<i64: 1, 32>}, {transform_indices = @transform_3, window_bounds = array<i64: 1, 80, 32>}]} {
    %cst = arith.constant 0.000000e+00 : f32
    %0 = vector.broadcast %cst : f32 to vector<80x32xf32>
    %c0 = arith.constant 0 : index
    %c0_0 = arith.constant 0 : index
    %c0_1 = arith.constant 0 : index
    %1 = vector.load %arg2[%c0, %c0_0, %c0_1] : memref<4x100x32xbf16, #tpu.memory_space<vmem>>, vector<1x80x32xbf16>
    %2 = vector.shape_cast %1 : vector<1x80x32xbf16> to vector<80x32xbf16>
    %c0_2 = arith.constant 0 : index
    %c0_3 = arith.constant 0 : index
    %c0_4 = arith.constant 0 : index
    %3 = vector.load %arg3[%c0_2, %c0_3, %c0_4] : memref<9x32x32xbf16, #tpu.memory_space<vmem>>, vector<1x32x32xbf16>
    %4 = vector.shape_cast %3 : vector<1x32x32xbf16> to vector<32x32xbf16>
    %cst_5 = arith.constant dense<0.000000e+00> : vector<80x32xf32>
    %5 = tpu.matmul %2, %4, %cst_5 {dimension_numbers = #tpu.dot_dimension_numbers<[1], [0], [0], [1], [0, 0, 1, 1], [], []>} : vector<80x32xbf16>, vector<32x32xbf16>, vector<80x32xf32> -> vector<80x32xf32>
    %6 = arith.addf %0, %5 : vector<80x32xf32>
    %c1 = arith.constant 1 : index
    %c0_6 = arith.constant 0 : index
    %c0_7 = arith.constant 0 : index
    %7 = vector.load %arg2[%c1, %c0_6, %c0_7] : memref<4x100x32xbf16, #tpu.memory_space<vmem>>, vector<1x80x32xbf16>
    %8 = vector.shape_cast %7 : vector<1x80x32xbf16> to vector<80x32xbf16>
    %c1_8 = arith.constant 1 : index
    %c0_9 = arith.constant 0 : index
    %c0_10 = arith.constant 0 : index
    %9 = vector.load %arg3[%c1_8, %c0_9, %c0_10] : memref<9x32x32xbf16, #tpu.memory_space<vmem>>, vector<1x32x32xbf16>
    %10 = vector.shape_cast %9 : vector<1x32x32xbf16> to vector<32x32xbf16>
    %cst_11 = arith.constant dense<0.000000e+00> : vector<80x32xf32>
    %11 = tpu.matmul %8, %10, %cst_11 {dimension_numbers = #tpu.dot_dimension_numbers<[1], [0], [0], [1], [0, 0, 1, 1], [], []>} : vector<80x32xbf16>, vector<32x32xbf16>, vector<80x32xf32> -> vector<80x32xf32>
    %12 = arith.addf %6, %11 : vector<80x32xf32>
    %c0_12 = arith.constant 0 : index
    %c1_13 = arith.constant 1 : index
    %c0_14 = arith.constant 0 : index
    %13 = vector.load %arg2[%c0_12, %c1_13, %c0_14] : memref<4x100x32xbf16, #tpu.memory_space<vmem>>, vector<1x80x32xbf16>
    %14 = vector.shape_cast %13 : vector<1x80x32xbf16> to vector<80x32xbf16>
    %c2 = arith.constant 2 : index
    %c0_15 = arith.constant 0 : index
    %c0_16 = arith.constant 0 : index
    %15 = vector.load %arg3[%c2, %c0_15, %c0_16] : memref<9x32x32xbf16, #tpu.memory_space<vmem>>, vector<1x32x32xbf16>
    %16 = vector.shape_cast %15 : vector<1x32x32xbf16> to vector<32x32xbf16>
    %cst_17 = arith.constant dense<0.000000e+00> : vector<80x32xf32>
    %17 = tpu.matmul %14, %16, %cst_17 {dimension_numbers = #tpu.dot_dimension_numbers<[1], [0], [0], [1], [0, 0, 1, 1], [], []>} : vector<80x32xbf16>, vector<32x32xbf16>, vector<80x32xf32> -> vector<80x32xf32>
    %18 = arith.addf %12, %17 : vector<80x32xf32>
    %c2_18 = arith.constant 2 : index
    %c0_19 = arith.constant 0 : index
    %c0_20 = arith.constant 0 : index
    %19 = vector.load %arg2[%c2_18, %c0_19, %c0_20] : memref<4x100x32xbf16, #tpu.memory_space<vmem>>, vector<1x80x32xbf16>
    %20 = vector.shape_cast %19 : vector<1x80x32xbf16> to vector<80x32xbf16>
    %c3 = arith.constant 3 : index
    %c0_21 = arith.constant 0 : index
    %c0_22 = arith.constant 0 : index
    %21 = vector.load %arg3[%c3, %c0_21, %c0_22] : memref<9x32x32xbf16, #tpu.memory_space<vmem>>, vector<1x32x32xbf16>
    %22 = vector.shape_cast %21 : vector<1x32x32xbf16> to vector<32x32xbf16>
    %cst_23 = arith.constant dense<0.000000e+00> : vector<80x32xf32>
    %23 = tpu.matmul %20, %22, %cst_23 {dimension_numbers = #tpu.dot_dimension_numbers<[1], [0], [0], [1], [0, 0, 1, 1], [], []>} : vector<80x32xbf16>, vector<32x32xbf16>, vector<80x32xf32> -> vector<80x32xf32>
    %24 = arith.addf %18, %23 : vector<80x32xf32>
    %c3_24 = arith.constant 3 : index
    %c0_25 = arith.constant 0 : index
    %c0_26 = arith.constant 0 : index
    %25 = vector.load %arg2[%c3_24, %c0_25, %c0_26] : memref<4x100x32xbf16, #tpu.memory_space<vmem>>, vector<1x80x32xbf16>
    %26 = vector.shape_cast %25 : vector<1x80x32xbf16> to vector<80x32xbf16>
    %c4 = arith.constant 4 : index
    %c0_27 = arith.constant 0 : index
    %c0_28 = arith.constant 0 : index
    %27 = vector.load %arg3[%c4, %c0_27, %c0_28] : memref<9x32x32xbf16, #tpu.memory_space<vmem>>, vector<1x32x32xbf16>
    %28 = vector.shape_cast %27 : vector<1x32x32xbf16> to vector<32x32xbf16>
    %cst_29 = arith.constant dense<0.000000e+00> : vector<80x32xf32>
    %29 = tpu.matmul %26, %28, %cst_29 {dimension_numbers = #tpu.dot_dimension_numbers<[1], [0], [0], [1], [0, 0, 1, 1], [], []>} : vector<80x32xbf16>, vector<32x32xbf16>, vector<80x32xf32> -> vector<80x32xf32>
    %30 = arith.addf %24, %29 : vector<80x32xf32>
    %c2_30 = arith.constant 2 : index
    %c1_31 = arith.constant 1 : index
    %c0_32 = arith.constant 0 : index
    %31 = vector.load %arg2[%c2_30, %c1_31, %c0_32] : memref<4x100x32xbf16, #tpu.memory_space<vmem>>, vector<1x80x32xbf16>
    %32 = vector.shape_cast %31 : vector<1x80x32xbf16> to vector<80x32xbf16>
    %c5 = arith.constant 5 : index
    %c0_33 = arith.constant 0 : index
    %c0_34 = arith.constant 0 : index
    %33 = vector.load %arg3[%c5, %c0_33, %c0_34] : memref<9x32x32xbf16, #tpu.memory_space<vmem>>, vector<1x32x32xbf16>
    %34 = vector.shape_cast %33 : vector<1x32x32xbf16> to vector<32x32xbf16>
    %cst_35 = arith.constant dense<0.000000e+00> : vector<80x32xf32>
    %35 = tpu.matmul %32, %34, %cst_35 {dimension_numbers = #tpu.dot_dimension_numbers<[1], [0], [0], [1], [0, 0, 1, 1], [], []>} : vector<80x32xbf16>, vector<32x32xbf16>, vector<80x32xf32> -> vector<80x32xf32>
    %36 = arith.addf %30, %35 : vector<80x32xf32>
    %c0_36 = arith.constant 0 : index
    %c10 = arith.constant 10 : index
    %c0_37 = arith.constant 0 : index
    %37 = vector.load %arg2[%c0_36, %c10, %c0_37] : memref<4x100x32xbf16, #tpu.memory_space<vmem>>, vector<1x80x32xbf16>
    %38 = vector.shape_cast %37 : vector<1x80x32xbf16> to vector<80x32xbf16>
    %c6 = arith.constant 6 : index
    %c0_38 = arith.constant 0 : index
    %c0_39 = arith.constant 0 : index
    %39 = vector.load %arg3[%c6, %c0_38, %c0_39] : memref<9x32x32xbf16, #tpu.memory_space<vmem>>, vector<1x32x32xbf16>
    %40 = vector.shape_cast %39 : vector<1x32x32xbf16> to vector<32x32xbf16>
    %cst_40 = arith.constant dense<0.000000e+00> : vector<80x32xf32>
    %41 = tpu.matmul %38, %40, %cst_40 {dimension_numbers = #tpu.dot_dimension_numbers<[1], [0], [0], [1], [0, 0, 1, 1], [], []>} : vector<80x32xbf16>, vector<32x32xbf16>, vector<80x32xf32> -> vector<80x32xf32>
    %42 = arith.addf %36, %41 : vector<80x32xf32>
    %c1_41 = arith.constant 1 : index
    %c10_42 = arith.constant 10 : index
    %c0_43 = arith.constant 0 : index
    %43 = vector.load %arg2[%c1_41, %c10_42, %c0_43] : memref<4x100x32xbf16, #tpu.memory_space<vmem>>, vector<1x80x32xbf16>
    %44 = vector.shape_cast %43 : vector<1x80x32xbf16> to vector<80x32xbf16>
    %c7 = arith.constant 7 : index
    %c0_44 = arith.constant 0 : index
    %c0_45 = arith.constant 0 : index
    %45 = vector.load %arg3[%c7, %c0_44, %c0_45] : memref<9x32x32xbf16, #tpu.memory_space<vmem>>, vector<1x32x32xbf16>
    %46 = vector.shape_cast %45 : vector<1x32x32xbf16> to vector<32x32xbf16>
    %cst_46 = arith.constant dense<0.000000e+00> : vector<80x32xf32>
    %47 = tpu.matmul %44, %46, %cst_46 {dimension_numbers = #tpu.dot_dimension_numbers<[1], [0], [0], [1], [0, 0, 1, 1], [], []>} : vector<80x32xbf16>, vector<32x32xbf16>, vector<80x32xf32> -> vector<80x32xf32>
    %48 = arith.addf %42, %47 : vector<80x32xf32>
    %c0_47 = arith.constant 0 : index
    %c11 = arith.constant 11 : index
    %c0_48 = arith.constant 0 : index
    %49 = vector.load %arg2[%c0_47, %c11, %c0_48] : memref<4x100x32xbf16, #tpu.memory_space<vmem>>, vector<1x80x32xbf16>
    %50 = vector.shape_cast %49 : vector<1x80x32xbf16> to vector<80x32xbf16>
    %c8 = arith.constant 8 : index
    %c0_49 = arith.constant 0 : index
    %c0_50 = arith.constant 0 : index
    %51 = vector.load %arg3[%c8, %c0_49, %c0_50] : memref<9x32x32xbf16, #tpu.memory_space<vmem>>, vector<1x32x32xbf16>
    %52 = vector.shape_cast %51 : vector<1x32x32xbf16> to vector<32x32xbf16>
    %cst_51 = arith.constant dense<0.000000e+00> : vector<80x32xf32>
    %53 = tpu.matmul %50, %52, %cst_51 {dimension_numbers = #tpu.dot_dimension_numbers<[1], [0], [0], [1], [0, 0, 1, 1], [], []>} : vector<80x32xbf16>, vector<32x32xbf16>, vector<80x32xf32> -> vector<80x32xf32>
    %54 = arith.addf %48, %53 : vector<80x32xf32>
    %c0_52 = arith.constant 0 : index
    %c0_53 = arith.constant 0 : index
    %55 = vector.load %arg4[%c0_52, %c0_53] : memref<1x32xf32, #tpu.memory_space<vmem>>, vector<1x32xf32>
    %56 = vector.broadcast %55 : vector<1x32xf32> to vector<80x32xf32>
    %57 = arith.addf %54, %56 : vector<80x32xf32>
    %cst_54 = arith.constant 0.000000e+00 : f32
    %58 = vector.broadcast %cst_54 : f32 to vector<80x32xf32>
    %59 = arith.maximumf %57, %58 : vector<80x32xf32>
    %60 = arith.truncf %59 : vector<80x32xf32> to vector<80x32xbf16>
    %c0_55 = arith.constant 0 : index
    %c0_56 = arith.constant 0 : index
    %c0_57 = arith.constant 0 : index
    %61 = vector.load %arg5[%c0_55, %c0_56, %c0_57] : memref<1x80x32xbf16, #tpu.memory_space<vmem>>, vector<1x80x32xbf16>
    %62 = vector.shape_cast %61 : vector<1x80x32xbf16> to vector<80x32xbf16>
    %63 = vector.shape_cast %60 : vector<80x32xbf16> to vector<1x80x32xbf16>
    tpu.vector_store %arg5[%c0_55, %c0_56, %c0_57], %63 {strides = array<i32>} : memref<1x80x32xbf16, #tpu.memory_space<vmem>>, vector<1x80x32xbf16>,
    return
  }
  func.func @transform_0(%arg0: i32, %arg1: i32) -> (i32, i32, i32) {
    %c0_i32 = arith.constant 0 : i32
    %c0_i32_0 = arith.constant 0 : i32
    %c0_i32_1 = arith.constant 0 : i32
    return %arg0, %c0_i32, %c0_i32_0 : i32, i32, i32
  }
  func.func @transform_1(%arg0: i32, %arg1: i32) -> (i32, i32, i32) {
    %c0_i32 = arith.constant 0 : i32
    %c0_i32_0 = arith.constant 0 : i32
    %c0_i32_1 = arith.constant 0 : i32
    return %c0_i32, %c0_i32_0, %arg1 : i32, i32, i32
  }
  func.func @transform_2(%arg0: i32, %arg1: i32) -> (i32, i32) {
    %c0_i32 = arith.constant 0 : i32
    %c0_i32_0 = arith.constant 0 : i32
    return %c0_i32, %arg1 : i32, i32
  }
  func.func @transform_3(%arg0: i32, %arg1: i32) -> (i32, i32, i32) {
    %c0_i32 = arith.constant 0 : i32
    %c0_i32_0 = arith.constant 0 : i32
    return %arg0, %c0_i32, %arg1 : i32, i32, i32
  }
}

module attributes {stable_mosaic.version = 11 : i64} {
  func.func @_gemm2_bn_kernel(%arg0: i32, %arg1: i32, %arg2: memref<64x32xbf16, #tpu.memory_space<vmem>>, %arg3: memref<32x128xbf16, #tpu.memory_space<vmem>>, %arg4: memref<1x128xf32, #tpu.memory_space<vmem>>, %arg5: memref<64x64xbf16, #tpu.memory_space<vmem>>, %arg6: memref<64x128xbf16, #tpu.memory_space<vmem>>, %arg7: memref<64x128xbf16, #tpu.memory_space<vmem>>) attributes {dimension_semantics = [#tpu.dimension_semantics<parallel>, #tpu.dimension_semantics<parallel>], iteration_bounds = array<i64: 2, 1>, scalar_prefetch = 0 : i64, scratch_operands = 0 : i64, tpu.core_type = #tpu.core_type<tc>, window_params = [{transform_indices = @transform_0, window_bounds = array<i64: 64, 32>}, {transform_indices = @transform_1, window_bounds = array<i64: 32, 128>}, {transform_indices = @transform_2, window_bounds = array<i64: 1, 128>}, {transform_indices = @transform_3, window_bounds = array<i64: 64, 64>}, {transform_indices = @transform_4, window_bounds = array<i64: 64, 128>}, {transform_indices = @transform_5, window_bounds = array<i64: 64, 128>}]} {
    %c0 = arith.constant 0 : index
    %c0_0 = arith.constant 0 : index
    %0 = vector.load %arg2[%c0, %c0_0] : memref<64x32xbf16, #tpu.memory_space<vmem>>, vector<64x32xbf16>
    %c0_1 = arith.constant 0 : index
    %c0_2 = arith.constant 0 : index
    %1 = vector.load %arg3[%c0_1, %c0_2] : memref<32x128xbf16, #tpu.memory_space<vmem>>, vector<32x128xbf16>
    %cst = arith.constant dense<0.000000e+00> : vector<64x128xf32>
    %2 = tpu.matmul %0, %1, %cst {dimension_numbers = #tpu.dot_dimension_numbers<[1], [0], [0], [1], [0, 0, 1, 1], [], []>} : vector<64x32xbf16>, vector<32x128xbf16>, vector<64x128xf32> -> vector<64x128xf32>
    %c0_3 = arith.constant 0 : index
    %c0_4 = arith.constant 0 : index
    %3 = vector.load %arg5[%c0_3, %c0_4] : memref<64x64xbf16, #tpu.memory_space<vmem>>, vector<64x64xbf16>
    %c0_5 = arith.constant 0 : index
    %c0_6 = arith.constant 0 : index
    %4 = vector.load %arg6[%c0_5, %c0_6] : memref<64x128xbf16, #tpu.memory_space<vmem>>, vector<64x128xbf16>
    %cst_7 = arith.constant dense<0.000000e+00> : vector<64x128xf32>
    %5 = tpu.matmul %3, %4, %cst_7 {dimension_numbers = #tpu.dot_dimension_numbers<[1], [0], [0], [1], [0, 0, 1, 1], [], []>} : vector<64x64xbf16>, vector<64x128xbf16>, vector<64x128xf32> -> vector<64x128xf32>
    %6 = arith.addf %2, %5 : vector<64x128xf32>
    %c0_8 = arith.constant 0 : index
    %c0_9 = arith.constant 0 : index
    %7 = vector.load %arg4[%c0_8, %c0_9] : memref<1x128xf32, #tpu.memory_space<vmem>>, vector<1x128xf32>
    %8 = vector.broadcast %7 : vector<1x128xf32> to vector<64x128xf32>
    %9 = arith.addf %6, %8 : vector<64x128xf32>
    %cst_10 = arith.constant 0.000000e+00 : f32
    %10 = vector.broadcast %cst_10 : f32 to vector<64x128xf32>
    %11 = arith.maximumf %9, %10 : vector<64x128xf32>
    %12 = arith.truncf %11 : vector<64x128xf32> to vector<64x128xbf16>
    %c0_11 = arith.constant 0 : index
    %c0_12 = arith.constant 0 : index
    %13 = vector.load %arg7[%c0_11, %c0_12] : memref<64x128xbf16, #tpu.memory_space<vmem>>, vector<64x128xbf16>
    tpu.vector_store %arg7[%c0_11, %c0_12], %12 {strides = array<i32>} : memref<64x128xbf16, #tpu.memory_space<vmem>>, vector<64x128xbf16>,
    return
  }
  func.func @transform_0(%arg0: i32, %arg1: i32) -> (i32, i32) {
    %c0_i32 = arith.constant 0 : i32
    %c0_i32_0 = arith.constant 0 : i32
    return %arg0, %c0_i32 : i32, i32
  }
  func.func @transform_1(%arg0: i32, %arg1: i32) -> (i32, i32) {
    %c0_i32 = arith.constant 0 : i32
    %c0_i32_0 = arith.constant 0 : i32
    return %c0_i32, %arg1 : i32, i32
  }
  func.func @transform_2(%arg0: i32, %arg1: i32) -> (i32, i32) {
    %c0_i32 = arith.constant 0 : i32
    %c0_i32_0 = arith.constant 0 : i32
    return %c0_i32, %arg1 : i32, i32
  }
  func.func @transform_3(%arg0: i32, %arg1: i32) -> (i32, i32) {
    %c0_i32 = arith.constant 0 : i32
    %c0_i32_0 = arith.constant 0 : i32
    return %arg0, %c0_i32 : i32, i32
  }
  func.func @transform_4(%arg0: i32, %arg1: i32) -> (i32, i32) {
    %c0_i32 = arith.constant 0 : i32
    %c0_i32_0 = arith.constant 0 : i32
    return %c0_i32, %arg1 : i32, i32
  }
  func.func @transform_5(%arg0: i32, %arg1: i32) -> (i32, i32) {
    %c0_i32 = arith.constant 0 : i32
    return %arg0, %arg1 : i32, i32
  }
}

</mosaic_0001>

<llo_original>
// kernel: bottleneck_forward.3
$region0: #{bottleneck_forward.3}
  #allocation0 [shape = 'u32[]', space=smem, size = 0x4, offset = 0x4, fixed_abs, tag = 'smem constant byte address 0x4 - core index']
  #allocation1 [shape = 'u32[144,128]{1,0:T(1,128)}', space=vmem, size = 0x12000, scoped, tag = 'internal scratch']
  %s0 = inlined_call_operand.vmem [shape: bf16[512,64], index: 0, kind: input, shape index: {}]
  %s1 = inlined_call_operand.vmem [shape: bf16[64,32], index: 1, kind: input, shape index: {}]
  %s2 = inlined_call_operand.vmem [shape: f32[1,32], index: 2, kind: input, shape index: {}]
  %s3 = inlined_call_operand.vmem [shape: bf16[512,32], index: 3, kind: output, shape index: {}]
  %s4 = sld [smem:[#allocation0]]
  $region45: #{bottleneck_forward.3} parent=0
    _
  %s6 = ssub.s32 1, %s4
  %s7 = scalar_select 0, %s6, %s4
  loop: start=0, step=1, limit=4
  $region2: #{bottleneck_forward.3} parent=0 // loop_pre_header
    _
  $region3: #{bottleneck_forward.3} parent=0 // loop_header
    %s9 = sphi 0, %s13
    %p10 = scmp.ge.s32.totalorder %s9, 4
    %s16 = sphi 0, %s28
    %s17 = sphi 0, %s24
    %s18 = sphi 0, %s16
    %s19 = sphi 0, %s17
    %s20 = sphi 0, %s18
    %s21 = sphi 0, %s19
    %s31 = sphi 0, %s33
    %s34 = sphi 0, %s31
    %s35 = sphi 0, %s34
    %s51 = sphi 0, %s35
    %s57 = sphi 0, %s59
    %s60 = sphi 0, %s57
    %s61 = sphi 0, %s60
    %s77 = sphi 0, %s61
    %s83 = sphi 0, %s85
    %s86 = sphi 0, %s83
    %s87 = sphi 0, %s86
    %s103 = sphi 0, %s87
    %s111 = sphi 0, %s113
    %s114 = sphi 0, %s111
    %s115 = sphi 0, %s114
    %s131 = sphi 0, %s115
  $region4: #{bottleneck_forward.3} parent=0 // loop_header_branch
    %12 = sbr.rel (%p10) target = $region8
  $region5: #{bottleneck_forward.3} parent=0 // loop_body
    %s14 = ssub.s32 %s9, 1
    %s15 = ssub.s32 %s9, 2
    %s22 = sadd.s32 1, %s17
    %p23 = scmp.ge.s32.totalorder %s22, 1
    %s24 = scalar_select %p23, 0, %s22
    %s25 = sadd.s32 1, %s16
    %s26 = scalar_select %p23, %s25, %s16
    %p27 = scmp.ge.s32.totalorder %s26, 2
    %s28 = scalar_select %p27, 0, %s26
    %s29 = ssub.s32 %s16, %s28
    %p30 = scmp.eq.s32.totalorder %s29, 0
    %s32 = sadd.s32 %s31, 1
    %s33 = scalar_select %p30, %s31, %s32
    %p36 = pneg %p30
    %p37 = scmp.eq.s32.totalorder %s9, 1
    %p38 = por %p36, %p37
    %p39 = scmp.ne.s32.totalorder %s31, %s34
    %p40 = scmp.eq.s32.totalorder %s9, 0
    %p41 = por %p39, %p40
    %p42 = scmp.ne.s32.totalorder %s31, %s34
    %p43 = scmp.eq.s32.totalorder %s14, 1
    %p44 = por %p42, %p43
    %p45 = scmp.ne.s32.totalorder %s34, %s35
    %p46 = scmp.eq.s32.totalorder %s14, 0
    %p47 = por %p45, %p46
    %p48 = scmp.ne.s32.totalorder %s34, %s35
    %p49 = scmp.eq.s32.totalorder %s15, 1
    %p50 = por %p48, %p49
    %p52 = scmp.ne.s32.totalorder %s35, %s51
    %p53 = scmp.eq.s32.totalorder %s15, 0
    %p54 = por %p52, %p53
    %s55 = ssub.s32 %s17, %s24
    %p56 = scmp.eq.s32.totalorder %s55, 0
    %s58 = sadd.s32 %s57, 1
    %s59 = scalar_select %p56, %s57, %s58
    %p62 = pneg %p56
    %p63 = scmp.eq.s32.totalorder %s9, 1
    %p64 = por %p62, %p63
    %p65 = scmp.ne.s32.totalorder %s57, %s60
    %p66 = scmp.eq.s32.totalorder %s9, 0
    %p67 = por %p65, %p66
    %p68 = scmp.ne.s32.totalorder %s57, %s60
    %p69 = scmp.eq.s32.totalorder %s14, 1
    %p70 = por %p68, %p69
    %p71 = scmp.ne.s32.totalorder %s60, %s61
    %p72 = scmp.eq.s32.totalorder %s14, 0
    %p73 = por %p71, %p72
    %p74 = scmp.ne.s32.totalorder %s60, %s61
    %p75 = scmp.eq.s32.totalorder %s15, 1
    %p76 = por %p74, %p75
    %p78 = scmp.ne.s32.totalorder %s61, %s77
    %p79 = scmp.eq.s32.totalorder %s15, 0
    %p80 = por %p78, %p79
    %s81 = ssub.s32 %s17, %s24
    %p82 = scmp.eq.s32.totalorder %s81, 0
    %s84 = sadd.s32 %s83, 1
    %s85 = scalar_select %p82, %s83, %s84
    %p88 = pneg %p82
    %p89 = scmp.eq.s32.totalorder %s9, 1
    %p90 = por %p88, %p89
    %p91 = scmp.ne.s32.totalorder %s83, %s86
    %p92 = scmp.eq.s32.totalorder %s9, 0
    %p93 = por %p91, %p92
    %p94 = scmp.ne.s32.totalorder %s83, %s86
    %p95 = scmp.eq.s32.totalorder %s14, 1
    %p96 = por %p94, %p95
    %p97 = scmp.ne.s32.totalorder %s86, %s87
    %p98 = scmp.eq.s32.totalorder %s14, 0
    %p99 = por %p97, %p98
    %p100 = scmp.ne.s32.totalorder %s86, %s87
    %p101 = scmp.eq.s32.totalorder %s15, 1
    %p102 = por %p100, %p101
    %p104 = scmp.ne.s32.totalorder %s87, %s103
    %p105 = scmp.eq.s32.totalorder %s15, 0
    %p106 = por %p104, %p105
    %s107 = ssub.s32 %s16, %s28
    %s108 = ssub.s32 %s17, %s24
    %s109 = sor.u32 %s107, %s108
    %p110 = scmp.eq.s32.totalorder %s109, 0
    %s112 = sadd.s32 %s111, 1
    %s113 = scalar_select %p110, %s111, %s112
    %p116 = pneg %p110
    %p117 = scmp.eq.s32.totalorder %s9, 1
    %p118 = por %p116, %p117
    %p119 = scmp.ne.s32.totalorder %s111, %s114
    %p120 = scmp.eq.s32.totalorder %s9, 0
    %p121 = por %p119, %p120
    %p122 = scmp.ne.s32.totalorder %s111, %s114
    %p123 = scmp.eq.s32.totalorder %s14, 1
    %p124 = por %p122, %p123
    %p125 = scmp.ne.s32.totalorder %s114, %s115
    %p126 = scmp.eq.s32.totalorder %s14, 0
    %p127 = por %p125, %p126
    %p128 = scmp.ne.s32.totalorder %s114, %s115
    %p129 = scmp.eq.s32.totalorder %s15, 1
    %p130 = por %p128, %p129
    %p132 = scmp.ne.s32.totalorder %s115, %s131
    %p133 = scmp.eq.s32.totalorder %s15, 0
    %p134 = por %p132, %p133
    %p135 = scmp.le.s32.totalorder 1, %s9
    %p136 = scmp.lt.s32.totalorder %s9, 3
    %p137 = pnand %p135, %p136
    %p138 = pneg %p137
    // Predicated region
    $region9: #{bottleneck_forward.3} parent=5 // pred_check
      _
    $region10: #{bottleneck_forward.3} parent=5 // pred_check_branch
      %140 = sbr.rel (%p137) target = $region12
    $region11: #{bottleneck_forward.3} parent=5 // pred_region
      %s141 = ssub.s32 %s9, 1
      // Predicated region
      $region13: #{bottleneck_forward.3} parent=11 // pred_check
        %p142 = pneg %p73
      $region14: #{bottleneck_forward.3} parent=11 // pred_check_branch
        %144 = sbr.rel (%p142) target = $region16
      $region15: #{bottleneck_forward.3} parent=11 // pred_region
        %p145 = scmp.lt.s32.totalorder %s19, 0
        %s146 = scalar_select %p145, %s19, 0
        %s147 = smul.addr %s146, 4
        %s148 = scalar_lea.vmem %s1, %s147
      $region16: #{bottleneck_forward.3} parent=11 // pred_fallthru
        _
      // Predicated region
      $region17: #{bottleneck_forward.3} parent=11 // pred_check
        %p149 = pneg %p99
      $region18: #{bottleneck_forward.3} parent=11 // pred_check_branch
        %151 = sbr.rel (%p149) target = $region20
      $region19: #{bottleneck_forward.3} parent=11 // pred_region
        %p152 = scmp.lt.s32.totalorder %s19, 0
        %s153 = scalar_select %p152, %s19, 0
        %s154 = scalar_lea.vmem %s2, %s153
      $region20: #{bottleneck_forward.3} parent=11 // pred_fallthru
        _
    $region12: #{bottleneck_forward.3} parent=5 // pred_fallthru
      _
    %p155 = scmp.lt.s32.totalorder %s9, 2
    // Predicated region
    $region21: #{bottleneck_forward.3} parent=5 // pred_check
      %p156 = pneg %p155
    $region22: #{bottleneck_forward.3} parent=5 // pred_check_branch
      %158 = sbr.rel (%p156) target = $region24
    $region23: #{bottleneck_forward.3} parent=5 // pred_region
      // Predicated region
      $region25: #{bottleneck_forward.3} parent=23 // pred_check
        %p159 = pneg %p41
      $region26: #{bottleneck_forward.3} parent=23 // pred_check_branch
        %161 = sbr.rel (%p159) target = $region28
      $region27: #{bottleneck_forward.3} parent=23 // pred_region
        %s162 = smul.u32 32, %s16
        %p163 = scmp.lt.s32.totalorder %s162, 63
        %s164 = scalar_select %p163, %s162, 63
        %s165 = smul.addr %s164, 4
        %s166 = scalar_lea.vmem %s0, %s165
        %s167 = smul.u32 32, %s16
      $region28: #{bottleneck_forward.3} parent=23 // pred_fallthru
        _
    $region24: #{bottleneck_forward.3} parent=5 // pred_fallthru
      _
    %p168 = scmp.le.s32.totalorder 1, %s9
    %p169 = scmp.lt.s32.totalorder %s9, 3
    %p170 = pnand %p168, %p169
    %p171 = pneg %p170
    // Predicated region
    $region29: #{bottleneck_forward.3} parent=5 // pred_check
      _
    $region30: #{bottleneck_forward.3} parent=5 // pred_check_branch
      %173 = sbr.rel (%p170) target = $region32
    $region31: #{bottleneck_forward.3} parent=5 // pred_region
      %s174 = ssub.s32 %s9, 1
      %s175 = smul.u32 32, %s18
      %p176 = scmp.lt.s32.totalorder %s175, 63
      %s177 = scalar_select %p176, %s175, 63
      %s178 = smul.addr %s177, 4
      %s179 = scalar_lea.vmem %s0, %s178
      %p180 = pneg %p47
      %p181 = pneg %p44
      %p182 = scmp.lt.s32.totalorder %s19, 0
      %s183 = scalar_select %p182, %s19, 0
      %s184 = smul.addr %s183, 4
      %s185 = scalar_lea.vmem %s1, %s184
      %p186 = pneg %p73
      %p187 = pneg %p70
      %p188 = scmp.lt.s32.totalorder %s19, 0
      %s189 = scalar_select %p188, %s19, 0
      %s190 = scalar_lea.vmem %s2, %s189
      %p191 = pneg %p99
      %p192 = pneg %p96
      %p193 = pneg %p127
      %p194 = pneg %p124
      %s195 = smul.u32 32, %s18
      %p196 = scmp.lt.s32.totalorder %s195, 63
      %s197 = scalar_select %p196, %s195, 63
      %p198 = scmp.lt.s32.totalorder %s19, 0
      %s199 = scalar_select %p198, %s19, 0
      %s200 = sadd.s32 %s199, %s197
      %s201 = smul.addr %s200, 4
      %s202 = scalar_lea.vmem %s3, %s201
      %s203 = smul.u32 32, %s18
      %p204 = scmp.lt.s32.totalorder %s203, 63
      %s205 = scalar_select %p204, %s203, 63
      %s206 = smul.addr %s205, 4
      %s207 = scalar_lea.vmem %s0, %s206
      %s208 = smul.u32 32, %s18
      %p209 = scmp.lt.s32.totalorder %s19, 0
      %s210 = scalar_select %p209, %s19, 0
      %s211 = smul.addr %s210, 4
      %s212 = scalar_lea.vmem %s1, %s211
      %p213 = scmp.lt.s32.totalorder %s19, 0
      %s214 = scalar_select %p213, %s19, 0
      %s215 = scalar_lea.vmem %s2, %s214
      %s216 = smul.u32 32, %s18
      %p217 = scmp.lt.s32.totalorder %s216, 63
      %s218 = scalar_select %p217, %s216, 63
      %p219 = scmp.lt.s32.totalorder %s19, 0
      %s220 = scalar_select %p219, %s19, 0
      %s221 = sadd.s32 %s220, %s218
      %s222 = smul.addr %s221, 4
      %s223 = scalar_lea.vmem %s3, %s222
      %s224 = smul.u32 32, %s18
      %v226 = vld [vmem:[%s207] sm:$0xf]
      %v227 = vld [vmem:[%s207 + $0x4] sm:$0xf]
      %v228 = vld [vmem:[%s207 + $0x8] sm:$0xf]
      %v229 = vld [vmem:[%s207 + $0xc] sm:$0xf]
      %v230 = vld [vmem:[%s207 + $0x10] sm:$0xf]
      %v231 = vld [vmem:[%s207 + $0x14] sm:$0xf]
      %v232 = vld [vmem:[%s207 + $0x18] sm:$0xf]
      %v233 = vld [vmem:[%s207 + $0x1c] sm:$0xf]
      %v234 = vld [vmem:[%s207 + $0x20] sm:$0xf]
      %v235 = vld [vmem:[%s207 + $0x24] sm:$0xf]
      %v236 = vld [vmem:[%s207 + $0x28] sm:$0xf]
      %v237 = vld [vmem:[%s207 + $0x2c] sm:$0xf]
      %v238 = vld [vmem:[%s207 + $0x30] sm:$0xf]
      %v239 = vld [vmem:[%s207 + $0x34] sm:$0xf]
      %v240 = vld [vmem:[%s207 + $0x38] sm:$0xf]
      %v241 = vld [vmem:[%s207 + $0x3c] sm:$0xf]
      %v242 = vld [vmem:[%s207 + $0x40] sm:$0xf]
      %v243 = vld [vmem:[%s207 + $0x44] sm:$0xf]
      %v244 = vld [vmem:[%s207 + $0x48] sm:$0xf]
      %v245 = vld [vmem:[%s207 + $0x4c] sm:$0xf]
      %v246 = vld [vmem:[%s207 + $0x50] sm:$0xf]
      %v247 = vld [vmem:[%s207 + $0x54] sm:$0xf]
      %v248 = vld [vmem:[%s207 + $0x58] sm:$0xf]
      %v249 = vld [vmem:[%s207 + $0x5c] sm:$0xf]
      %v250 = vld [vmem:[%s207 + $0x60] sm:$0xf]
      %v251 = vld [vmem:[%s207 + $0x64] sm:$0xf]
      %v252 = vld [vmem:[%s207 + $0x68] sm:$0xf]
      %v253 = vld [vmem:[%s207 + $0x6c] sm:$0xf]
      %v254 = vld [vmem:[%s207 + $0x70] sm:$0xf]
      %v255 = vld [vmem:[%s207 + $0x74] sm:$0xf]
      %v256 = vld [vmem:[%s207 + $0x78] sm:$0xf]
      %v257 = vld [vmem:[%s207 + $0x7c] sm:$0xf]
      %v258 = vld [vmem:[%s212] sm:$0xf]
      %v259 = vld [vmem:[%s212 + $0x4] sm:$0xf]
      %v260 = vld [vmem:[%s212 + $0x8] sm:$0xf]
      %v261 = vld [vmem:[%s212 + $0xc] sm:$0xf]
      %v262 = vld [vmem:[%s212 + $0x10] sm:$0xf]
      %v263 = vld [vmem:[%s212 + $0x14] sm:$0xf]
      %v264 = vld [vmem:[%s212 + $0x18] sm:$0xf]
      %v265 = vld [vmem:[%s212 + $0x1c] sm:$0xf]
      %v266 = vld [vmem:[%s215] sm:$0x1]
      %v268 = vlaneseq
      %v269 = vshrl.u32 %v268, 7
      %v270 = vsub.s32 0, %v269
      %v271 = vrot.slane %v266, %v270
      %v305 = vunpack.c.l.b16 %v226
      %v306 = vunpack.c.l.b16 %v227
      %v307 = vunpack.c.l.b16 %v228
      %v308 = vunpack.c.l.b16 %v229
      %v309 = vunpack.c.l.b16 %v230
      %v310 = vunpack.c.l.b16 %v231
      %v311 = vunpack.c.l.b16 %v232
      %v312 = vunpack.c.l.b16 %v233
      %v313 = vunpack.c.l.b16 %v234
      %v314 = vunpack.c.l.b16 %v235
      %v315 = vunpack.c.l.b16 %v236
      %v316 = vunpack.c.l.b16 %v237
      %v317 = vunpack.c.l.b16 %v238
      %v318 = vunpack.c.l.b16 %v239
      %v319 = vunpack.c.l.b16 %v240
      %v320 = vunpack.c.l.b16 %v241
      %v321 = vunpack.c.l.b16 %v242
      %v322 = vunpack.c.l.b16 %v243
      %v323 = vunpack.c.l.b16 %v244
      %v324 = vunpack.c.l.b16 %v245
      %v325 = vunpack.c.l.b16 %v246
      %v326 = vunpack.c.l.b16 %v247
      %v327 = vunpack.c.l.b16 %v248
      %v328 = vunpack.c.l.b16 %v249
      %v329 = vunpack.c.l.b16 %v250
      %v330 = vunpack.c.l.b16 %v251
      %v331 = vunpack.c.l.b16 %v252
      %v332 = vunpack.c.l.b16 %v253
      %v333 = vunpack.c.l.b16 %v254
      %v334 = vunpack.c.l.b16 %v255
      %v335 = vunpack.c.l.b16 %v256
      %v336 = vunpack.c.l.b16 %v257
      %v337 = vpack.c.b16 %v306, %v305
      %v338 = vpack.c.b16 %v308, %v307
      %v339 = vpack.c.b16 %v310, %v309
      %v340 = vpack.c.b16 %v312, %v311
      %v341 = vpack.c.b16 %v314, %v313
      %v342 = vpack.c.b16 %v316, %v315
      %v343 = vpack.c.b16 %v318, %v317
      %v344 = vpack.c.b16 %v320, %v319
      %v345 = vpack.c.b16 %v322, %v321
      %v346 = vpack.c.b16 %v324, %v323
      %v347 = vpack.c.b16 %v326, %v325
      %v348 = vpack.c.b16 %v328, %v327
      %v349 = vpack.c.b16 %v330, %v329
      %v350 = vpack.c.b16 %v332, %v331
      %v351 = vpack.c.b16 %v334, %v333
      %v352 = vpack.c.b16 %v336, %v335
      %v361 = vunpack.c.l.b16 %v258
      %v362 = vunpack.c.l.b16 %v259
      %v363 = vunpack.c.l.b16 %v260
      %v364 = vunpack.c.l.b16 %v261
      %v365 = vunpack.c.l.b16 %v262
      %v366 = vunpack.c.l.b16 %v263
      %v367 = vunpack.c.l.b16 %v264
      %v368 = vunpack.c.l.b16 %v265
      %v369 = vpack.c.b16 %v362, %v361
      %v370 = vpack.c.b16 %v364, %v363
      %v371 = vpack.c.b16 %v366, %v365
      %v372 = vpack.c.b16 %v368, %v367
      %vm377 = vcmask 523264
      %v379 = vsel %vm377, %v337, 0
      %v382 = vsel %vm377, %v338, 0
      %v385 = vsel %vm377, %v339, 0
      %v388 = vsel %vm377, %v340, 0
      %v391 = vsel %vm377, %v341, 0
      %v394 = vsel %vm377, %v342, 0
      %v397 = vsel %vm377, %v343, 0
      %v400 = vsel %vm377, %v344, 0
      %v403 = vsel %vm377, %v345, 0
      %v406 = vsel %vm377, %v346, 0
      %v409 = vsel %vm377, %v347, 0
      %v412 = vsel %vm377, %v348, 0
      %v415 = vsel %vm377, %v349, 0
      %v418 = vsel %vm377, %v350, 0
      %v421 = vsel %vm377, %v351, 0
      %v424 = vsel %vm377, %v352, 0
      %426 = vmatprep.subr.bf16.mxu0 0
      %427 = vmatpush1.bf16.msra.mxu0 %v369
      %428 = vmatprep.subr.bf16.mxu0 0
      %429 = vmatpush1.bf16.msra.mxu0 %v370
      %430 = vmatprep.subr.bf16.mxu0 0
      %431 = vmatpush1.bf16.msra.mxu0 %v371
      %432 = vmatprep.subr.bf16.mxu0 0
      %433 = vmatpush1.bf16.msra.mxu0 %v372
      %434 = vmatprep.subr.bf16.mxu0 0
      %435 = vmatpush1.bf16.msra.mxu0 0
      %436 = vmatprep.subr.bf16.mxu0 0
      %437 = vmatpush1.bf16.msra.mxu0 0
      %438 = vmatprep.subr.bf16.mxu0 0
      %439 = vmatpush1.bf16.msra.mxu0 0
      %440 = vmatprep.subr.bf16.mxu0 0
      %441 = vmatpush1.bf16.msra.mxu0 0
      %442 = vmatprep.subr.bf16.mxu0 0
      %443 = vmatpush1.bf16.msra.mxu0 0
      %444 = vmatprep.subr.bf16.mxu0 0
      %445 = vmatpush1.bf16.msra.mxu0 0
      %446 = vmatprep.subr.bf16.mxu0 0
      %447 = vmatpush1.bf16.msra.mxu0 0
      %448 = vmatprep.subr.bf16.mxu0 0
      %449 = vmatpush1.bf16.msra.mxu0 0
      %450 = vmatprep.subr.bf16.mxu0 0
      %451 = vmatpush1.bf16.msra.mxu0 0
      %452 = vmatprep.subr.bf16.mxu0 0
      %453 = vmatpush1.bf16.msra.mxu0 0
      %454 = vmatprep.subr.bf16.mxu0 0
      %455 = vmatpush1.bf16.msra.mxu0 0
      %456 = vmatprep.subr.bf16.mxu0 0
      %457 = vmatpush1.bf16.msra.mxu0 0
      %458 = vmatprep.mubr.bf16.mxu0 0
      %459 = vmatmul.mubr.bf16.gmra.mrb[0].mxu0 %v379
      %v460 = vpop.f32.mrb[0].mxu0
      %v461 = vadd.f32 %v271, %v460
      %v462 = vpop.f32.mrb[0].mxu0
      %v463 = vpop.f32.mrb[0].mxu0
      %v464 = vadd.f32 %v271, %v463
      %v465 = vpop.f32.mrb[0].mxu0
      %466 = vmatprep.mubr.bf16.mxu0 0
      %467 = vmatmul.mubr.bf16.gmra.mrb[0].mxu0 %v382
      %v468 = vpop.f32.mrb[0].mxu0
      %v469 = vadd.f32 %v271, %v468
      %v470 = vpop.f32.mrb[0].mxu0
      %v471 = vpop.f32.mrb[0].mxu0
      %v472 = vadd.f32 %v271, %v471
      %v473 = vpop.f32.mrb[0].mxu0
      %474 = vmatprep.mubr.bf16.mxu0 0
      %475 = vmatmul.mubr.bf16.gmra.mrb[0].mxu0 %v385
      %v476 = vpop.f32.mrb[0].mxu0
      %v477 = vadd.f32 %v271, %v476
      %v478 = vpop.f32.mrb[0].mxu0
      %v479 = vpop.f32.mrb[0].mxu0
      %v480 = vadd.f32 %v271, %v479
      %v481 = vpop.f32.mrb[0].mxu0
      %482 = vmatprep.mubr.bf16.mxu0 0
      %483 = vmatmul.mubr.bf16.gmra.mrb[0].mxu0 %v388
      %v484 = vpop.f32.mrb[0].mxu0
      %v485 = vadd.f32 %v271, %v484
      %v486 = vpop.f32.mrb[0].mxu0
      %v487 = vpop.f32.mrb[0].mxu0
      %v488 = vadd.f32 %v271, %v487
      %v489 = vpop.f32.mrb[0].mxu0
      %490 = vmatprep.mubr.bf16.mxu0 0
      %491 = vmatmul.mubr.bf16.gmra.mrb[0].mxu0 %v391
      %v492 = vpop.f32.mrb[0].mxu0
      %v493 = vadd.f32 %v271, %v492
      %v494 = vpop.f32.mrb[0].mxu0
      %v495 = vpop.f32.mrb[0].mxu0
      %v496 = vadd.f32 %v271, %v495
      %v497 = vpop.f32.mrb[0].mxu0
      %498 = vmatprep.mubr.bf16.mxu0 0
      %499 = vmatmul.mubr.bf16.gmra.mrb[0].mxu0 %v394
      %v500 = vpop.f32.mrb[0].mxu0
      %v501 = vadd.f32 %v271, %v500
      %v502 = vpop.f32.mrb[0].mxu0
      %v503 = vpop.f32.mrb[0].mxu0
      %v504 = vadd.f32 %v271, %v503
      %v505 = vpop.f32.mrb[0].mxu0
      %506 = vmatprep.mubr.bf16.mxu0 0
      %507 = vmatmul.mubr.bf16.gmra.mrb[0].mxu0 %v397
      %v508 = vpop.f32.mrb[0].mxu0
      %v509 = vadd.f32 %v271, %v508
      %v510 = vpop.f32.mrb[0].mxu0
      %v511 = vpop.f32.mrb[0].mxu0
      %v512 = vadd.f32 %v271, %v511
      %v513 = vpop.f32.mrb[0].mxu0
      %514 = vmatprep.mubr.bf16.mxu0 0
      %515 = vmatmul.mubr.bf16.gmra.mrb[0].mxu0 %v400
      %v516 = vpop.f32.mrb[0].mxu0
      %v517 = vadd.f32 %v271, %v516
      %v518 = vpop.f32.mrb[0].mxu0
      %v519 = vpop.f32.mrb[0].mxu0
      %v520 = vadd.f32 %v271, %v519
      %v521 = vpop.f32.mrb[0].mxu0
      %522 = vmatprep.mubr.bf16.mxu0 0
      %523 = vmatmul.mubr.bf16.gmra.mrb[0].mxu0 %v403
      %v524 = vpop.f32.mrb[0].mxu0
      %v525 = vadd.f32 %v271, %v524
      %v526 = vpop.f32.mrb[0].mxu0
      %v527 = vpop.f32.mrb[0].mxu0
      %v528 = vadd.f32 %v271, %v527
      %v529 = vpop.f32.mrb[0].mxu0
      %530 = vmatprep.mubr.bf16.mxu0 0
      %531 = vmatmul.mubr.bf16.gmra.mrb[0].mxu0 %v406
      %v532 = vpop.f32.mrb[0].mxu0
      %v533 = vadd.f32 %v271, %v532
      %v534 = vpop.f32.mrb[0].mxu0
      %v535 = vpop.f32.mrb[0].mxu0
      %v536 = vadd.f32 %v271, %v535
      %v537 = vpop.f32.mrb[0].mxu0
      %538 = vmatprep.mubr.bf16.mxu0 0
      %539 = vmatmul.mubr.bf16.gmra.mrb[0].mxu0 %v409
      %v540 = vpop.f32.mrb[0].mxu0
      %v541 = vadd.f32 %v271, %v540
      %v542 = vpop.f32.mrb[0].mxu0
      %v543 = vpop.f32.mrb[0].mxu0
      %v544 = vadd.f32 %v271, %v543
      %v545 = vpop.f32.mrb[0].mxu0
      %546 = vmatprep.mubr.bf16.mxu0 0
      %547 = vmatmul.mubr.bf16.gmra.mrb[0].mxu0 %v412
      %v548 = vpop.f32.mrb[0].mxu0
      %v549 = vadd.f32 %v271, %v548
      %v550 = vpop.f32.mrb[0].mxu0
      %v551 = vpop.f32.mrb[0].mxu0
      %v552 = vadd.f32 %v271, %v551
      %v553 = vpop.f32.mrb[0].mxu0
      %554 = vmatprep.mubr.bf16.mxu0 0
      %555 = vmatmul.mubr.bf16.gmra.mrb[0].mxu0 %v415
      %v556 = vpop.f32.mrb[0].mxu0
      %v557 = vadd.f32 %v271, %v556
      %v558 = vpop.f32.mrb[0].mxu0
      %v559 = vpop.f32.mrb[0].mxu0
      %v560 = vadd.f32 %v271, %v559
      %v561 = vpop.f32.mrb[0].mxu0
      %562 = vmatprep.mubr.bf16.mxu0 0
      %563 = vmatmul.mubr.bf16.gmra.mrb[0].mxu0 %v418
      %v564 = vpop.f32.mrb[0].mxu0
      %v565 = vadd.f32 %v271, %v564
      %v566 = vpop.f32.mrb[0].mxu0
      %v567 = vpop.f32.mrb[0].mxu0
      %v568 = vadd.f32 %v271, %v567
      %v569 = vpop.f32.mrb[0].mxu0
      %570 = vmatprep.mubr.bf16.mxu0 0
      %571 = vmatmul.mubr.bf16.gmra.mrb[0].mxu0 %v421
      %v572 = vpop.f32.mrb[0].mxu0
      %v573 = vadd.f32 %v271, %v572
      %v574 = vpop.f32.mrb[0].mxu0
      %v575 = vpop.f32.mrb[0].mxu0
      %v576 = vadd.f32 %v271, %v575
      %v577 = vpop.f32.mrb[0].mxu0
      %578 = vmatprep.mubr.bf16.mxu0 0
      %579 = vmatmul.mubr.bf16.gmra.mrb[0].mxu0 %v424
      %v580 = vpop.f32.mrb[0].mxu0
      %v581 = vadd.f32 %v271, %v580
      %v582 = vpop.f32.mrb[0].mxu0
      %v583 = vpop.f32.mrb[0].mxu0
      %v584 = vadd.f32 %v271, %v583
      %v585 = vpop.f32.mrb[0].mxu0
      %586 = vdwg.mxu0
      %v587 = vmax.f32 %v461, 0.0
      %v588 = vmax.f32 %v464, 0.0
      %v589 = vmax.f32 %v469, 0.0
      %v590 = vmax.f32 %v472, 0.0
      %v591 = vmax.f32 %v477, 0.0
      %v592 = vmax.f32 %v480, 0.0
      %v593 = vmax.f32 %v485, 0.0
      %v594 = vmax.f32 %v488, 0.0
      %v595 = vmax.f32 %v493, 0.0
      %v596 = vmax.f32 %v496, 0.0
      %v597 = vmax.f32 %v501, 0.0
      %v598 = vmax.f32 %v504, 0.0
      %v599 = vmax.f32 %v509, 0.0
      %v600 = vmax.f32 %v512, 0.0
      %v601 = vmax.f32 %v517, 0.0
      %v602 = vmax.f32 %v520, 0.0
      %v603 = vmax.f32 %v525, 0.0
      %v604 = vmax.f32 %v528, 0.0
      %v605 = vmax.f32 %v533, 0.0
      %v606 = vmax.f32 %v536, 0.0
      %v607 = vmax.f32 %v541, 0.0
      %v608 = vmax.f32 %v544, 0.0
      %v609 = vmax.f32 %v549, 0.0
      %v610 = vmax.f32 %v552, 0.0
      %v611 = vmax.f32 %v557, 0.0
      %v612 = vmax.f32 %v560, 0.0
      %v613 = vmax.f32 %v565, 0.0
      %v614 = vmax.f32 %v568, 0.0
      %v615 = vmax.f32 %v573, 0.0
      %v616 = vmax.f32 %v576, 0.0
      %v617 = vmax.f32 %v581, 0.0
      %v618 = vmax.f32 %v584, 0.0
      %v619 = vpack.c.bf16 %v588, %v587
      %v620 = vpack.c.bf16 %v590, %v589
      %v621 = vpack.c.bf16 %v592, %v591
      %v622 = vpack.c.bf16 %v594, %v593
      %v623 = vpack.c.bf16 %v596, %v595
      %v624 = vpack.c.bf16 %v598, %v597
      %v625 = vpack.c.bf16 %v600, %v599
      %v626 = vpack.c.bf16 %v602, %v601
      %v627 = vpack.c.bf16 %v604, %v603
      %v628 = vpack.c.bf16 %v606, %v605
      %v629 = vpack.c.bf16 %v608, %v607
      %v630 = vpack.c.bf16 %v610, %v609
      %v631 = vpack.c.bf16 %v612, %v611
      %v632 = vpack.c.bf16 %v614, %v613
      %v633 = vpack.c.bf16 %v616, %v615
      %v634 = vpack.c.bf16 %v618, %v617
      %v651 = vunpack.c.l.b16 %v619
      %v652 = vunpack.c.h.b16 %v619
      %v653 = vunpack.c.l.b16 %v620
      %v654 = vunpack.c.h.b16 %v620
      %v655 = vunpack.c.l.b16 %v621
      %v656 = vunpack.c.h.b16 %v621
      %v657 = vunpack.c.l.b16 %v622
      %v658 = vunpack.c.h.b16 %v622
      %v659 = vunpack.c.l.b16 %v623
      %v660 = vunpack.c.h.b16 %v623
      %v661 = vunpack.c.l.b16 %v624
      %v662 = vunpack.c.h.b16 %v624
      %v663 = vunpack.c.l.b16 %v625
      %v664 = vunpack.c.h.b16 %v625
      %v665 = vunpack.c.l.b16 %v626
      %v666 = vunpack.c.h.b16 %v626
      %v667 = vunpack.c.l.b16 %v627
      %v668 = vunpack.c.h.b16 %v627
      %v669 = vunpack.c.l.b16 %v628
      %v670 = vunpack.c.h.b16 %v628
      %v671 = vunpack.c.l.b16 %v629
      %v672 = vunpack.c.h.b16 %v629
      %v673 = vunpack.c.l.b16 %v630
      %v674 = vunpack.c.h.b16 %v630
      %v675 = vunpack.c.l.b16 %v631
      %v676 = vunpack.c.h.b16 %v631
      %v677 = vunpack.c.l.b16 %v632
      %v678 = vunpack.c.h.b16 %v632
      %v679 = vunpack.c.l.b16 %v633
      %v680 = vunpack.c.h.b16 %v633
      %v681 = vunpack.c.l.b16 %v634
      %v682 = vunpack.c.h.b16 %v634
      %v683 = vpack.c.b16 %v651, %v651
      %v684 = vpack.c.b16 %v652, %v652
      %v685 = vpack.c.b16 %v653, %v653
      %v686 = vpack.c.b16 %v654, %v654
      %v687 = vpack.c.b16 %v655, %v655
      %v688 = vpack.c.b16 %v656, %v656
      %v689 = vpack.c.b16 %v657, %v657
      %v690 = vpack.c.b16 %v658, %v658
      %v691 = vpack.c.b16 %v659, %v659
      %v692 = vpack.c.b16 %v660, %v660
      %v693 = vpack.c.b16 %v661, %v661
      %v694 = vpack.c.b16 %v662, %v662
      %v695 = vpack.c.b16 %v663, %v663
      %v696 = vpack.c.b16 %v664, %v664
      %v697 = vpack.c.b16 %v665, %v665
      %v698 = vpack.c.b16 %v666, %v666
      %v699 = vpack.c.b16 %v667, %v667
      %v700 = vpack.c.b16 %v668, %v668
      %v701 = vpack.c.b16 %v669, %v669
      %v702 = vpack.c.b16 %v670, %v670
      %v703 = vpack.c.b16 %v671, %v671
      %v704 = vpack.c.b16 %v672, %v672
      %v705 = vpack.c.b16 %v673, %v673
      %v706 = vpack.c.b16 %v674, %v674
      %v707 = vpack.c.b16 %v675, %v675
      %v708 = vpack.c.b16 %v676, %v676
      %v709 = vpack.c.b16 %v677, %v677
      %v710 = vpack.c.b16 %v678, %v678
      %v711 = vpack.c.b16 %v679, %v679
      %v712 = vpack.c.b16 %v680, %v680
      %v713 = vpack.c.b16 %v681, %v681
      %v714 = vpack.c.b16 %v682, %v682
      %vm747 = vcmask 257024
      %748 = vst.msk [vmem:[%s223] sm:$0xf] %vm747, %v683
      %749 = vst.msk [vmem:[%s223 + $0x4] sm:$0xf] %vm747, %v684
      %750 = vst.msk [vmem:[%s223 + $0x8] sm:$0xf] %vm747, %v685
      %751 = vst.msk [vmem:[%s223 + $0xc] sm:$0xf] %vm747, %v686
      %752 = vst.msk [vmem:[%s223 + $0x10] sm:$0xf] %vm747, %v687
      %753 = vst.msk [vmem:[%s223 + $0x14] sm:$0xf] %vm747, %v688
      %754 = vst.msk [vmem:[%s223 + $0x18] sm:$0xf] %vm747, %v689
      %755 = vst.msk [vmem:[%s223 + $0x1c] sm:$0xf] %vm747, %v690
      %756 = vst.msk [vmem:[%s223 + $0x20] sm:$0xf] %vm747, %v691
      %757 = vst.msk [vmem:[%s223 + $0x24] sm:$0xf] %vm747, %v692
      %758 = vst.msk [vmem:[%s223 + $0x28] sm:$0xf] %vm747, %v693
      %759 = vst.msk [vmem:[%s223 + $0x2c] sm:$0xf] %vm747, %v694
      %760 = vst.msk [vmem:[%s223 + $0x30] sm:$0xf] %vm747, %v695
      %761 = vst.msk [vmem:[%s223 + $0x34] sm:$0xf] %vm747, %v696
      %762 = vst.msk [vmem:[%s223 + $0x38] sm:$0xf] %vm747, %v697
      %763 = vst.msk [vmem:[%s223 + $0x3c] sm:$0xf] %vm747, %v698
      %764 = vst.msk [vmem:[%s223 + $0x40] sm:$0xf] %vm747, %v699
      %765 = vst.msk [vmem:[%s223 + $0x44] sm:$0xf] %vm747, %v700
      %766 = vst.msk [vmem:[%s223 + $0x48] sm:$0xf] %vm747, %v701
      %767 = vst.msk [vmem:[%s223 + $0x4c] sm:$0xf] %vm747, %v702
      %768 = vst.msk [vmem:[%s223 + $0x50] sm:$0xf] %vm747, %v703
      %769 = vst.msk [vmem:[%s223 + $0x54] sm:$0xf] %vm747, %v704
      %770 = vst.msk [vmem:[%s223 + $0x58] sm:$0xf] %vm747, %v705
      %771 = vst.msk [vmem:[%s223 + $0x5c] sm:$0xf] %vm747, %v706
      %772 = vst.msk [vmem:[%s223 + $0x60] sm:$0xf] %vm747, %v707
      %773 = vst.msk [vmem:[%s223 + $0x64] sm:$0xf] %vm747, %v708
      %774 = vst.msk [vmem:[%s223 + $0x68] sm:$0xf] %vm747, %v709
      %775 = vst.msk [vmem:[%s223 + $0x6c] sm:$0xf] %vm747, %v710
      %776 = vst.msk [vmem:[%s223 + $0x70] sm:$0xf] %vm747, %v711
      %777 = vst.msk [vmem:[%s223 + $0x74] sm:$0xf] %vm747, %v712
      %778 = vst.msk [vmem:[%s223 + $0x78] sm:$0xf] %vm747, %v713
      %779 = vst.msk [vmem:[%s223 + $0x7c] sm:$0xf] %vm747, %v714
      %s780 = smul.u32 32, %s18
      %p781 = scmp.lt.s32.totalorder %s780, 63
      %s782 = scalar_select %p781, %s780, 63
      %p783 = scmp.lt.s32.totalorder %s19, 0
      %s784 = scalar_select %p783, %s19, 0
      %s785 = sadd.s32 %s784, %s782
      %s786 = smul.addr %s785, 4
      %s787 = scalar_lea.vmem %s3, %s786
      // Predicated region
      $region33: #{bottleneck_forward.3} parent=31 // pred_check
        %p788 = pneg %p124
      $region34: #{bottleneck_forward.3} parent=31 // pred_check_branch
        %790 = sbr.rel (%p788) target = $region36
      $region35: #{bottleneck_forward.3} parent=31 // pred_region
        %s791 = smul.u32 32, %s18
      $region36: #{bottleneck_forward.3} parent=31 // pred_fallthru
        _
    $region32: #{bottleneck_forward.3} parent=5 // pred_fallthru
      _
    %p792 = scmp.le.s32.totalorder 2, %s9
    // Predicated region
    $region37: #{bottleneck_forward.3} parent=5 // pred_check
      %p793 = pneg %p792
    $region38: #{bottleneck_forward.3} parent=5 // pred_check_branch
      %795 = sbr.rel (%p793) target = $region40
    $region39: #{bottleneck_forward.3} parent=5 // pred_region
      %s796 = ssub.s32 %s9, 2
      // Predicated region
      $region41: #{bottleneck_forward.3} parent=39 // pred_check
        %p797 = pneg %p130
      $region42: #{bottleneck_forward.3} parent=39 // pred_check_branch
        %799 = sbr.rel (%p797) target = $region44
      $region43: #{bottleneck_forward.3} parent=39 // pred_region
        %s800 = smul.u32 32, %s20
        %p801 = scmp.lt.s32.totalorder %s800, 63
        %s802 = scalar_select %p801, %s800, 63
        %p803 = scmp.lt.s32.totalorder %s21, 0
        %s804 = scalar_select %p803, %s21, 0
        %s805 = sadd.s32 %s804, %s802
        %s806 = smul.addr %s805, 4
        %s807 = scalar_lea.vmem %s3, %s806
      $region44: #{bottleneck_forward.3} parent=39 // pred_fallthru
        _
    $region40: #{bottleneck_forward.3} parent=5 // pred_fallthru
      _
  $region6: #{bottleneck_forward.3} parent=0 // loop_footer
    %s13 = sadd.s32 1, %s9
  $region7: #{bottleneck_forward.3} parent=0 // loop_footer_branch
    %8 = sbr.rel target = $region3
  $region8: #{bottleneck_forward.3} parent=0 // loop_exit
    _

// kernel: bottleneck_forward.5
$region0: #{bottleneck_forward.5}
  #allocation0 [shape = 'u32[]', space=smem, size = 0x4, offset = 0x4, fixed_abs, tag = 'smem constant byte address 0x4 - core index']
  #allocation1 [shape = 'u32[144,128]{1,0:T(1,128)}', space=vmem, size = 0x12000, scoped, tag = 'internal scratch']
  %s0 = inlined_call_operand.vmem [shape: bf16[128,32], index: 0, kind: input, shape index: {}]
  %s1 = inlined_call_operand.vmem [shape: bf16[32,128], index: 1, kind: input, shape index: {}]
  %s2 = inlined_call_operand.vmem [shape: f32[1,128], index: 2, kind: input, shape index: {}]
  %s3 = inlined_call_operand.vmem [shape: bf16[128,64], index: 3, kind: input, shape index: {}]
  %s4 = inlined_call_operand.vmem [shape: bf16[64,128], index: 4, kind: input, shape index: {}]
  %s5 = inlined_call_operand.vmem [shape: bf16[128,128], index: 5, kind: output, shape index: {}]
  %s6 = sld [smem:[#allocation0]]
  $region53: #{bottleneck_forward.5} parent=0
    _
  %s8 = ssub.s32 1, %s6
  %s9 = scalar_select 0, %s8, %s6
  loop: start=0, step=1, limit=4
  $region2: #{bottleneck_forward.5} parent=0 // loop_pre_header
    _
  $region3: #{bottleneck_forward.5} parent=0 // loop_header
    %s11 = sphi 0, %s15
    %p12 = scmp.ge.s32.totalorder %s11, 4
    %s18 = sphi 0, %s30
    %s19 = sphi 0, %s26
    %s20 = sphi 0, %s18
    %s21 = sphi 0, %s19
    %s22 = sphi 0, %s20
    %s23 = sphi 0, %s21
    %s33 = sphi 0, %s35
    %s36 = sphi 0, %s33
    %s37 = sphi 0, %s36
    %s53 = sphi 0, %s37
    %s59 = sphi 0, %s61
    %s62 = sphi 0, %s59
    %s63 = sphi 0, %s62
    %s79 = sphi 0, %s63
    %s85 = sphi 0, %s87
    %s88 = sphi 0, %s85
    %s89 = sphi 0, %s88
    %s105 = sphi 0, %s89
    %s111 = sphi 0, %s113
    %s114 = sphi 0, %s111
    %s115 = sphi 0, %s114
    %s131 = sphi 0, %s115
    %s137 = sphi 0, %s139
    %s140 = sphi 0, %s137
    %s141 = sphi 0, %s140
    %s157 = sphi 0, %s141
    %s165 = sphi 0, %s167
    %s168 = sphi 0, %s165
    %s169 = sphi 0, %s168
    %s185 = sphi 0, %s169
  $region4: #{bottleneck_forward.5} parent=0 // loop_header_branch
    %14 = sbr.rel (%p12) target = $region8
  $region5: #{bottleneck_forward.5} parent=0 // loop_body
    %s16 = ssub.s32 %s11, 1
    %s17 = ssub.s32 %s11, 2
    %s24 = sadd.s32 1, %s19
    %p25 = scmp.ge.s32.totalorder %s24, 1
    %s26 = scalar_select %p25, 0, %s24
    %s27 = sadd.s32 1, %s18
    %s28 = scalar_select %p25, %s27, %s18
    %p29 = scmp.ge.s32.totalorder %s28, 2
    %s30 = scalar_select %p29, 0, %s28
    %s31 = ssub.s32 %s18, %s30
    %p32 = scmp.eq.s32.totalorder %s31, 0
    %s34 = sadd.s32 %s33, 1
    %s35 = scalar_select %p32, %s33, %s34
    %p38 = pneg %p32
    %p39 = scmp.eq.s32.totalorder %s11, 1
    %p40 = por %p38, %p39
    %p41 = scmp.ne.s32.totalorder %s33, %s36
    %p42 = scmp.eq.s32.totalorder %s11, 0
    %p43 = por %p41, %p42
    %p44 = scmp.ne.s32.totalorder %s33, %s36
    %p45 = scmp.eq.s32.totalorder %s16, 1
    %p46 = por %p44, %p45
    %p47 = scmp.ne.s32.totalorder %s36, %s37
    %p48 = scmp.eq.s32.totalorder %s16, 0
    %p49 = por %p47, %p48
    %p50 = scmp.ne.s32.totalorder %s36, %s37
    %p51 = scmp.eq.s32.totalorder %s17, 1
    %p52 = por %p50, %p51
    %p54 = scmp.ne.s32.totalorder %s37, %s53
    %p55 = scmp.eq.s32.totalorder %s17, 0
    %p56 = por %p54, %p55
    %s57 = ssub.s32 %s19, %s26
    %p58 = scmp.eq.s32.totalorder %s57, 0
    %s60 = sadd.s32 %s59, 1
    %s61 = scalar_select %p58, %s59, %s60
    %p64 = pneg %p58
    %p65 = scmp.eq.s32.totalorder %s11, 1
    %p66 = por %p64, %p65
    %p67 = scmp.ne.s32.totalorder %s59, %s62
    %p68 = scmp.eq.s32.totalorder %s11, 0
    %p69 = por %p67, %p68
    %p70 = scmp.ne.s32.totalorder %s59, %s62
    %p71 = scmp.eq.s32.totalorder %s16, 1
    %p72 = por %p70, %p71
    %p73 = scmp.ne.s32.totalorder %s62, %s63
    %p74 = scmp.eq.s32.totalorder %s16, 0
    %p75 = por %p73, %p74
    %p76 = scmp.ne.s32.totalorder %s62, %s63
    %p77 = scmp.eq.s32.totalorder %s17, 1
    %p78 = por %p76, %p77
    %p80 = scmp.ne.s32.totalorder %s63, %s79
    %p81 = scmp.eq.s32.totalorder %s17, 0
    %p82 = por %p80, %p81
    %s83 = ssub.s32 %s19, %s26
    %p84 = scmp.eq.s32.totalorder %s83, 0
    %s86 = sadd.s32 %s85, 1
    %s87 = scalar_select %p84, %s85, %s86
    %p90 = pneg %p84
    %p91 = scmp.eq.s32.totalorder %s11, 1
    %p92 = por %p90, %p91
    %p93 = scmp.ne.s32.totalorder %s85, %s88
    %p94 = scmp.eq.s32.totalorder %s11, 0
    %p95 = por %p93, %p94
    %p96 = scmp.ne.s32.totalorder %s85, %s88
    %p97 = scmp.eq.s32.totalorder %s16, 1
    %p98 = por %p96, %p97
    %p99 = scmp.ne.s32.totalorder %s88, %s89
    %p100 = scmp.eq.s32.totalorder %s16, 0
    %p101 = por %p99, %p100
    %p102 = scmp.ne.s32.totalorder %s88, %s89
    %p103 = scmp.eq.s32.totalorder %s17, 1
    %p104 = por %p102, %p103
    %p106 = scmp.ne.s32.totalorder %s89, %s105
    %p107 = scmp.eq.s32.totalorder %s17, 0
    %p108 = por %p106, %p107
    %s109 = ssub.s32 %s18, %s30
    %p110 = scmp.eq.s32.totalorder %s109, 0
    %s112 = sadd.s32 %s111, 1
    %s113 = scalar_select %p110, %s111, %s112
    %p116 = pneg %p110
    %p117 = scmp.eq.s32.totalorder %s11, 1
    %p118 = por %p116, %p117
    %p119 = scmp.ne.s32.totalorder %s111, %s114
    %p120 = scmp.eq.s32.totalorder %s11, 0
    %p121 = por %p119, %p120
    %p122 = scmp.ne.s32.totalorder %s111, %s114
    %p123 = scmp.eq.s32.totalorder %s16, 1
    %p124 = por %p122, %p123
    %p125 = scmp.ne.s32.totalorder %s114, %s115
    %p126 = scmp.eq.s32.totalorder %s16, 0
    %p127 = por %p125, %p126
    %p128 = scmp.ne.s32.totalorder %s114, %s115
    %p129 = scmp.eq.s32.totalorder %s17, 1
    %p130 = por %p128, %p129
    %p132 = scmp.ne.s32.totalorder %s115, %s131
    %p133 = scmp.eq.s32.totalorder %s17, 0
    %p134 = por %p132, %p133
    %s135 = ssub.s32 %s19, %s26
    %p136 = scmp.eq.s32.totalorder %s135, 0
    %s138 = sadd.s32 %s137, 1
    %s139 = scalar_select %p136, %s137, %s138
    %p142 = pneg %p136
    %p143 = scmp.eq.s32.totalorder %s11, 1
    %p144 = por %p142, %p143
    %p145 = scmp.ne.s32.totalorder %s137, %s140
    %p146 = scmp.eq.s32.totalorder %s11, 0
    %p147 = por %p145, %p146
    %p148 = scmp.ne.s32.totalorder %s137, %s140
    %p149 = scmp.eq.s32.totalorder %s16, 1
    %p150 = por %p148, %p149
    %p151 = scmp.ne.s32.totalorder %s140, %s141
    %p152 = scmp.eq.s32.totalorder %s16, 0
    %p153 = por %p151, %p152
    %p154 = scmp.ne.s32.totalorder %s140, %s141
    %p155 = scmp.eq.s32.totalorder %s17, 1
    %p156 = por %p154, %p155
    %p158 = scmp.ne.s32.totalorder %s141, %s157
    %p159 = scmp.eq.s32.totalorder %s17, 0
    %p160 = por %p158, %p159
    %s161 = ssub.s32 %s18, %s30
    %s162 = ssub.s32 %s19, %s26
    %s163 = sor.u32 %s161, %s162
    %p164 = scmp.eq.s32.totalorder %s163, 0
    %s166 = sadd.s32 %s165, 1
    %s167 = scalar_select %p164, %s165, %s166
    %p170 = pneg %p164
    %p171 = scmp.eq.s32.totalorder %s11, 1
    %p172 = por %p170, %p171
    %p173 = scmp.ne.s32.totalorder %s165, %s168
    %p174 = scmp.eq.s32.totalorder %s11, 0
    %p175 = por %p173, %p174
    %p176 = scmp.ne.s32.totalorder %s165, %s168
    %p177 = scmp.eq.s32.totalorder %s16, 1
    %p178 = por %p176, %p177
    %p179 = scmp.ne.s32.totalorder %s168, %s169
    %p180 = scmp.eq.s32.totalorder %s16, 0
    %p181 = por %p179, %p180
    %p182 = scmp.ne.s32.totalorder %s168, %s169
    %p183 = scmp.eq.s32.totalorder %s17, 1
    %p184 = por %p182, %p183
    %p186 = scmp.ne.s32.totalorder %s169, %s185
    %p187 = scmp.eq.s32.totalorder %s17, 0
    %p188 = por %p186, %p187
    %p189 = scmp.le.s32.totalorder 1, %s11
    %p190 = scmp.lt.s32.totalorder %s11, 3
    %p191 = pnand %p189, %p190
    %p192 = pneg %p191
    // Predicated region
    $region9: #{bottleneck_forward.5} parent=5 // pred_check
      _
    $region10: #{bottleneck_forward.5} parent=5 // pred_check_branch
      %194 = sbr.rel (%p191) target = $region12
    $region11: #{bottleneck_forward.5} parent=5 // pred_region
      %s195 = ssub.s32 %s11, 1
      // Predicated region
      $region13: #{bottleneck_forward.5} parent=11 // pred_check
        %p196 = pneg %p75
      $region14: #{bottleneck_forward.5} parent=11 // pred_check_branch
        %198 = sbr.rel (%p196) target = $region16
      $region15: #{bottleneck_forward.5} parent=11 // pred_region
        %p199 = scmp.lt.s32.totalorder %s21, 0
        %s200 = scalar_select %p199, %s21, 0
        %s201 = smul.addr %s200, 4
        %s202 = scalar_lea.vmem %s1, %s201
      $region16: #{bottleneck_forward.5} parent=11 // pred_fallthru
        _
      // Predicated region
      $region17: #{bottleneck_forward.5} parent=11 // pred_check
        %p203 = pneg %p101
      $region18: #{bottleneck_forward.5} parent=11 // pred_check_branch
        %205 = sbr.rel (%p203) target = $region20
      $region19: #{bottleneck_forward.5} parent=11 // pred_region
        %p206 = scmp.lt.s32.totalorder %s21, 0
        %s207 = scalar_select %p206, %s21, 0
        %s208 = scalar_lea.vmem %s2, %s207
      $region20: #{bottleneck_forward.5} parent=11 // pred_fallthru
        _
      // Predicated region
      $region21: #{bottleneck_forward.5} parent=11 // pred_check
        %p209 = pneg %p153
      $region22: #{bottleneck_forward.5} parent=11 // pred_check_branch
        %211 = sbr.rel (%p209) target = $region24
      $region23: #{bottleneck_forward.5} parent=11 // pred_region
        %p212 = scmp.lt.s32.totalorder %s21, 0
        %s213 = scalar_select %p212, %s21, 0
        %s214 = smul.addr %s213, 4
        %s215 = scalar_lea.vmem %s4, %s214
      $region24: #{bottleneck_forward.5} parent=11 // pred_fallthru
        _
    $region12: #{bottleneck_forward.5} parent=5 // pred_fallthru
      _
    %p216 = scmp.lt.s32.totalorder %s11, 2
    // Predicated region
    $region25: #{bottleneck_forward.5} parent=5 // pred_check
      %p217 = pneg %p216
    $region26: #{bottleneck_forward.5} parent=5 // pred_check_branch
      %219 = sbr.rel (%p217) target = $region28
    $region27: #{bottleneck_forward.5} parent=5 // pred_region
      // Predicated region
      $region29: #{bottleneck_forward.5} parent=27 // pred_check
        %p220 = pneg %p43
      $region30: #{bottleneck_forward.5} parent=27 // pred_check_branch
        %222 = sbr.rel (%p220) target = $region32
      $region31: #{bottleneck_forward.5} parent=27 // pred_region
        %s223 = smul.u32 8, %s18
        %p224 = scmp.lt.s32.totalorder %s223, 15
        %s225 = scalar_select %p224, %s223, 15
        %s226 = smul.addr %s225, 4
        %s227 = scalar_lea.vmem %s0, %s226
        %s228 = smul.u32 8, %s18
      $region32: #{bottleneck_forward.5} parent=27 // pred_fallthru
        _
      // Predicated region
      $region33: #{bottleneck_forward.5} parent=27 // pred_check
        %p229 = pneg %p121
      $region34: #{bottleneck_forward.5} parent=27 // pred_check_branch
        %231 = sbr.rel (%p229) target = $region36
      $region35: #{bottleneck_forward.5} parent=27 // pred_region
        %s232 = smul.u32 8, %s18
        %p233 = scmp.lt.s32.totalorder %s232, 15
        %s234 = scalar_select %p233, %s232, 15
        %s235 = smul.addr %s234, 4
        %s236 = scalar_lea.vmem %s3, %s235
        %s237 = smul.u32 8, %s18
      $region36: #{bottleneck_forward.5} parent=27 // pred_fallthru
        _
    $region28: #{bottleneck_forward.5} parent=5 // pred_fallthru
      _
    %p238 = scmp.le.s32.totalorder 1, %s11
    %p239 = scmp.lt.s32.totalorder %s11, 3
    %p240 = pnand %p238, %p239
    %p241 = pneg %p240
    // Predicated region
    $region37: #{bottleneck_forward.5} parent=5 // pred_check
      _
    $region38: #{bottleneck_forward.5} parent=5 // pred_check_branch
      %243 = sbr.rel (%p240) target = $region40
    $region39: #{bottleneck_forward.5} parent=5 // pred_region
      %s244 = ssub.s32 %s11, 1
      %s245 = smul.u32 8, %s20
      %p246 = scmp.lt.s32.totalorder %s245, 15
      %s247 = scalar_select %p246, %s245, 15
      %s248 = smul.addr %s247, 4
      %s249 = scalar_lea.vmem %s0, %s248
      %p250 = pneg %p49
      %p251 = pneg %p46
      %p252 = scmp.lt.s32.totalorder %s21, 0
      %s253 = scalar_select %p252, %s21, 0
      %s254 = smul.addr %s253, 4
      %s255 = scalar_lea.vmem %s1, %s254
      %p256 = pneg %p75
      %p257 = pneg %p72
      %p258 = scmp.lt.s32.totalorder %s21, 0
      %s259 = scalar_select %p258, %s21, 0
      %s260 = scalar_lea.vmem %s2, %s259
      %p261 = pneg %p101
      %p262 = pneg %p98
      %s263 = smul.u32 8, %s20
      %p264 = scmp.lt.s32.totalorder %s263, 15
      %s265 = scalar_select %p264, %s263, 15
      %s266 = smul.addr %s265, 4
      %s267 = scalar_lea.vmem %s3, %s266
      %p268 = pneg %p127
      %p269 = pneg %p124
      %p270 = scmp.lt.s32.totalorder %s21, 0
      %s271 = scalar_select %p270, %s21, 0
      %s272 = smul.addr %s271, 4
      %s273 = scalar_lea.vmem %s4, %s272
      %p274 = pneg %p153
      %p275 = pneg %p150
      %p276 = pneg %p181
      %p277 = pneg %p178
      %s278 = smul.u32 8, %s20
      %p279 = scmp.lt.s32.totalorder %s278, 15
      %s280 = scalar_select %p279, %s278, 15
      %p281 = scmp.lt.s32.totalorder %s21, 0
      %s282 = scalar_select %p281, %s21, 0
      %s283 = sadd.s32 %s282, %s280
      %s284 = smul.addr %s283, 4
      %s285 = scalar_lea.vmem %s5, %s284
      %s286 = smul.u32 8, %s20
      %p287 = scmp.lt.s32.totalorder %s286, 15
      %s288 = scalar_select %p287, %s286, 15
      %s289 = smul.addr %s288, 4
      %s290 = scalar_lea.vmem %s0, %s289
      %s291 = smul.u32 8, %s20
      %p292 = scmp.lt.s32.totalorder %s21, 0
      %s293 = scalar_select %p292, %s21, 0
      %s294 = smul.addr %s293, 4
      %s295 = scalar_lea.vmem %s1, %s294
      %p296 = scmp.lt.s32.totalorder %s21, 0
      %s297 = scalar_select %p296, %s21, 0
      %s298 = scalar_lea.vmem %s2, %s297
      %s299 = smul.u32 8, %s20
      %p300 = scmp.lt.s32.totalorder %s299, 15
      %s301 = scalar_select %p300, %s299, 15
      %s302 = smul.addr %s301, 4
      %s303 = scalar_lea.vmem %s3, %s302
      %s304 = smul.u32 8, %s20
      %p305 = scmp.lt.s32.totalorder %s21, 0
      %s306 = scalar_select %p305, %s21, 0
      %s307 = smul.addr %s306, 4
      %s308 = scalar_lea.vmem %s4, %s307
      %s309 = smul.u32 8, %s20
      %p310 = scmp.lt.s32.totalorder %s309, 15
      %s311 = scalar_select %p310, %s309, 15
      %p312 = scmp.lt.s32.totalorder %s21, 0
      %s313 = scalar_select %p312, %s21, 0
      %s314 = sadd.s32 %s313, %s311
      %s315 = smul.addr %s314, 4
      %s316 = scalar_lea.vmem %s5, %s315
      %s317 = smul.u32 8, %s20
      %v319 = vld [vmem:[%s290] sm:$0xf]
      %v320 = vld [vmem:[%s290 + $0x4] sm:$0xf]
      %v321 = vld [vmem:[%s290 + $0x8] sm:$0xf]
      %v322 = vld [vmem:[%s290 + $0xc] sm:$0xf]
      %v323 = vld [vmem:[%s290 + $0x10] sm:$0xf]
      %v324 = vld [vmem:[%s290 + $0x14] sm:$0xf]
      %v325 = vld [vmem:[%s290 + $0x18] sm:$0xf]
      %v326 = vld [vmem:[%s290 + $0x1c] sm:$0xf]
      %v327 = vld [vmem:[%s295] sm:$0xf]
      %v328 = vld [vmem:[%s295 + $0x4] sm:$0xf]
      %v329 = vld [vmem:[%s295 + $0x8] sm:$0xf]
      %v330 = vld [vmem:[%s295 + $0xc] sm:$0xf]
      %v331 = vld [vmem:[%s303] sm:$0xf]
      %v332 = vld [vmem:[%s303 + $0x4] sm:$0xf]
      %v333 = vld [vmem:[%s303 + $0x8] sm:$0xf]
      %v334 = vld [vmem:[%s303 + $0xc] sm:$0xf]
      %v335 = vld [vmem:[%s303 + $0x10] sm:$0xf]
      %v336 = vld [vmem:[%s303 + $0x14] sm:$0xf]
      %v337 = vld [vmem:[%s303 + $0x18] sm:$0xf]
      %v338 = vld [vmem:[%s303 + $0x1c] sm:$0xf]
      %v339 = vld [vmem:[%s308] sm:$0xf]
      %v340 = vld [vmem:[%s308 + $0x4] sm:$0xf]
      %v341 = vld [vmem:[%s308 + $0x8] sm:$0xf]
      %v342 = vld [vmem:[%s308 + $0xc] sm:$0xf]
      %v343 = vld [vmem:[%s308 + $0x10] sm:$0xf]
      %v344 = vld [vmem:[%s308 + $0x14] sm:$0xf]
      %v345 = vld [vmem:[%s308 + $0x18] sm:$0xf]
      %v346 = vld [vmem:[%s308 + $0x1c] sm:$0xf]
      %v355 = vunpack.c.l.b16 %v331
      %v356 = vunpack.c.l.b16 %v332
      %v357 = vunpack.c.l.b16 %v333
      %v358 = vunpack.c.l.b16 %v334
      %v359 = vunpack.c.l.b16 %v335
      %v360 = vunpack.c.l.b16 %v336
      %v361 = vunpack.c.l.b16 %v337
      %v362 = vunpack.c.l.b16 %v338
      %v363 = vpack.c.b16 %v356, %v355
      %v364 = vpack.c.b16 %v358, %v357
      %v365 = vpack.c.b16 %v360, %v359
      %v366 = vpack.c.b16 %v362, %v361
      %v375 = vunpack.c.l.b16 %v339
      %v376 = vunpack.c.l.b16 %v340
      %v377 = vunpack.c.l.b16 %v341
      %v378 = vunpack.c.l.b16 %v342
      %v379 = vunpack.c.l.b16 %v343
      %v380 = vunpack.c.l.b16 %v344
      %v381 = vunpack.c.l.b16 %v345
      %v382 = vunpack.c.l.b16 %v346
      %v383 = vpack.c.b16 %v376, %v375
      %v384 = vpack.c.b16 %v378, %v377
      %v385 = vpack.c.b16 %v380, %v379
      %v386 = vpack.c.b16 %v382, %v381
      %vm391 = vcmask 523264
      %v393 = vsel %vm391, %v363, 0
      %v396 = vsel %vm391, %v364, 0
      %v399 = vsel %vm391, %v365, 0
      %v402 = vsel %vm391, %v366, 0
      %404 = vmatprep.subr.bf16.mxu0 0
      %405 = vmatpush1.bf16.msra.mxu0 %v383
      %406 = vmatprep.subr.bf16.mxu0 0
      %407 = vmatpush1.bf16.msra.mxu0 %v384
      %408 = vmatprep.subr.bf16.mxu0 0
      %409 = vmatpush1.bf16.msra.mxu0 %v385
      %410 = vmatprep.subr.bf16.mxu0 0
      %411 = vmatpush1.bf16.msra.mxu0 %v386
      %412 = vmatprep.subr.bf16.mxu0 0
      %413 = vmatpush1.bf16.msra.mxu0 0
      %414 = vmatprep.subr.bf16.mxu0 0
      %415 = vmatpush1.bf16.msra.mxu0 0
      %416 = vmatprep.subr.bf16.mxu0 0
      %417 = vmatpush1.bf16.msra.mxu0 0
      %418 = vmatprep.subr.bf16.mxu0 0
      %419 = vmatpush1.bf16.msra.mxu0 0
      %420 = vmatprep.subr.bf16.mxu0 0
      %421 = vmatpush1.bf16.msra.mxu0 0
      %422 = vmatprep.subr.bf16.mxu0 0
      %423 = vmatpush1.bf16.msra.mxu0 0
      %424 = vmatprep.subr.bf16.mxu0 0
      %425 = vmatpush1.bf16.msra.mxu0 0
      %426 = vmatprep.subr.bf16.mxu0 0
      %427 = vmatpush1.bf16.msra.mxu0 0
      %428 = vmatprep.subr.bf16.mxu0 0
      %429 = vmatpush1.bf16.msra.mxu0 0
      %430 = vmatprep.subr.bf16.mxu0 0
      %431 = vmatpush1.bf16.msra.mxu0 0
      %432 = vmatprep.subr.bf16.mxu0 0
      %433 = vmatpush1.bf16.msra.mxu0 0
      %434 = vmatprep.subr.bf16.mxu0 0
      %435 = vmatpush1.bf16.msra.mxu0 0
      %436 = vmatprep.mubr.bf16.mxu0 0
      %437 = vmatmul.mubr.bf16.gmra.mrb[0].mxu0 %v393
      %v438 = vpop.f32.mrb[0].mxu0
      %v439 = vadd.f32 0.0, %v438
      %v440 = vpop.f32.mrb[0].mxu0
      %v441 = vpop.f32.mrb[0].mxu0
      %v442 = vadd.f32 0.0, %v441
      %v443 = vpop.f32.mrb[0].mxu0
      %444 = vmatprep.mubr.bf16.mxu0 0
      %445 = vmatmul.mubr.bf16.gmra.mrb[0].mxu0 %v396
      %v446 = vpop.f32.mrb[0].mxu0
      %v447 = vadd.f32 0.0, %v446
      %v448 = vpop.f32.mrb[0].mxu0
      %v449 = vpop.f32.mrb[0].mxu0
      %v450 = vadd.f32 0.0, %v449
      %v451 = vpop.f32.mrb[0].mxu0
      %452 = vmatprep.mubr.bf16.mxu0 0
      %453 = vmatmul.mubr.bf16.gmra.mrb[0].mxu0 %v399
      %v454 = vpop.f32.mrb[0].mxu0
      %v455 = vadd.f32 0.0, %v454
      %v456 = vpop.f32.mrb[0].mxu0
      %v457 = vpop.f32.mrb[0].mxu0
      %v458 = vadd.f32 0.0, %v457
      %v459 = vpop.f32.mrb[0].mxu0
      %460 = vmatprep.mubr.bf16.mxu0 0
      %461 = vmatmul.mubr.bf16.gmra.mrb[0].mxu0 %v402
      %v462 = vpop.f32.mrb[0].mxu0
      %v463 = vadd.f32 0.0, %v462
      %v464 = vpop.f32.mrb[0].mxu0
      %v465 = vpop.f32.mrb[0].mxu0
      %v466 = vadd.f32 0.0, %v465
      %v467 = vpop.f32.mrb[0].mxu0
      %468 = vdwg.mxu0
      %v477 = vunpack.c.l.b16 %v319
      %v478 = vunpack.c.l.b16 %v320
      %v479 = vunpack.c.l.b16 %v321
      %v480 = vunpack.c.l.b16 %v322
      %v481 = vunpack.c.l.b16 %v323
      %v482 = vunpack.c.l.b16 %v324
      %v483 = vunpack.c.l.b16 %v325
      %v484 = vunpack.c.l.b16 %v326
      %v485 = vpack.c.b16 %v478, %v477
      %v486 = vpack.c.b16 %v480, %v479
      %v487 = vpack.c.b16 %v482, %v481
      %v488 = vpack.c.b16 %v484, %v483
      %v493 = vunpack.c.l.b16 %v327
      %v494 = vunpack.c.l.b16 %v328
      %v495 = vunpack.c.l.b16 %v329
      %v496 = vunpack.c.l.b16 %v330
      %v497 = vpack.c.b16 %v494, %v493
      %v498 = vpack.c.b16 %v496, %v495
      %vm501 = vcmask 261120
      %v503 = vsel %vm501, %v485, 0
      %v506 = vsel %vm501, %v486, 0
      %v509 = vsel %vm501, %v487, 0
      %v512 = vsel %vm501, %v488, 0
      %514 = vmatprep.subr.bf16.mxu0 0
      %515 = vmatpush1.bf16.msra.mxu0 %v497
      %516 = vmatprep.subr.bf16.mxu0 0
      %517 = vmatpush1.bf16.msra.mxu0 %v498
      %518 = vmatprep.subr.bf16.mxu0 0
      %519 = vmatpush1.bf16.msra.mxu0 0
      %520 = vmatprep.subr.bf16.mxu0 0
      %521 = vmatpush1.bf16.msra.mxu0 0
      %522 = vmatprep.subr.bf16.mxu0 0
      %523 = vmatpush1.bf16.msra.mxu0 0
      %524 = vmatprep.subr.bf16.mxu0 0
      %525 = vmatpush1.bf16.msra.mxu0 0
      %526 = vmatprep.subr.bf16.mxu0 0
      %527 = vmatpush1.bf16.msra.mxu0 0
      %528 = vmatprep.subr.bf16.mxu0 0
      %529 = vmatpush1.bf16.msra.mxu0 0
      %530 = vmatprep.subr.bf16.mxu0 0
      %531 = vmatpush1.bf16.msra.mxu0 0
      %532 = vmatprep.subr.bf16.mxu0 0
      %533 = vmatpush1.bf16.msra.mxu0 0
      %534 = vmatprep.subr.bf16.mxu0 0
      %535 = vmatpush1.bf16.msra.mxu0 0
      %536 = vmatprep.subr.bf16.mxu0 0
      %537 = vmatpush1.bf16.msra.mxu0 0
      %538 = vmatprep.subr.bf16.mxu0 0
      %539 = vmatpush1.bf16.msra.mxu0 0
      %540 = vmatprep.subr.bf16.mxu0 0
      %541 = vmatpush1.bf16.msra.mxu0 0
      %542 = vmatprep.subr.bf16.mxu0 0
      %543 = vmatpush1.bf16.msra.mxu0 0
      %544 = vmatprep.subr.bf16.mxu0 0
      %545 = vmatpush1.bf16.msra.mxu0 0
      %546 = vmatprep.mubr.bf16.mxu0 0
      %547 = vmatmul.mubr.bf16.gmra.mrb[0].mxu0 %v503
      %v548 = vpop.f32.mrb[0].mxu0
      %v549 = vadd.f32 %v439, %v548
      %v550 = vpop.f32.mrb[0].mxu0
      %v551 = vpop.f32.mrb[0].mxu0
      %v552 = vadd.f32 %v442, %v551
      %v553 = vpop.f32.mrb[0].mxu0
      %554 = vmatprep.mubr.bf16.mxu0 0
      %555 = vmatmul.mubr.bf16.gmra.mrb[0].mxu0 %v506
      %v556 = vpop.f32.mrb[0].mxu0
      %v557 = vadd.f32 %v447, %v556
      %v558 = vpop.f32.mrb[0].mxu0
      %v559 = vpop.f32.mrb[0].mxu0
      %v560 = vadd.f32 %v450, %v559
      %v561 = vpop.f32.mrb[0].mxu0
      %562 = vmatprep.mubr.bf16.mxu0 0
      %563 = vmatmul.mubr.bf16.gmra.mrb[0].mxu0 %v509
      %v564 = vpop.f32.mrb[0].mxu0
      %v565 = vadd.f32 %v455, %v564
      %v566 = vpop.f32.mrb[0].mxu0
      %v567 = vpop.f32.mrb[0].mxu0
      %v568 = vadd.f32 %v458, %v567
      %v569 = vpop.f32.mrb[0].mxu0
      %570 = vmatprep.mubr.bf16.mxu0 0
      %571 = vmatmul.mubr.bf16.gmra.mrb[0].mxu0 %v512
      %v572 = vpop.f32.mrb[0].mxu0
      %v573 = vadd.f32 %v463, %v572
      %v574 = vpop.f32.mrb[0].mxu0
      %v575 = vpop.f32.mrb[0].mxu0
      %v576 = vadd.f32 %v466, %v575
      %v577 = vpop.f32.mrb[0].mxu0
      %578 = vdwg.mxu0
      %v579 = vld [vmem:[%s298] sm:$0x1]
      %v581 = vlaneseq
      %v582 = vshrl.u32 %v581, 7
      %v583 = vsub.s32 0, %v582
      %v584 = vrot.slane %v579, %v583
      %v586 = vadd.f32 %v549, %v584
      %v587 = vadd.f32 %v552, %v584
      %v588 = vadd.f32 %v557, %v584
      %v589 = vadd.f32 %v560, %v584
      %v590 = vadd.f32 %v565, %v584
      %v591 = vadd.f32 %v568, %v584
      %v592 = vadd.f32 %v573, %v584
      %v593 = vadd.f32 %v576, %v584
      %v594 = vmax.f32 %v586, 0.0
      %v595 = vmax.f32 %v587, 0.0
      %v596 = vmax.f32 %v588, 0.0
      %v597 = vmax.f32 %v589, 0.0
      %v598 = vmax.f32 %v590, 0.0
      %v599 = vmax.f32 %v591, 0.0
      %v600 = vmax.f32 %v592, 0.0
      %v601 = vmax.f32 %v593, 0.0
      %v602 = vpack.c.bf16 %v595, %v594
      %v603 = vpack.c.bf16 %v597, %v596
      %v604 = vpack.c.bf16 %v599, %v598
      %v605 = vpack.c.bf16 %v601, %v600
      %v610 = vunpack.c.l.b16 %v602
      %v611 = vunpack.c.h.b16 %v602
      %v612 = vunpack.c.l.b16 %v603
      %v613 = vunpack.c.h.b16 %v603
      %v614 = vunpack.c.l.b16 %v604
      %v615 = vunpack.c.h.b16 %v604
      %v616 = vunpack.c.l.b16 %v605
      %v617 = vunpack.c.h.b16 %v605
      %v618 = vpack.c.b16 %v610, %v610
      %v619 = vpack.c.b16 %v611, %v611
      %v620 = vpack.c.b16 %v612, %v612
      %v621 = vpack.c.b16 %v613, %v613
      %v622 = vpack.c.b16 %v614, %v614
      %v623 = vpack.c.b16 %v615, %v615
      %v624 = vpack.c.b16 %v616, %v616
      %v625 = vpack.c.b16 %v617, %v617
      %634 = vst [vmem:[%s316] sm:$0xf] %v618
      %635 = vst [vmem:[%s316 + $0x4] sm:$0xf] %v619
      %636 = vst [vmem:[%s316 + $0x8] sm:$0xf] %v620
      %637 = vst [vmem:[%s316 + $0xc] sm:$0xf] %v621
      %638 = vst [vmem:[%s316 + $0x10] sm:$0xf] %v622
      %639 = vst [vmem:[%s316 + $0x14] sm:$0xf] %v623
      %640 = vst [vmem:[%s316 + $0x18] sm:$0xf] %v624
      %641 = vst [vmem:[%s316 + $0x1c] sm:$0xf] %v625
      %s642 = smul.u32 8, %s20
      %p643 = scmp.lt.s32.totalorder %s642, 15
      %s644 = scalar_select %p643, %s642, 15
      %p645 = scmp.lt.s32.totalorder %s21, 0
      %s646 = scalar_select %p645, %s21, 0
      %s647 = sadd.s32 %s646, %s644
      %s648 = smul.addr %s647, 4
      %s649 = scalar_lea.vmem %s5, %s648
      // Predicated region
      $region41: #{bottleneck_forward.5} parent=39 // pred_check
        %p650 = pneg %p178
      $region42: #{bottleneck_forward.5} parent=39 // pred_check_branch
        %652 = sbr.rel (%p650) target = $region44
      $region43: #{bottleneck_forward.5} parent=39 // pred_region
        %s653 = smul.u32 8, %s20
      $region44: #{bottleneck_forward.5} parent=39 // pred_fallthru
        _
    $region40: #{bottleneck_forward.5} parent=5 // pred_fallthru
      _
    %p654 = scmp.le.s32.totalorder 2, %s11
    // Predicated region
    $region45: #{bottleneck_forward.5} parent=5 // pred_check
      %p655 = pneg %p654
    $region46: #{bottleneck_forward.5} parent=5 // pred_check_branch
      %657 = sbr.rel (%p655) target = $region48
    $region47: #{bottleneck_forward.5} parent=5 // pred_region
      %s658 = ssub.s32 %s11, 2
      // Predicated region
      $region49: #{bottleneck_forward.5} parent=47 // pred_check
        %p659 = pneg %p184
      $region50: #{bottleneck_forward.5} parent=47 // pred_check_branch
        %661 = sbr.rel (%p659) target = $region52
      $region51: #{bottleneck_forward.5} parent=47 // pred_region
        %s662 = smul.u32 8, %s22
        %p663 = scmp.lt.s32.totalorder %s662, 15
        %s664 = scalar_select %p663, %s662, 15
        %p665 = scmp.lt.s32.totalorder %s23, 0
        %s666 = scalar_select %p665, %s23, 0
        %s667 = sadd.s32 %s666, %s664
        %s668 = smul.addr %s667, 4
        %s669 = scalar_lea.vmem %s5, %s668
      $region52: #{bottleneck_forward.5} parent=47 // pred_fallthru
        _
    $region48: #{bottleneck_forward.5} parent=5 // pred_fallthru
      _
  $region6: #{bottleneck_forward.5} parent=0 // loop_footer
    %s15 = sadd.s32 1, %s11
  $region7: #{bottleneck_forward.5} parent=0 // loop_footer_branch
    %10 = sbr.rel target = $region3
  $region8: #{bottleneck_forward.5} parent=0 // loop_exit
    _

// kernel: bottleneck_forward.4
$region0: #{bottleneck_forward.4}
  #allocation0 [shape = 'u32[]', space=smem, size = 0x4, offset = 0x4, fixed_abs, tag = 'smem constant byte address 0x4 - core index']
  #allocation1 [shape = 'u32[144,128]{1,0:T(1,128)}', space=vmem, size = 0x12000, scoped, tag = 'internal scratch']
  %s0 = inlined_call_operand.vmem [shape: bf16[8,100,32], index: 0, kind: input, shape index: {}]
  %s1 = inlined_call_operand.vmem [shape: bf16[9,32,32], index: 1, kind: input, shape index: {}]
  %s2 = inlined_call_operand.vmem [shape: f32[1,32], index: 2, kind: input, shape index: {}]
  %s3 = inlined_call_operand.vmem [shape: bf16[2,80,32], index: 3, kind: output, shape index: {}]
  %s4 = sld [smem:[#allocation0]]
  $region45: #{bottleneck_forward.4} parent=0
    _
  %s6 = ssub.s32 1, %s4
  %s7 = scalar_select 0, %s6, %s4
  loop: start=0, step=1, limit=4
  $region2: #{bottleneck_forward.4} parent=0 // loop_pre_header
    _
  $region3: #{bottleneck_forward.4} parent=0 // loop_header
    %s9 = sphi 0, %s13
    %p10 = scmp.ge.s32.totalorder %s9, 4
    %s16 = sphi 0, %s28
    %s17 = sphi 0, %s24
    %s18 = sphi 0, %s16
    %s19 = sphi 0, %s17
    %s20 = sphi 0, %s18
    %s21 = sphi 0, %s19
    %s31 = sphi 0, %s33
    %s34 = sphi 0, %s31
    %s35 = sphi 0, %s34
    %s51 = sphi 0, %s35
    %s57 = sphi 0, %s59
    %s60 = sphi 0, %s57
    %s61 = sphi 0, %s60
    %s77 = sphi 0, %s61
    %s83 = sphi 0, %s85
    %s86 = sphi 0, %s83
    %s87 = sphi 0, %s86
    %s103 = sphi 0, %s87
    %s111 = sphi 0, %s113
    %s114 = sphi 0, %s111
    %s115 = sphi 0, %s114
    %s131 = sphi 0, %s115
  $region4: #{bottleneck_forward.4} parent=0 // loop_header_branch
    %12 = sbr.rel (%p10) target = $region8
  $region5: #{bottleneck_forward.4} parent=0 // loop_body
    %s14 = ssub.s32 %s9, 1
    %s15 = ssub.s32 %s9, 2
    %s22 = sadd.s32 1, %s17
    %p23 = scmp.ge.s32.totalorder %s22, 1
    %s24 = scalar_select %p23, 0, %s22
    %s25 = sadd.s32 1, %s16
    %s26 = scalar_select %p23, %s25, %s16
    %p27 = scmp.ge.s32.totalorder %s26, 2
    %s28 = scalar_select %p27, 0, %s26
    %s29 = ssub.s32 %s16, %s28
    %p30 = scmp.eq.s32.totalorder %s29, 0
    %s32 = sadd.s32 %s31, 1
    %s33 = scalar_select %p30, %s31, %s32
    %p36 = pneg %p30
    %p37 = scmp.eq.s32.totalorder %s9, 1
    %p38 = por %p36, %p37
    %p39 = scmp.ne.s32.totalorder %s31, %s34
    %p40 = scmp.eq.s32.totalorder %s9, 0
    %p41 = por %p39, %p40
    %p42 = scmp.ne.s32.totalorder %s31, %s34
    %p43 = scmp.eq.s32.totalorder %s14, 1
    %p44 = por %p42, %p43
    %p45 = scmp.ne.s32.totalorder %s34, %s35
    %p46 = scmp.eq.s32.totalorder %s14, 0
    %p47 = por %p45, %p46
    %p48 = scmp.ne.s32.totalorder %s34, %s35
    %p49 = scmp.eq.s32.totalorder %s15, 1
    %p50 = por %p48, %p49
    %p52 = scmp.ne.s32.totalorder %s35, %s51
    %p53 = scmp.eq.s32.totalorder %s15, 0
    %p54 = por %p52, %p53
    %s55 = ssub.s32 %s17, %s24
    %p56 = scmp.eq.s32.totalorder %s55, 0
    %s58 = sadd.s32 %s57, 1
    %s59 = scalar_select %p56, %s57, %s58
    %p62 = pneg %p56
    %p63 = scmp.eq.s32.totalorder %s9, 1
    %p64 = por %p62, %p63
    %p65 = scmp.ne.s32.totalorder %s57, %s60
    %p66 = scmp.eq.s32.totalorder %s9, 0
    %p67 = por %p65, %p66
    %p68 = scmp.ne.s32.totalorder %s57, %s60
    %p69 = scmp.eq.s32.totalorder %s14, 1
    %p70 = por %p68, %p69
    %p71 = scmp.ne.s32.totalorder %s60, %s61
    %p72 = scmp.eq.s32.totalorder %s14, 0
    %p73 = por %p71, %p72
    %p74 = scmp.ne.s32.totalorder %s60, %s61
    %p75 = scmp.eq.s32.totalorder %s15, 1
    %p76 = por %p74, %p75
    %p78 = scmp.ne.s32.totalorder %s61, %s77
    %p79 = scmp.eq.s32.totalorder %s15, 0
    %p80 = por %p78, %p79
    %s81 = ssub.s32 %s17, %s24
    %p82 = scmp.eq.s32.totalorder %s81, 0
    %s84 = sadd.s32 %s83, 1
    %s85 = scalar_select %p82, %s83, %s84
    %p88 = pneg %p82
    %p89 = scmp.eq.s32.totalorder %s9, 1
    %p90 = por %p88, %p89
    %p91 = scmp.ne.s32.totalorder %s83, %s86
    %p92 = scmp.eq.s32.totalorder %s9, 0
    %p93 = por %p91, %p92
    %p94 = scmp.ne.s32.totalorder %s83, %s86
    %p95 = scmp.eq.s32.totalorder %s14, 1
    %p96 = por %p94, %p95
    %p97 = scmp.ne.s32.totalorder %s86, %s87
    %p98 = scmp.eq.s32.totalorder %s14, 0
    %p99 = por %p97, %p98
    %p100 = scmp.ne.s32.totalorder %s86, %s87
    %p101 = scmp.eq.s32.totalorder %s15, 1
    %p102 = por %p100, %p101
    %p104 = scmp.ne.s32.totalorder %s87, %s103
    %p105 = scmp.eq.s32.totalorder %s15, 0
    %p106 = por %p104, %p105
    %s107 = ssub.s32 %s16, %s28
    %s108 = ssub.s32 %s17, %s24
    %s109 = sor.u32 %s107, %s108
    %p110 = scmp.eq.s32.totalorder %s109, 0
    %s112 = sadd.s32 %s111, 1
    %s113 = scalar_select %p110, %s111, %s112
    %p116 = pneg %p110
    %p117 = scmp.eq.s32.totalorder %s9, 1
    %p118 = por %p116, %p117
    %p119 = scmp.ne.s32.totalorder %s111, %s114
    %p120 = scmp.eq.s32.totalorder %s9, 0
    %p121 = por %p119, %p120
    %p122 = scmp.ne.s32.totalorder %s111, %s114
    %p123 = scmp.eq.s32.totalorder %s14, 1
    %p124 = por %p122, %p123
    %p125 = scmp.ne.s32.totalorder %s114, %s115
    %p126 = scmp.eq.s32.totalorder %s14, 0
    %p127 = por %p125, %p126
    %p128 = scmp.ne.s32.totalorder %s114, %s115
    %p129 = scmp.eq.s32.totalorder %s15, 1
    %p130 = por %p128, %p129
    %p132 = scmp.ne.s32.totalorder %s115, %s131
    %p133 = scmp.eq.s32.totalorder %s15, 0
    %p134 = por %p132, %p133
    %p135 = scmp.le.s32.totalorder 1, %s9
    %p136 = scmp.lt.s32.totalorder %s9, 3
    %p137 = pnand %p135, %p136
    %p138 = pneg %p137
    // Predicated region
    $region9: #{bottleneck_forward.4} parent=5 // pred_check
      _
    $region10: #{bottleneck_forward.4} parent=5 // pred_check_branch
      %140 = sbr.rel (%p137) target = $region12
    $region11: #{bottleneck_forward.4} parent=5 // pred_region
      %s141 = ssub.s32 %s9, 1
      // Predicated region
      $region13: #{bottleneck_forward.4} parent=11 // pred_check
        %p142 = pneg %p73
      $region14: #{bottleneck_forward.4} parent=11 // pred_check_branch
        %144 = sbr.rel (%p142) target = $region16
      $region15: #{bottleneck_forward.4} parent=11 // pred_region
        %p145 = scmp.lt.s32.totalorder %s19, 0
        %s146 = scalar_select %p145, %s19, 0
        %s147 = smul.addr %s146, 4
        %s148 = scalar_lea.vmem %s1, %s147
      $region16: #{bottleneck_forward.4} parent=11 // pred_fallthru
        _
      // Predicated region
      $region17: #{bottleneck_forward.4} parent=11 // pred_check
        %p149 = pneg %p99
      $region18: #{bottleneck_forward.4} parent=11 // pred_check_branch
        %151 = sbr.rel (%p149) target = $region20
      $region19: #{bottleneck_forward.4} parent=11 // pred_region
        %p152 = scmp.lt.s32.totalorder %s19, 0
        %s153 = scalar_select %p152, %s19, 0
        %s154 = scalar_lea.vmem %s2, %s153
      $region20: #{bottleneck_forward.4} parent=11 // pred_fallthru
        _
    $region12: #{bottleneck_forward.4} parent=5 // pred_fallthru
      _
    %p155 = scmp.lt.s32.totalorder %s9, 2
    // Predicated region
    $region21: #{bottleneck_forward.4} parent=5 // pred_check
      %p156 = pneg %p155
    $region22: #{bottleneck_forward.4} parent=5 // pred_check_branch
      %158 = sbr.rel (%p156) target = $region24
    $region23: #{bottleneck_forward.4} parent=5 // pred_region
      // Predicated region
      $region25: #{bottleneck_forward.4} parent=23 // pred_check
        %p159 = pneg %p41
      $region26: #{bottleneck_forward.4} parent=23 // pred_check_branch
        %161 = sbr.rel (%p159) target = $region28
      $region27: #{bottleneck_forward.4} parent=23 // pred_region
        %s162 = smul.u32 4, %s16
        %p163 = scmp.lt.s32.totalorder %s162, 7
        %s164 = scalar_select %p163, %s162, 7
        %s165 = smul.addr %s164, 13
        %s166 = smul.addr %s165, 4
        %s167 = scalar_lea.vmem %s0, %s166
        %s168 = smul.u32 4, %s16
      $region28: #{bottleneck_forward.4} parent=23 // pred_fallthru
        _
    $region24: #{bottleneck_forward.4} parent=5 // pred_fallthru
      _
    %p169 = scmp.le.s32.totalorder 1, %s9
    %p170 = scmp.lt.s32.totalorder %s9, 3
    %p171 = pnand %p169, %p170
    %p172 = pneg %p171
    // Predicated region
    $region29: #{bottleneck_forward.4} parent=5 // pred_check
      _
    $region30: #{bottleneck_forward.4} parent=5 // pred_check_branch
      %174 = sbr.rel (%p171) target = $region32
    $region31: #{bottleneck_forward.4} parent=5 // pred_region
      %s175 = ssub.s32 %s9, 1
      %s176 = smul.u32 4, %s18
      %p177 = scmp.lt.s32.totalorder %s176, 7
      %s178 = scalar_select %p177, %s176, 7
      %s179 = smul.addr %s178, 13
      %s180 = smul.addr %s179, 4
      %s181 = scalar_lea.vmem %s0, %s180
      %p182 = pneg %p47
      %p183 = pneg %p44
      %p184 = scmp.lt.s32.totalorder %s19, 0
      %s185 = scalar_select %p184, %s19, 0
      %s186 = smul.addr %s185, 4
      %s187 = scalar_lea.vmem %s1, %s186
      %p188 = pneg %p73
      %p189 = pneg %p70
      %p190 = scmp.lt.s32.totalorder %s19, 0
      %s191 = scalar_select %p190, %s19, 0
      %s192 = scalar_lea.vmem %s2, %s191
      %p193 = pneg %p99
      %p194 = pneg %p96
      %p195 = pneg %p127
      %p196 = pneg %p124
      %p197 = scmp.lt.s32.totalorder %s18, 1
      %s198 = scalar_select %p197, %s18, 1
      %p199 = scmp.lt.s32.totalorder %s19, 0
      %s200 = scalar_select %p199, %s19, 0
      %s201 = smul.addr %s198, 10
      %s202 = sadd.s32 %s200, %s201
      %s203 = smul.addr %s202, 4
      %s204 = scalar_lea.vmem %s3, %s203
      %s205 = smul.u32 4, %s18
      %p206 = scmp.lt.s32.totalorder %s205, 7
      %s207 = scalar_select %p206, %s205, 7
      %s208 = smul.addr %s207, 13
      %s209 = smul.addr %s208, 4
      %s210 = scalar_lea.vmem %s0, %s209
      %s211 = smul.u32 4, %s18
      %p212 = scmp.lt.s32.totalorder %s19, 0
      %s213 = scalar_select %p212, %s19, 0
      %s214 = smul.addr %s213, 4
      %s215 = scalar_lea.vmem %s1, %s214
      %p216 = scmp.lt.s32.totalorder %s19, 0
      %s217 = scalar_select %p216, %s19, 0
      %s218 = scalar_lea.vmem %s2, %s217
      %p219 = scmp.lt.s32.totalorder %s18, 1
      %s220 = scalar_select %p219, %s18, 1
      %p221 = scmp.lt.s32.totalorder %s19, 0
      %s222 = scalar_select %p221, %s19, 0
      %s223 = smul.addr %s220, 10
      %s224 = sadd.s32 %s222, %s223
      %s225 = smul.addr %s224, 4
      %s226 = scalar_lea.vmem %s3, %s225
      %v228 = vld [vmem:[%s210] sm:$0xf]
      %v229 = vld [vmem:[%s210 + $0x4] sm:$0xf]
      %v230 = vld [vmem:[%s210 + $0x8] sm:$0xf]
      %v231 = vld [vmem:[%s210 + $0xc] sm:$0xf]
      %v232 = vld [vmem:[%s210 + $0x10] sm:$0xf]
      %v233 = vld [vmem:[%s210 + $0x14] sm:$0xf]
      %v234 = vld [vmem:[%s210 + $0x18] sm:$0xf]
      %v235 = vld [vmem:[%s210 + $0x1c] sm:$0xf]
      %v236 = vld [vmem:[%s210 + $0x20] sm:$0xf]
      %v237 = vld [vmem:[%s210 + $0x24] sm:$0xf]
      %v238 = vld [vmem:[%s215] sm:$0xf]
      %v239 = vld [vmem:[%s215 + $0x4] sm:$0xf]
      %v240 = vld [vmem:[%s215 + $0x8] sm:$0xf]
      %v241 = vld [vmem:[%s215 + $0xc] sm:$0xf]
      %s242 = scalar_lea.vmem %s210, 52
      %v243 = vld [vmem:[%s242] sm:$0xf]
      %v244 = vld [vmem:[%s242 + $0x4] sm:$0xf]
      %v245 = vld [vmem:[%s242 + $0x8] sm:$0xf]
      %v246 = vld [vmem:[%s242 + $0xc] sm:$0xf]
      %v247 = vld [vmem:[%s242 + $0x10] sm:$0xf]
      %v248 = vld [vmem:[%s242 + $0x14] sm:$0xf]
      %v249 = vld [vmem:[%s242 + $0x18] sm:$0xf]
      %v250 = vld [vmem:[%s242 + $0x1c] sm:$0xf]
      %v251 = vld [vmem:[%s242 + $0x20] sm:$0xf]
      %v252 = vld [vmem:[%s242 + $0x24] sm:$0xf]
      %s253 = scalar_lea.vmem %s215, 16
      %v254 = vld [vmem:[%s253] sm:$0xf]
      %v255 = vld [vmem:[%s253 + $0x4] sm:$0xf]
      %v256 = vld [vmem:[%s253 + $0x8] sm:$0xf]
      %v257 = vld [vmem:[%s253 + $0xc] sm:$0xf]
      %v268 = vunpack.c.l.b16 %v243
      %v269 = vunpack.c.l.b16 %v244
      %v270 = vunpack.c.l.b16 %v245
      %v271 = vunpack.c.l.b16 %v246
      %v272 = vunpack.c.l.b16 %v247
      %v273 = vunpack.c.l.b16 %v248
      %v274 = vunpack.c.l.b16 %v249
      %v275 = vunpack.c.l.b16 %v250
      %v276 = vunpack.c.l.b16 %v251
      %v277 = vunpack.c.l.b16 %v252
      %v278 = vpack.c.b16 %v269, %v268
      %v279 = vpack.c.b16 %v271, %v270
      %v280 = vpack.c.b16 %v273, %v272
      %v281 = vpack.c.b16 %v275, %v274
      %v282 = vpack.c.b16 %v277, %v276
      %v287 = vunpack.c.l.b16 %v254
      %v288 = vunpack.c.l.b16 %v255
      %v289 = vunpack.c.l.b16 %v256
      %v290 = vunpack.c.l.b16 %v257
      %v291 = vpack.c.b16 %v288, %v287
      %v292 = vpack.c.b16 %v290, %v289
      %vm295 = vcmask 261120
      %v297 = vsel %vm295, %v278, 0
      %v300 = vsel %vm295, %v279, 0
      %v303 = vsel %vm295, %v280, 0
      %v306 = vsel %vm295, %v281, 0
      %v309 = vsel %vm295, %v282, 0
      %311 = vmatprep.subr.bf16.mxu0 0
      %312 = vmatpush1.bf16.msra.mxu0 %v291
      %313 = vmatprep.subr.bf16.mxu0 0
      %314 = vmatpush1.bf16.msra.mxu0 %v292
      %315 = vmatprep.subr.bf16.mxu0 0
      %316 = vmatpush1.bf16.msra.mxu0 0
      %317 = vmatprep.subr.bf16.mxu0 0
      %318 = vmatpush1.bf16.msra.mxu0 0
      %319 = vmatprep.subr.bf16.mxu0 0
      %320 = vmatpush1.bf16.msra.mxu0 0
      %321 = vmatprep.subr.bf16.mxu0 0
      %322 = vmatpush1.bf16.msra.mxu0 0
      %323 = vmatprep.subr.bf16.mxu0 0
      %324 = vmatpush1.bf16.msra.mxu0 0
      %325 = vmatprep.subr.bf16.mxu0 0
      %326 = vmatpush1.bf16.msra.mxu0 0
      %327 = vmatprep.subr.bf16.mxu0 0
      %328 = vmatpush1.bf16.msra.mxu0 0
      %329 = vmatprep.subr.bf16.mxu0 0
      %330 = vmatpush1.bf16.msra.mxu0 0
      %331 = vmatprep.subr.bf16.mxu0 0
      %332 = vmatpush1.bf16.msra.mxu0 0
      %333 = vmatprep.subr.bf16.mxu0 0
      %334 = vmatpush1.bf16.msra.mxu0 0
      %335 = vmatprep.subr.bf16.mxu0 0
      %336 = vmatpush1.bf16.msra.mxu0 0
      %337 = vmatprep.subr.bf16.mxu0 0
      %338 = vmatpush1.bf16.msra.mxu0 0
      %339 = vmatprep.subr.bf16.mxu0 0
      %340 = vmatpush1.bf16.msra.mxu0 0
      %341 = vmatprep.subr.bf16.mxu0 0
      %342 = vmatpush1.bf16.msra.mxu0 0
      %343 = vmatprep.mubr.bf16.mxu0 0
      %344 = vmatmul.mubr.bf16.gmra.mrb[0].mxu0 %v297
      %v345 = vpop.f32.mrb[0].mxu0
      %v346 = vadd.f32 0.0, %v345
      %v347 = vpop.f32.mrb[0].mxu0
      %v348 = vpop.f32.mrb[0].mxu0
      %v349 = vadd.f32 0.0, %v348
      %v350 = vpop.f32.mrb[0].mxu0
      %351 = vmatprep.mubr.bf16.mxu0 0
      %352 = vmatmul.mubr.bf16.gmra.mrb[0].mxu0 %v300
      %v353 = vpop.f32.mrb[0].mxu0
      %v354 = vadd.f32 0.0, %v353
      %v355 = vpop.f32.mrb[0].mxu0
      %v356 = vpop.f32.mrb[0].mxu0
      %v357 = vadd.f32 0.0, %v356
      %v358 = vpop.f32.mrb[0].mxu0
      %359 = vmatprep.mubr.bf16.mxu0 0
      %360 = vmatmul.mubr.bf16.gmra.mrb[0].mxu0 %v303
      %v361 = vpop.f32.mrb[0].mxu0
      %v362 = vadd.f32 0.0, %v361
      %v363 = vpop.f32.mrb[0].mxu0
      %v364 = vpop.f32.mrb[0].mxu0
      %v365 = vadd.f32 0.0, %v364
      %v366 = vpop.f32.mrb[0].mxu0
      %367 = vmatprep.mubr.bf16.mxu0 0
      %368 = vmatmul.mubr.bf16.gmra.mrb[0].mxu0 %v306
      %v369 = vpop.f32.mrb[0].mxu0
      %v370 = vadd.f32 0.0, %v369
      %v371 = vpop.f32.mrb[0].mxu0
      %v372 = vpop.f32.mrb[0].mxu0
      %v373 = vadd.f32 0.0, %v372
      %v374 = vpop.f32.mrb[0].mxu0
      %375 = vmatprep.mubr.bf16.mxu0 0
      %376 = vmatmul.mubr.bf16.gmra.mrb[0].mxu0 %v309
      %v377 = vpop.f32.mrb[0].mxu0
      %v378 = vadd.f32 0.0, %v377
      %v379 = vpop.f32.mrb[0].mxu0
      %v380 = vpop.f32.mrb[0].mxu0
      %v381 = vadd.f32 0.0, %v380
      %v382 = vpop.f32.mrb[0].mxu0
      %383 = vdwg.mxu0
      %v394 = vunpack.c.l.b16 %v228
      %v395 = vunpack.c.l.b16 %v229
      %v396 = vunpack.c.l.b16 %v230
      %v397 = vunpack.c.l.b16 %v231
      %v398 = vunpack.c.l.b16 %v232
      %v399 = vunpack.c.l.b16 %v233
      %v400 = vunpack.c.l.b16 %v234
      %v401 = vunpack.c.l.b16 %v235
      %v402 = vunpack.c.l.b16 %v236
      %v403 = vunpack.c.l.b16 %v237
      %v404 = vpack.c.b16 %v395, %v394
      %v405 = vpack.c.b16 %v397, %v396
      %v406 = vpack.c.b16 %v399, %v398
      %v407 = vpack.c.b16 %v401, %v400
      %v408 = vpack.c.b16 %v403, %v402
      %v413 = vunpack.c.l.b16 %v238
      %v414 = vunpack.c.l.b16 %v239
      %v415 = vunpack.c.l.b16 %v240
      %v416 = vunpack.c.l.b16 %v241
      %v417 = vpack.c.b16 %v414, %v413
      %v418 = vpack.c.b16 %v416, %v415
      %v422 = vsel %vm295, %v404, 0
      %v425 = vsel %vm295, %v405, 0
      %v428 = vsel %vm295, %v406, 0
      %v431 = vsel %vm295, %v407, 0
      %v434 = vsel %vm295, %v408, 0
      %436 = vmatprep.subr.bf16.mxu0 0
      %437 = vmatpush1.bf16.msra.mxu0 %v417
      %438 = vmatprep.subr.bf16.mxu0 0
      %439 = vmatpush1.bf16.msra.mxu0 %v418
      %440 = vmatprep.subr.bf16.mxu0 0
      %441 = vmatpush1.bf16.msra.mxu0 0
      %442 = vmatprep.subr.bf16.mxu0 0
      %443 = vmatpush1.bf16.msra.mxu0 0
      %444 = vmatprep.subr.bf16.mxu0 0
      %445 = vmatpush1.bf16.msra.mxu0 0
      %446 = vmatprep.subr.bf16.mxu0 0
      %447 = vmatpush1.bf16.msra.mxu0 0
      %448 = vmatprep.subr.bf16.mxu0 0
      %449 = vmatpush1.bf16.msra.mxu0 0
      %450 = vmatprep.subr.bf16.mxu0 0
      %451 = vmatpush1.bf16.msra.mxu0 0
      %452 = vmatprep.subr.bf16.mxu0 0
      %453 = vmatpush1.bf16.msra.mxu0 0
      %454 = vmatprep.subr.bf16.mxu0 0
      %455 = vmatpush1.bf16.msra.mxu0 0
      %456 = vmatprep.subr.bf16.mxu0 0
      %457 = vmatpush1.bf16.msra.mxu0 0
      %458 = vmatprep.subr.bf16.mxu0 0
      %459 = vmatpush1.bf16.msra.mxu0 0
      %460 = vmatprep.subr.bf16.mxu0 0
      %461 = vmatpush1.bf16.msra.mxu0 0
      %462 = vmatprep.subr.bf16.mxu0 0
      %463 = vmatpush1.bf16.msra.mxu0 0
      %464 = vmatprep.subr.bf16.mxu0 0
      %465 = vmatpush1.bf16.msra.mxu0 0
      %466 = vmatprep.subr.bf16.mxu0 0
      %467 = vmatpush1.bf16.msra.mxu0 0
      %468 = vmatprep.mubr.bf16.mxu0 0
      %469 = vmatmul.mubr.bf16.gmra.mrb[0].mxu0 %v422
      %v470 = vpop.f32.mrb[0].mxu0
      %v471 = vadd.f32 %v346, %v470
      %v472 = vpop.f32.mrb[0].mxu0
      %v473 = vpop.f32.mrb[0].mxu0
      %v474 = vadd.f32 %v349, %v473
      %v475 = vpop.f32.mrb[0].mxu0
      %476 = vmatprep.mubr.bf16.mxu0 0
      %477 = vmatmul.mubr.bf16.gmra.mrb[0].mxu0 %v425
      %v478 = vpop.f32.mrb[0].mxu0
      %v479 = vadd.f32 %v354, %v478
      %v480 = vpop.f32.mrb[0].mxu0
      %v481 = vpop.f32.mrb[0].mxu0
      %v482 = vadd.f32 %v357, %v481
      %v483 = vpop.f32.mrb[0].mxu0
      %484 = vmatprep.mubr.bf16.mxu0 0
      %485 = vmatmul.mubr.bf16.gmra.mrb[0].mxu0 %v428
      %v486 = vpop.f32.mrb[0].mxu0
      %v487 = vadd.f32 %v362, %v486
      %v488 = vpop.f32.mrb[0].mxu0
      %v489 = vpop.f32.mrb[0].mxu0
      %v490 = vadd.f32 %v365, %v489
      %v491 = vpop.f32.mrb[0].mxu0
      %492 = vmatprep.mubr.bf16.mxu0 0
      %493 = vmatmul.mubr.bf16.gmra.mrb[0].mxu0 %v431
      %v494 = vpop.f32.mrb[0].mxu0
      %v495 = vadd.f32 %v370, %v494
      %v496 = vpop.f32.mrb[0].mxu0
      %v497 = vpop.f32.mrb[0].mxu0
      %v498 = vadd.f32 %v373, %v497
      %v499 = vpop.f32.mrb[0].mxu0
      %500 = vmatprep.mubr.bf16.mxu0 0
      %501 = vmatmul.mubr.bf16.gmra.mrb[0].mxu0 %v434
      %v502 = vpop.f32.mrb[0].mxu0
      %v503 = vadd.f32 %v378, %v502
      %v504 = vpop.f32.mrb[0].mxu0
      %v505 = vpop.f32.mrb[0].mxu0
      %v506 = vadd.f32 %v381, %v505
      %v507 = vpop.f32.mrb[0].mxu0
      %508 = vdwg.mxu0
      %v509 = vld [vmem:[%s210] sm:$0xf]
      %v510 = vld [vmem:[%s210 + $0x4] sm:$0xf]
      %v511 = vld [vmem:[%s210 + $0x8] sm:$0xf]
      %v512 = vld [vmem:[%s210 + $0xc] sm:$0xf]
      %v513 = vld [vmem:[%s210 + $0x10] sm:$0xf]
      %v514 = vld [vmem:[%s210 + $0x14] sm:$0xf]
      %v515 = vld [vmem:[%s210 + $0x18] sm:$0xf]
      %v516 = vld [vmem:[%s210 + $0x1c] sm:$0xf]
      %v517 = vld [vmem:[%s210 + $0x20] sm:$0xf]
      %v518 = vld [vmem:[%s210 + $0x24] sm:$0xf]
      %v519 = vld [vmem:[%s210 + $0x28] sm:$0x1]
      %s520 = scalar_lea.vmem %s215, 32
      %v521 = vld [vmem:[%s520] sm:$0xf]
      %v522 = vld [vmem:[%s520 + $0x4] sm:$0xf]
      %v523 = vld [vmem:[%s520 + $0x8] sm:$0xf]
      %v524 = vld [vmem:[%s520 + $0xc] sm:$0xf]
      %v536 = vunpack.c.l.b16 %v509
      %v537 = vunpack.c.l.b16 %v510
      %v538 = vunpack.c.l.b16 %v511
      %v539 = vunpack.c.l.b16 %v512
      %v540 = vunpack.c.l.b16 %v513
      %v541 = vunpack.c.l.b16 %v514
      %v542 = vunpack.c.l.b16 %v515
      %v543 = vunpack.c.l.b16 %v516
      %v544 = vunpack.c.l.b16 %v517
      %v545 = vunpack.c.l.b16 %v518
      %v546 = vunpack.c.l.b16 %v519
      %v547 = vpack.c.b16 %v537, %v536
      %v548 = vpack.c.b16 %v539, %v538
      %v549 = vpack.c.b16 %v541, %v540
      %v550 = vpack.c.b16 %v543, %v542
      %v551 = vpack.c.b16 %v545, %v544
      %v552 = vpack.c.b16 %v546, %v546
      %vm553 = vsmask.f32 7424
      %v555 = vshrl.u32 %v547, 16
      %v557 = vshll.u32 %v547, 16
      %v559 = vrot.slane %v557, 1
      %v560 = vor.u32 %v555, %v559
      %v562 = vshll.u32 %v548, 16
      %v564 = vrot.slane %v562, 1
      %v565 = vsel %vm553, %v560, %v564
      %v566 = vshrl.u32 %v548, 16
      %v568 = vor.u32 %v566, %v564
      %v570 = vshll.u32 %v549, 16
      %v572 = vrot.slane %v570, 1
      %v573 = vsel %vm553, %v568, %v572
      %v574 = vshrl.u32 %v549, 16
      %v576 = vor.u32 %v574, %v572
      %v578 = vshll.u32 %v550, 16
      %v580 = vrot.slane %v578, 1
      %v581 = vsel %vm553, %v576, %v580
      %v582 = vshrl.u32 %v550, 16
      %v584 = vor.u32 %v582, %v580
      %v586 = vshll.u32 %v551, 16
      %v588 = vrot.slane %v586, 1
      %v589 = vsel %vm553, %v584, %v588
      %v590 = vshrl.u32 %v551, 16
      %v592 = vor.u32 %v590, %v588
      %v594 = vshll.u32 %v552, 16
      %v596 = vrot.slane %v594, 1
      %v597 = vsel %vm553, %v592, %v596
      %v602 = vunpack.c.l.b16 %v521
      %v603 = vunpack.c.l.b16 %v522
      %v604 = vunpack.c.l.b16 %v523
      %v605 = vunpack.c.l.b16 %v524
      %v606 = vpack.c.b16 %v603, %v602
      %v607 = vpack.c.b16 %v605, %v604
      %v611 = vsel %vm295, %v565, 0
      %v614 = vsel %vm295, %v573, 0
      %v617 = vsel %vm295, %v581, 0
      %v620 = vsel %vm295, %v589, 0
      %v623 = vsel %vm295, %v597, 0
      %625 = vmatprep.subr.bf16.mxu0 0
      %626 = vmatpush1.bf16.msra.mxu0 %v606
      %627 = vmatprep.subr.bf16.mxu0 0
      %628 = vmatpush1.bf16.msra.mxu0 %v607
      %629 = vmatprep.subr.bf16.mxu0 0
      %630 = vmatpush1.bf16.msra.mxu0 0
      %631 = vmatprep.subr.bf16.mxu0 0
      %632 = vmatpush1.bf16.msra.mxu0 0
      %633 = vmatprep.subr.bf16.mxu0 0
      %634 = vmatpush1.bf16.msra.mxu0 0
      %635 = vmatprep.subr.bf16.mxu0 0
      %636 = vmatpush1.bf16.msra.mxu0 0
      %637 = vmatprep.subr.bf16.mxu0 0
      %638 = vmatpush1.bf16.msra.mxu0 0
      %639 = vmatprep.subr.bf16.mxu0 0
      %640 = vmatpush1.bf16.msra.mxu0 0
      %641 = vmatprep.subr.bf16.mxu0 0
      %642 = vmatpush1.bf16.msra.mxu0 0
      %643 = vmatprep.subr.bf16.mxu0 0
      %644 = vmatpush1.bf16.msra.mxu0 0
      %645 = vmatprep.subr.bf16.mxu0 0
      %646 = vmatpush1.bf16.msra.mxu0 0
      %647 = vmatprep.subr.bf16.mxu0 0
      %648 = vmatpush1.bf16.msra.mxu0 0
      %649 = vmatprep.subr.bf16.mxu0 0
      %650 = vmatpush1.bf16.msra.mxu0 0
      %651 = vmatprep.subr.bf16.mxu0 0
      %652 = vmatpush1.bf16.msra.mxu0 0
      %653 = vmatprep.subr.bf16.mxu0 0
      %654 = vmatpush1.bf16.msra.mxu0 0
      %655 = vmatprep.subr.bf16.mxu0 0
      %656 = vmatpush1.bf16.msra.mxu0 0
      %657 = vmatprep.mubr.bf16.mxu0 0
      %658 = vmatmul.mubr.bf16.gmra.mrb[0].mxu0 %v611
      %v659 = vpop.f32.mrb[0].mxu0
      %v660 = vadd.f32 0.0, %v659
      %v661 = vpop.f32.mrb[0].mxu0
      %v662 = vpop.f32.mrb[0].mxu0
      %v663 = vadd.f32 0.0, %v662
      %v664 = vpop.f32.mrb[0].mxu0
      %665 = vmatprep.mubr.bf16.mxu0 0
      %666 = vmatmul.mubr.bf16.gmra.mrb[0].mxu0 %v614
      %v667 = vpop.f32.mrb[0].mxu0
      %v668 = vadd.f32 0.0, %v667
      %v669 = vpop.f32.mrb[0].mxu0
      %v670 = vpop.f32.mrb[0].mxu0
      %v671 = vadd.f32 0.0, %v670
      %v672 = vpop.f32.mrb[0].mxu0
      %673 = vmatprep.mubr.bf16.mxu0 0
      %674 = vmatmul.mubr.bf16.gmra.mrb[0].mxu0 %v617
      %v675 = vpop.f32.mrb[0].mxu0
      %v676 = vadd.f32 0.0, %v675
      %v677 = vpop.f32.mrb[0].mxu0
      %v678 = vpop.f32.mrb[0].mxu0
      %v679 = vadd.f32 0.0, %v678
      %v680 = vpop.f32.mrb[0].mxu0
      %681 = vmatprep.mubr.bf16.mxu0 0
      %682 = vmatmul.mubr.bf16.gmra.mrb[0].mxu0 %v620
      %v683 = vpop.f32.mrb[0].mxu0
      %v684 = vadd.f32 0.0, %v683
      %v685 = vpop.f32.mrb[0].mxu0
      %v686 = vpop.f32.mrb[0].mxu0
      %v687 = vadd.f32 0.0, %v686
      %v688 = vpop.f32.mrb[0].mxu0
      %689 = vmatprep.mubr.bf16.mxu0 0
      %690 = vmatmul.mubr.bf16.gmra.mrb[0].mxu0 %v623
      %v691 = vpop.f32.mrb[0].mxu0
      %v692 = vadd.f32 0.0, %v691
      %v693 = vpop.f32.mrb[0].mxu0
      %v694 = vpop.f32.mrb[0].mxu0
      %v695 = vadd.f32 0.0, %v694
      %v696 = vpop.f32.mrb[0].mxu0
      %697 = vdwg.mxu0
      %v698 = vadd.f32 %v471, %v660
      %v699 = vadd.f32 %v474, %v663
      %v700 = vadd.f32 %v479, %v668
      %v701 = vadd.f32 %v482, %v671
      %v702 = vadd.f32 %v487, %v676
      %v703 = vadd.f32 %v490, %v679
      %v704 = vadd.f32 %v495, %v684
      %v705 = vadd.f32 %v498, %v687
      %v706 = vadd.f32 %v503, %v692
      %v707 = vadd.f32 %v506, %v695
      %s708 = scalar_lea.vmem %s210, 104
      %v709 = vld [vmem:[%s708] sm:$0xf]
      %v710 = vld [vmem:[%s708 + $0x4] sm:$0xf]
      %v711 = vld [vmem:[%s708 + $0x8] sm:$0xf]
      %v712 = vld [vmem:[%s708 + $0xc] sm:$0xf]
      %v713 = vld [vmem:[%s708 + $0x10] sm:$0xf]
      %v714 = vld [vmem:[%s708 + $0x14] sm:$0xf]
      %v715 = vld [vmem:[%s708 + $0x18] sm:$0xf]
      %v716 = vld [vmem:[%s708 + $0x1c] sm:$0xf]
      %v717 = vld [vmem:[%s708 + $0x20] sm:$0xf]
      %v718 = vld [vmem:[%s708 + $0x24] sm:$0xf]
      %s719 = scalar_lea.vmem %s215, 48
      %v720 = vld [vmem:[%s719] sm:$0xf]
      %v721 = vld [vmem:[%s719 + $0x4] sm:$0xf]
      %v722 = vld [vmem:[%s719 + $0x8] sm:$0xf]
      %v723 = vld [vmem:[%s719 + $0xc] sm:$0xf]
      %v734 = vunpack.c.l.b16 %v709
      %v735 = vunpack.c.l.b16 %v710
      %v736 = vunpack.c.l.b16 %v711
      %v737 = vunpack.c.l.b16 %v712
      %v738 = vunpack.c.l.b16 %v713
      %v739 = vunpack.c.l.b16 %v714
      %v740 = vunpack.c.l.b16 %v715
      %v741 = vunpack.c.l.b16 %v716
      %v742 = vunpack.c.l.b16 %v717
      %v743 = vunpack.c.l.b16 %v718
      %v744 = vpack.c.b16 %v735, %v734
      %v745 = vpack.c.b16 %v737, %v736
      %v746 = vpack.c.b16 %v739, %v738
      %v747 = vpack.c.b16 %v741, %v740
      %v748 = vpack.c.b16 %v743, %v742
      %v753 = vunpack.c.l.b16 %v720
      %v754 = vunpack.c.l.b16 %v721
      %v755 = vunpack.c.l.b16 %v722
      %v756 = vunpack.c.l.b16 %v723
      %v757 = vpack.c.b16 %v754, %v753
      %v758 = vpack.c.b16 %v756, %v755
      %v762 = vsel %vm295, %v744, 0
      %v765 = vsel %vm295, %v745, 0
      %v768 = vsel %vm295, %v746, 0
      %v771 = vsel %vm295, %v747, 0
      %v774 = vsel %vm295, %v748, 0
      %776 = vmatprep.subr.bf16.mxu0 0
      %777 = vmatpush1.bf16.msra.mxu0 %v757
      %778 = vmatprep.subr.bf16.mxu0 0
      %779 = vmatpush1.bf16.msra.mxu0 %v758
      %780 = vmatprep.subr.bf16.mxu0 0
      %781 = vmatpush1.bf16.msra.mxu0 0
      %782 = vmatprep.subr.bf16.mxu0 0
      %783 = vmatpush1.bf16.msra.mxu0 0
      %784 = vmatprep.subr.bf16.mxu0 0
      %785 = vmatpush1.bf16.msra.mxu0 0
      %786 = vmatprep.subr.bf16.mxu0 0
      %787 = vmatpush1.bf16.msra.mxu0 0
      %788 = vmatprep.subr.bf16.mxu0 0
      %789 = vmatpush1.bf16.msra.mxu0 0
      %790 = vmatprep.subr.bf16.mxu0 0
      %791 = vmatpush1.bf16.msra.mxu0 0
      %792 = vmatprep.subr.bf16.mxu0 0
      %793 = vmatpush1.bf16.msra.mxu0 0
      %794 = vmatprep.subr.bf16.mxu0 0
      %795 = vmatpush1.bf16.msra.mxu0 0
      %796 = vmatprep.subr.bf16.mxu0 0
      %797 = vmatpush1.bf16.msra.mxu0 0
      %798 = vmatprep.subr.bf16.mxu0 0
      %799 = vmatpush1.bf16.msra.mxu0 0
      %800 = vmatprep.subr.bf16.mxu0 0
      %801 = vmatpush1.bf16.msra.mxu0 0
      %802 = vmatprep.subr.bf16.mxu0 0
      %803 = vmatpush1.bf16.msra.mxu0 0
      %804 = vmatprep.subr.bf16.mxu0 0
      %805 = vmatpush1.bf16.msra.mxu0 0
      %806 = vmatprep.subr.bf16.mxu0 0
      %807 = vmatpush1.bf16.msra.mxu0 0
      %808 = vmatprep.mubr.bf16.mxu0 0
      %809 = vmatmul.mubr.bf16.gmra.mrb[0].mxu0 %v762
      %v810 = vpop.f32.mrb[0].mxu0
      %v811 = vadd.f32 0.0, %v810
      %v812 = vpop.f32.mrb[0].mxu0
      %v813 = vpop.f32.mrb[0].mxu0
      %v814 = vadd.f32 0.0, %v813
      %v815 = vpop.f32.mrb[0].mxu0
      %816 = vmatprep.mubr.bf16.mxu0 0
      %817 = vmatmul.mubr.bf16.gmra.mrb[0].mxu0 %v765
      %v818 = vpop.f32.mrb[0].mxu0
      %v819 = vadd.f32 0.0, %v818
      %v820 = vpop.f32.mrb[0].mxu0
      %v821 = vpop.f32.mrb[0].mxu0
      %v822 = vadd.f32 0.0, %v821
      %v823 = vpop.f32.mrb[0].mxu0
      %824 = vmatprep.mubr.bf16.mxu0 0
      %825 = vmatmul.mubr.bf16.gmra.mrb[0].mxu0 %v768
      %v826 = vpop.f32.mrb[0].mxu0
      %v827 = vadd.f32 0.0, %v826
      %v828 = vpop.f32.mrb[0].mxu0
      %v829 = vpop.f32.mrb[0].mxu0
      %v830 = vadd.f32 0.0, %v829
      %v831 = vpop.f32.mrb[0].mxu0
      %832 = vmatprep.mubr.bf16.mxu0 0
      %833 = vmatmul.mubr.bf16.gmra.mrb[0].mxu0 %v771
      %v834 = vpop.f32.mrb[0].mxu0
      %v835 = vadd.f32 0.0, %v834
      %v836 = vpop.f32.mrb[0].mxu0
      %v837 = vpop.f32.mrb[0].mxu0
      %v838 = vadd.f32 0.0, %v837
      %v839 = vpop.f32.mrb[0].mxu0
      %840 = vmatprep.mubr.bf16.mxu0 0
      %841 = vmatmul.mubr.bf16.gmra.mrb[0].mxu0 %v774
      %v842 = vpop.f32.mrb[0].mxu0
      %v843 = vadd.f32 0.0, %v842
      %v844 = vpop.f32.mrb[0].mxu0
      %v845 = vpop.f32.mrb[0].mxu0
      %v846 = vadd.f32 0.0, %v845
      %v847 = vpop.f32.mrb[0].mxu0
      %848 = vdwg.mxu0
      %v849 = vadd.f32 %v698, %v811
      %v850 = vadd.f32 %v699, %v814
      %v851 = vadd.f32 %v700, %v819
      %v852 = vadd.f32 %v701, %v822
      %v853 = vadd.f32 %v702, %v827
      %v854 = vadd.f32 %v703, %v830
      %v855 = vadd.f32 %v704, %v835
      %v856 = vadd.f32 %v705, %v838
      %v857 = vadd.f32 %v706, %v843
      %v858 = vadd.f32 %v707, %v846
      %s859 = scalar_lea.vmem %s210, 156
      %v860 = vld [vmem:[%s859] sm:$0xf]
      %v861 = vld [vmem:[%s859 + $0x4] sm:$0xf]
      %v862 = vld [vmem:[%s859 + $0x8] sm:$0xf]
      %v863 = vld [vmem:[%s859 + $0xc] sm:$0xf]
      %v864 = vld [vmem:[%s859 + $0x10] sm:$0xf]
      %v865 = vld [vmem:[%s859 + $0x14] sm:$0xf]
      %v866 = vld [vmem:[%s859 + $0x18] sm:$0xf]
      %v867 = vld [vmem:[%s859 + $0x1c] sm:$0xf]
      %v868 = vld [vmem:[%s859 + $0x20] sm:$0xf]
      %v869 = vld [vmem:[%s859 + $0x24] sm:$0xf]
      %s870 = scalar_lea.vmem %s215, 64
      %v871 = vld [vmem:[%s870] sm:$0xf]
      %v872 = vld [vmem:[%s870 + $0x4] sm:$0xf]
      %v873 = vld [vmem:[%s870 + $0x8] sm:$0xf]
      %v874 = vld [vmem:[%s870 + $0xc] sm:$0xf]
      %v885 = vunpack.c.l.b16 %v860
      %v886 = vunpack.c.l.b16 %v861
      %v887 = vunpack.c.l.b16 %v862
      %v888 = vunpack.c.l.b16 %v863
      %v889 = vunpack.c.l.b16 %v864
      %v890 = vunpack.c.l.b16 %v865
      %v891 = vunpack.c.l.b16 %v866
      %v892 = vunpack.c.l.b16 %v867
      %v893 = vunpack.c.l.b16 %v868
      %v894 = vunpack.c.l.b16 %v869
      %v895 = vpack.c.b16 %v886, %v885
      %v896 = vpack.c.b16 %v888, %v887
      %v897 = vpack.c.b16 %v890, %v889
      %v898 = vpack.c.b16 %v892, %v891
      %v899 = vpack.c.b16 %v894, %v893
      %v904 = vunpack.c.l.b16 %v871
      %v905 = vunpack.c.l.b16 %v872
      %v906 = vunpack.c.l.b16 %v873
      %v907 = vunpack.c.l.b16 %v874
      %v908 = vpack.c.b16 %v905, %v904
      %v909 = vpack.c.b16 %v907, %v906
      %v913 = vsel %vm295, %v895, 0
      %v916 = vsel %vm295, %v896, 0
      %v919 = vsel %vm295, %v897, 0
      %v922 = vsel %vm295, %v898, 0
      %v925 = vsel %vm295, %v899, 0
      %927 = vmatprep.subr.bf16.mxu0 0
      %928 = vmatpush1.bf16.msra.mxu0 %v908
      %929 = vmatprep.subr.bf16.mxu0 0
      %930 = vmatpush1.bf16.msra.mxu0 %v909
      %931 = vmatprep.subr.bf16.mxu0 0
      %932 = vmatpush1.bf16.msra.mxu0 0
      %933 = vmatprep.subr.bf16.mxu0 0
      %934 = vmatpush1.bf16.msra.mxu0 0
      %935 = vmatprep.subr.bf16.mxu0 0
      %936 = vmatpush1.bf16.msra.mxu0 0
      %937 = vmatprep.subr.bf16.mxu0 0
      %938 = vmatpush1.bf16.msra.mxu0 0
      %939 = vmatprep.subr.bf16.mxu0 0
      %940 = vmatpush1.bf16.msra.mxu0 0
      %941 = vmatprep.subr.bf16.mxu0 0
      %942 = vmatpush1.bf16.msra.mxu0 0
      %943 = vmatprep.subr.bf16.mxu0 0
      %944 = vmatpush1.bf16.msra.mxu0 0
      %945 = vmatprep.subr.bf16.mxu0 0
      %946 = vmatpush1.bf16.msra.mxu0 0
      %947 = vmatprep.subr.bf16.mxu0 0
      %948 = vmatpush1.bf16.msra.mxu0 0
      %949 = vmatprep.subr.bf16.mxu0 0
      %950 = vmatpush1.bf16.msra.mxu0 0
      %951 = vmatprep.subr.bf16.mxu0 0
      %952 = vmatpush1.bf16.msra.mxu0 0
      %953 = vmatprep.subr.bf16.mxu0 0
      %954 = vmatpush1.bf16.msra.mxu0 0
      %955 = vmatprep.subr.bf16.mxu0 0
      %956 = vmatpush1.bf16.msra.mxu0 0
      %957 = vmatprep.subr.bf16.mxu0 0
      %958 = vmatpush1.bf16.msra.mxu0 0
      %959 = vmatprep.mubr.bf16.mxu0 0
      %960 = vmatmul.mubr.bf16.gmra.mrb[0].mxu0 %v913
      %v961 = vpop.f32.mrb[0].mxu0
      %v962 = vadd.f32 0.0, %v961
      %v963 = vpop.f32.mrb[0].mxu0
      %v964 = vpop.f32.mrb[0].mxu0
      %v965 = vadd.f32 0.0, %v964
      %v966 = vpop.f32.mrb[0].mxu0
      %967 = vmatprep.mubr.bf16.mxu0 0
      %968 = vmatmul.mubr.bf16.gmra.mrb[0].mxu0 %v916
      %v969 = vpop.f32.mrb[0].mxu0
      %v970 = vadd.f32 0.0, %v969
      %v971 = vpop.f32.mrb[0].mxu0
      %v972 = vpop.f32.mrb[0].mxu0
      %v973 = vadd.f32 0.0, %v972
      %v974 = vpop.f32.mrb[0].mxu0
      %975 = vmatprep.mubr.bf16.mxu0 0
      %976 = vmatmul.mubr.bf16.gmra.mrb[0].mxu0 %v919
      %v977 = vpop.f32.mrb[0].mxu0
      %v978 = vadd.f32 0.0, %v977
      %v979 = vpop.f32.mrb[0].mxu0
      %v980 = vpop.f32.mrb[0].mxu0
      %v981 = vadd.f32 0.0, %v980
      %v982 = vpop.f32.mrb[0].mxu0
      %983 = vmatprep.mubr.bf16.mxu0 0
      %984 = vmatmul.mubr.bf16.gmra.mrb[0].mxu0 %v922
      %v985 = vpop.f32.mrb[0].mxu0
      %v986 = vadd.f32 0.0, %v985
      %v987 = vpop.f32.mrb[0].mxu0
      %v988 = vpop.f32.mrb[0].mxu0
      %v989 = vadd.f32 0.0, %v988
      %v990 = vpop.f32.mrb[0].mxu0
      %991 = vmatprep.mubr.bf16.mxu0 0
      %992 = vmatmul.mubr.bf16.gmra.mrb[0].mxu0 %v925
      %v993 = vpop.f32.mrb[0].mxu0
      %v994 = vadd.f32 0.0, %v993
      %v995 = vpop.f32.mrb[0].mxu0
      %v996 = vpop.f32.mrb[0].mxu0
      %v997 = vadd.f32 0.0, %v996
      %v998 = vpop.f32.mrb[0].mxu0
      %999 = vdwg.mxu0
      %v1000 = vadd.f32 %v849, %v962
      %v1001 = vadd.f32 %v850, %v965
      %v1002 = vadd.f32 %v851, %v970
      %v1003 = vadd.f32 %v852, %v973
      %v1004 = vadd.f32 %v853, %v978
      %v1005 = vadd.f32 %v854, %v981
      %v1006 = vadd.f32 %v855, %v986
      %v1007 = vadd.f32 %v856, %v989
      %v1008 = vadd.f32 %v857, %v994
      %v1009 = vadd.f32 %v858, %v997
      %v1010 = vld [vmem:[%s708] sm:$0xf]
      %v1011 = vld [vmem:[%s708 + $0x4] sm:$0xf]
      %v1012 = vld [vmem:[%s708 + $0x8] sm:$0xf]
      %v1013 = vld [vmem:[%s708 + $0xc] sm:$0xf]
      %v1014 = vld [vmem:[%s708 + $0x10] sm:$0xf]
      %v1015 = vld [vmem:[%s708 + $0x14] sm:$0xf]
      %v1016 = vld [vmem:[%s708 + $0x18] sm:$0xf]
      %v1017 = vld [vmem:[%s708 + $0x1c] sm:$0xf]
      %v1018 = vld [vmem:[%s708 + $0x20] sm:$0xf]
      %v1019 = vld [vmem:[%s708 + $0x24] sm:$0xf]
      %v1020 = vld [vmem:[%s708 + $0x28] sm:$0x1]
      %s1021 = scalar_lea.vmem %s215, 80
      %v1022 = vld [vmem:[%s1021] sm:$0xf]
      %v1023 = vld [vmem:[%s1021 + $0x4] sm:$0xf]
      %v1024 = vld [vmem:[%s1021 + $0x8] sm:$0xf]
      %v1025 = vld [vmem:[%s1021 + $0xc] sm:$0xf]
      %v1037 = vunpack.c.l.b16 %v1010
      %v1038 = vunpack.c.l.b16 %v1011
      %v1039 = vunpack.c.l.b16 %v1012
      %v1040 = vunpack.c.l.b16 %v1013
      %v1041 = vunpack.c.l.b16 %v1014
      %v1042 = vunpack.c.l.b16 %v1015
      %v1043 = vunpack.c.l.b16 %v1016
      %v1044 = vunpack.c.l.b16 %v1017
      %v1045 = vunpack.c.l.b16 %v1018
      %v1046 = vunpack.c.l.b16 %v1019
      %v1047 = vunpack.c.l.b16 %v1020
      %v1048 = vpack.c.b16 %v1038, %v1037
      %v1049 = vpack.c.b16 %v1040, %v1039
      %v1050 = vpack.c.b16 %v1042, %v1041
      %v1051 = vpack.c.b16 %v1044, %v1043
      %v1052 = vpack.c.b16 %v1046, %v1045
      %v1053 = vpack.c.b16 %v1047, %v1047
      %v1055 = vshrl.u32 %v1048, 16
      %v1057 = vshll.u32 %v1048, 16
      %v1059 = vrot.slane %v1057, 1
      %v1060 = vor.u32 %v1055, %v1059
      %v1062 = vshll.u32 %v1049, 16
      %v1064 = vrot.slane %v1062, 1
      %v1065 = vsel %vm553, %v1060, %v1064
      %v1066 = vshrl.u32 %v1049, 16
      %v1068 = vor.u32 %v1066, %v1064
      %v1070 = vshll.u32 %v1050, 16
      %v1072 = vrot.slane %v1070, 1
      %v1073 = vsel %vm553, %v1068, %v1072
      %v1074 = vshrl.u32 %v1050, 16
      %v1076 = vor.u32 %v1074, %v1072
      %v1078 = vshll.u32 %v1051, 16
      %v1080 = vrot.slane %v1078, 1
      %v1081 = vsel %vm553, %v1076, %v1080
      %v1082 = vshrl.u32 %v1051, 16
      %v1084 = vor.u32 %v1082, %v1080
      %v1086 = vshll.u32 %v1052, 16
      %v1088 = vrot.slane %v1086, 1
      %v1089 = vsel %vm553, %v1084, %v1088
      %v1090 = vshrl.u32 %v1052, 16
      %v1092 = vor.u32 %v1090, %v1088
      %v1094 = vshll.u32 %v1053, 16
      %v1096 = vrot.slane %v1094, 1
      %v1097 = vsel %vm553, %v1092, %v1096
      %v1102 = vunpack.c.l.b16 %v1022
      %v1103 = vunpack.c.l.b16 %v1023
      %v1104 = vunpack.c.l.b16 %v1024
      %v1105 = vunpack.c.l.b16 %v1025
      %v1106 = vpack.c.b16 %v1103, %v1102
      %v1107 = vpack.c.b16 %v1105, %v1104
      %v1111 = vsel %vm295, %v1065, 0
      %v1114 = vsel %vm295, %v1073, 0
      %v1117 = vsel %vm295, %v1081, 0
      %v1120 = vsel %vm295, %v1089, 0
      %v1123 = vsel %vm295, %v1097, 0
      %1125 = vmatprep.subr.bf16.mxu0 0
      %1126 = vmatpush1.bf16.msra.mxu0 %v1106
      %1127 = vmatprep.subr.bf16.mxu0 0
      %1128 = vmatpush1.bf16.msra.mxu0 %v1107
      %1129 = vmatprep.subr.bf16.mxu0 0
      %1130 = vmatpush1.bf16.msra.mxu0 0
      %1131 = vmatprep.subr.bf16.mxu0 0
      %1132 = vmatpush1.bf16.msra.mxu0 0
      %1133 = vmatprep.subr.bf16.mxu0 0
      %1134 = vmatpush1.bf16.msra.mxu0 0
      %1135 = vmatprep.subr.bf16.mxu0 0
      %1136 = vmatpush1.bf16.msra.mxu0 0
      %1137 = vmatprep.subr.bf16.mxu0 0
      %1138 = vmatpush1.bf16.msra.mxu0 0
      %1139 = vmatprep.subr.bf16.mxu0 0
      %1140 = vmatpush1.bf16.msra.mxu0 0
      %1141 = vmatprep.subr.bf16.mxu0 0
      %1142 = vmatpush1.bf16.msra.mxu0 0
      %1143 = vmatprep.subr.bf16.mxu0 0
      %1144 = vmatpush1.bf16.msra.mxu0 0
      %1145 = vmatprep.subr.bf16.mxu0 0
      %1146 = vmatpush1.bf16.msra.mxu0 0
      %1147 = vmatprep.subr.bf16.mxu0 0
      %1148 = vmatpush1.bf16.msra.mxu0 0
      %1149 = vmatprep.subr.bf16.mxu0 0
      %1150 = vmatpush1.bf16.msra.mxu0 0
      %1151 = vmatprep.subr.bf16.mxu0 0
      %1152 = vmatpush1.bf16.msra.mxu0 0
      %1153 = vmatprep.subr.bf16.mxu0 0
      %1154 = vmatpush1.bf16.msra.mxu0 0
      %1155 = vmatprep.subr.bf16.mxu0 0
      %1156 = vmatpush1.bf16.msra.mxu0 0
      %1157 = vmatprep.mubr.bf16.mxu0 0
      %1158 = vmatmul.mubr.bf16.gmra.mrb[0].mxu0 %v1111
      %v1159 = vpop.f32.mrb[0].mxu0
      %v1160 = vadd.f32 0.0, %v1159
      %v1161 = vpop.f32.mrb[0].mxu0
      %v1162 = vpop.f32.mrb[0].mxu0
      %v1163 = vadd.f32 0.0, %v1162
      %v1164 = vpop.f32.mrb[0].mxu0
      %1165 = vmatprep.mubr.bf16.mxu0 0
      %1166 = vmatmul.mubr.bf16.gmra.mrb[0].mxu0 %v1114
      %v1167 = vpop.f32.mrb[0].mxu0
      %v1168 = vadd.f32 0.0, %v1167
      %v1169 = vpop.f32.mrb[0].mxu0
      %v1170 = vpop.f32.mrb[0].mxu0
      %v1171 = vadd.f32 0.0, %v1170
      %v1172 = vpop.f32.mrb[0].mxu0
      %1173 = vmatprep.mubr.bf16.mxu0 0
      %1174 = vmatmul.mubr.bf16.gmra.mrb[0].mxu0 %v1117
      %v1175 = vpop.f32.mrb[0].mxu0
      %v1176 = vadd.f32 0.0, %v1175
      %v1177 = vpop.f32.mrb[0].mxu0
      %v1178 = vpop.f32.mrb[0].mxu0
      %v1179 = vadd.f32 0.0, %v1178
      %v1180 = vpop.f32.mrb[0].mxu0
      %1181 = vmatprep.mubr.bf16.mxu0 0
      %1182 = vmatmul.mubr.bf16.gmra.mrb[0].mxu0 %v1120
      %v1183 = vpop.f32.mrb[0].mxu0
      %v1184 = vadd.f32 0.0, %v1183
      %v1185 = vpop.f32.mrb[0].mxu0
      %v1186 = vpop.f32.mrb[0].mxu0
      %v1187 = vadd.f32 0.0, %v1186
      %v1188 = vpop.f32.mrb[0].mxu0
      %1189 = vmatprep.mubr.bf16.mxu0 0
      %1190 = vmatmul.mubr.bf16.gmra.mrb[0].mxu0 %v1123
      %v1191 = vpop.f32.mrb[0].mxu0
      %v1192 = vadd.f32 0.0, %v1191
      %v1193 = vpop.f32.mrb[0].mxu0
      %v1194 = vpop.f32.mrb[0].mxu0
      %v1195 = vadd.f32 0.0, %v1194
      %v1196 = vpop.f32.mrb[0].mxu0
      %1197 = vdwg.mxu0
      %v1198 = vadd.f32 %v1000, %v1160
      %v1199 = vadd.f32 %v1001, %v1163
      %v1200 = vadd.f32 %v1002, %v1168
      %v1201 = vadd.f32 %v1003, %v1171
      %v1202 = vadd.f32 %v1004, %v1176
      %v1203 = vadd.f32 %v1005, %v1179
      %v1204 = vadd.f32 %v1006, %v1184
      %v1205 = vadd.f32 %v1007, %v1187
      %v1206 = vadd.f32 %v1008, %v1192
      %v1207 = vadd.f32 %v1009, %v1195
      %v1208 = vld [vmem:[%s210 + $0x4] sm:$0xe]
      %v1209 = vld [vmem:[%s210 + $0x8] sm:$0xf]
      %v1210 = vld [vmem:[%s210 + $0xc] sm:$0xf]
      %v1211 = vld [vmem:[%s210 + $0x10] sm:$0xf]
      %v1212 = vld [vmem:[%s210 + $0x14] sm:$0xf]
      %v1213 = vld [vmem:[%s210 + $0x18] sm:$0xf]
      %v1214 = vld [vmem:[%s210 + $0x1c] sm:$0xf]
      %v1215 = vld [vmem:[%s210 + $0x20] sm:$0xf]
      %v1216 = vld [vmem:[%s210 + $0x24] sm:$0xf]
      %v1217 = vld [vmem:[%s210 + $0x28] sm:$0xf]
      %v1218 = vld [vmem:[%s210 + $0x2c] sm:$0x1]
      %s1219 = scalar_lea.vmem %s215, 96
      %v1220 = vld [vmem:[%s1219] sm:$0xf]
      %v1221 = vld [vmem:[%s1219 + $0x4] sm:$0xf]
      %v1222 = vld [vmem:[%s1219 + $0x8] sm:$0xf]
      %v1223 = vld [vmem:[%s1219 + $0xc] sm:$0xf]
      %v1235 = vunpack.c.l.b16 %v1208
      %v1236 = vunpack.c.l.b16 %v1209
      %v1237 = vunpack.c.l.b16 %v1210
      %v1238 = vunpack.c.l.b16 %v1211
      %v1239 = vunpack.c.l.b16 %v1212
      %v1240 = vunpack.c.l.b16 %v1213
      %v1241 = vunpack.c.l.b16 %v1214
      %v1242 = vunpack.c.l.b16 %v1215
      %v1243 = vunpack.c.l.b16 %v1216
      %v1244 = vunpack.c.l.b16 %v1217
      %v1245 = vunpack.c.l.b16 %v1218
      %v1246 = vpack.c.b16 %v1236, %v1235
      %v1247 = vpack.c.b16 %v1238, %v1237
      %v1248 = vpack.c.b16 %v1240, %v1239
      %v1249 = vpack.c.b16 %v1242, %v1241
      %v1250 = vpack.c.b16 %v1244, %v1243
      %v1251 = vpack.c.b16 %v1245, %v1245
      %vm1252 = vcmask 1046528
      %v1253 = vrot.slane %v1246, 1
      %v1254 = vrot.slane %v1247, 1
      %v1255 = vsel %vm1252, %v1253, %v1254
      %v1256 = vrot.slane %v1248, 1
      %v1257 = vsel %vm1252, %v1254, %v1256
      %v1258 = vrot.slane %v1249, 1
      %v1259 = vsel %vm1252, %v1256, %v1258
      %v1260 = vrot.slane %v1250, 1
      %v1261 = vsel %vm1252, %v1258, %v1260
      %v1262 = vrot.slane %v1251, 1
      %v1263 = vsel %vm1252, %v1260, %v1262
      %v1268 = vunpack.c.l.b16 %v1220
      %v1269 = vunpack.c.l.b16 %v1221
      %v1270 = vunpack.c.l.b16 %v1222
      %v1271 = vunpack.c.l.b16 %v1223
      %v1272 = vpack.c.b16 %v1269, %v1268
      %v1273 = vpack.c.b16 %v1271, %v1270
      %v1277 = vsel %vm295, %v1255, 0
      %v1280 = vsel %vm295, %v1257, 0
      %v1283 = vsel %vm295, %v1259, 0
      %v1286 = vsel %vm295, %v1261, 0
      %v1289 = vsel %vm295, %v1263, 0
      %1291 = vmatprep.subr.bf16.mxu0 0
      %1292 = vmatpush1.bf16.msra.mxu0 %v1272
      %1293 = vmatprep.subr.bf16.mxu0 0
      %1294 = vmatpush1.bf16.msra.mxu0 %v1273
      %1295 = vmatprep.subr.bf16.mxu0 0
      %1296 = vmatpush1.bf16.msra.mxu0 0
      %1297 = vmatprep.subr.bf16.mxu0 0
      %1298 = vmatpush1.bf16.msra.mxu0 0
      %1299 = vmatprep.subr.bf16.mxu0 0
      %1300 = vmatpush1.bf16.msra.mxu0 0
      %1301 = vmatprep.subr.bf16.mxu0 0
      %1302 = vmatpush1.bf16.msra.mxu0 0
      %1303 = vmatprep.subr.bf16.mxu0 0
      %1304 = vmatpush1.bf16.msra.mxu0 0
      %1305 = vmatprep.subr.bf16.mxu0 0
      %1306 = vmatpush1.bf16.msra.mxu0 0
      %1307 = vmatprep.subr.bf16.mxu0 0
      %1308 = vmatpush1.bf16.msra.mxu0 0
      %1309 = vmatprep.subr.bf16.mxu0 0
      %1310 = vmatpush1.bf16.msra.mxu0 0
      %1311 = vmatprep.subr.bf16.mxu0 0
      %1312 = vmatpush1.bf16.msra.mxu0 0
      %1313 = vmatprep.subr.bf16.mxu0 0
      %1314 = vmatpush1.bf16.msra.mxu0 0
      %1315 = vmatprep.subr.bf16.mxu0 0
      %1316 = vmatpush1.bf16.msra.mxu0 0
      %1317 = vmatprep.subr.bf16.mxu0 0
      %1318 = vmatpush1.bf16.msra.mxu0 0
      %1319 = vmatprep.subr.bf16.mxu0 0
      %1320 = vmatpush1.bf16.msra.mxu0 0
      %1321 = vmatprep.subr.bf16.mxu0 0
      %1322 = vmatpush1.bf16.msra.mxu0 0
      %1323 = vmatprep.mubr.bf16.mxu0 0
      %1324 = vmatmul.mubr.bf16.gmra.mrb[0].mxu0 %v1277
      %v1325 = vpop.f32.mrb[0].mxu0
      %v1326 = vadd.f32 0.0, %v1325
      %v1327 = vpop.f32.mrb[0].mxu0
      %v1328 = vpop.f32.mrb[0].mxu0
      %v1329 = vadd.f32 0.0, %v1328
      %v1330 = vpop.f32.mrb[0].mxu0
      %1331 = vmatprep.mubr.bf16.mxu0 0
      %1332 = vmatmul.mubr.bf16.gmra.mrb[0].mxu0 %v1280
      %v1333 = vpop.f32.mrb[0].mxu0
      %v1334 = vadd.f32 0.0, %v1333
      %v1335 = vpop.f32.mrb[0].mxu0
      %v1336 = vpop.f32.mrb[0].mxu0
      %v1337 = vadd.f32 0.0, %v1336
      %v1338 = vpop.f32.mrb[0].mxu0
      %1339 = vmatprep.mubr.bf16.mxu0 0
      %1340 = vmatmul.mubr.bf16.gmra.mrb[0].mxu0 %v1283
      %v1341 = vpop.f32.mrb[0].mxu0
      %v1342 = vadd.f32 0.0, %v1341
      %v1343 = vpop.f32.mrb[0].mxu0
      %v1344 = vpop.f32.mrb[0].mxu0
      %v1345 = vadd.f32 0.0, %v1344
      %v1346 = vpop.f32.mrb[0].mxu0
      %1347 = vmatprep.mubr.bf16.mxu0 0
      %1348 = vmatmul.mubr.bf16.gmra.mrb[0].mxu0 %v1286
      %v1349 = vpop.f32.mrb[0].mxu0
      %v1350 = vadd.f32 0.0, %v1349
      %v1351 = vpop.f32.mrb[0].mxu0
      %v1352 = vpop.f32.mrb[0].mxu0
      %v1353 = vadd.f32 0.0, %v1352
      %v1354 = vpop.f32.mrb[0].mxu0
      %1355 = vmatprep.mubr.bf16.mxu0 0
      %1356 = vmatmul.mubr.bf16.gmra.mrb[0].mxu0 %v1289
      %v1357 = vpop.f32.mrb[0].mxu0
      %v1358 = vadd.f32 0.0, %v1357
      %v1359 = vpop.f32.mrb[0].mxu0
      %v1360 = vpop.f32.mrb[0].mxu0
      %v1361 = vadd.f32 0.0, %v1360
      %v1362 = vpop.f32.mrb[0].mxu0
      %1363 = vdwg.mxu0
      %v1364 = vadd.f32 %v1198, %v1326
      %v1365 = vadd.f32 %v1199, %v1329
      %v1366 = vadd.f32 %v1200, %v1334
      %v1367 = vadd.f32 %v1201, %v1337
      %v1368 = vadd.f32 %v1202, %v1342
      %v1369 = vadd.f32 %v1203, %v1345
      %v1370 = vadd.f32 %v1204, %v1350
      %v1371 = vadd.f32 %v1205, %v1353
      %v1372 = vadd.f32 %v1206, %v1358
      %v1373 = vadd.f32 %v1207, %v1361
      %v1374 = vld [vmem:[%s242 + $0x4] sm:$0xe]
      %v1375 = vld [vmem:[%s242 + $0x8] sm:$0xf]
      %v1376 = vld [vmem:[%s242 + $0xc] sm:$0xf]
      %v1377 = vld [vmem:[%s242 + $0x10] sm:$0xf]
      %v1378 = vld [vmem:[%s242 + $0x14] sm:$0xf]
      %v1379 = vld [vmem:[%s242 + $0x18] sm:$0xf]
      %v1380 = vld [vmem:[%s242 + $0x1c] sm:$0xf]
      %v1381 = vld [vmem:[%s242 + $0x20] sm:$0xf]
      %v1382 = vld [vmem:[%s242 + $0x24] sm:$0xf]
      %v1383 = vld [vmem:[%s242 + $0x28] sm:$0xf]
      %v1384 = vld [vmem:[%s242 + $0x2c] sm:$0x1]
      %s1385 = scalar_lea.vmem %s215, 112
      %v1386 = vld [vmem:[%s1385] sm:$0xf]
      %v1387 = vld [vmem:[%s1385 + $0x4] sm:$0xf]
      %v1388 = vld [vmem:[%s1385 + $0x8] sm:$0xf]
      %v1389 = vld [vmem:[%s1385 + $0xc] sm:$0xf]
      %v1401 = vunpack.c.l.b16 %v1374
      %v1402 = vunpack.c.l.b16 %v1375
      %v1403 = vunpack.c.l.b16 %v1376
      %v1404 = vunpack.c.l.b16 %v1377
      %v1405 = vunpack.c.l.b16 %v1378
      %v1406 = vunpack.c.l.b16 %v1379
      %v1407 = vunpack.c.l.b16 %v1380
      %v1408 = vunpack.c.l.b16 %v1381
      %v1409 = vunpack.c.l.b16 %v1382
      %v1410 = vunpack.c.l.b16 %v1383
      %v1411 = vunpack.c.l.b16 %v1384
      %v1412 = vpack.c.b16 %v1402, %v1401
      %v1413 = vpack.c.b16 %v1404, %v1403
      %v1414 = vpack.c.b16 %v1406, %v1405
      %v1415 = vpack.c.b16 %v1408, %v1407
      %v1416 = vpack.c.b16 %v1410, %v1409
      %v1417 = vpack.c.b16 %v1411, %v1411
      %v1418 = vrot.slane %v1412, 1
      %v1419 = vrot.slane %v1413, 1
      %v1420 = vsel %vm1252, %v1418, %v1419
      %v1421 = vrot.slane %v1414, 1
      %v1422 = vsel %vm1252, %v1419, %v1421
      %v1423 = vrot.slane %v1415, 1
      %v1424 = vsel %vm1252, %v1421, %v1423
      %v1425 = vrot.slane %v1416, 1
      %v1426 = vsel %vm1252, %v1423, %v1425
      %v1427 = vrot.slane %v1417, 1
      %v1428 = vsel %vm1252, %v1425, %v1427
      %v1433 = vunpack.c.l.b16 %v1386
      %v1434 = vunpack.c.l.b16 %v1387
      %v1435 = vunpack.c.l.b16 %v1388
      %v1436 = vunpack.c.l.b16 %v1389
      %v1437 = vpack.c.b16 %v1434, %v1433
      %v1438 = vpack.c.b16 %v1436, %v1435
      %v1442 = vsel %vm295, %v1420, 0
      %v1445 = vsel %vm295, %v1422, 0
      %v1448 = vsel %vm295, %v1424, 0
      %v1451 = vsel %vm295, %v1426, 0
      %v1454 = vsel %vm295, %v1428, 0
      %1456 = vmatprep.subr.bf16.mxu0 0
      %1457 = vmatpush1.bf16.msra.mxu0 %v1437
      %1458 = vmatprep.subr.bf16.mxu0 0
      %1459 = vmatpush1.bf16.msra.mxu0 %v1438
      %1460 = vmatprep.subr.bf16.mxu0 0
      %1461 = vmatpush1.bf16.msra.mxu0 0
      %1462 = vmatprep.subr.bf16.mxu0 0
      %1463 = vmatpush1.bf16.msra.mxu0 0
      %1464 = vmatprep.subr.bf16.mxu0 0
      %1465 = vmatpush1.bf16.msra.mxu0 0
      %1466 = vmatprep.subr.bf16.mxu0 0
      %1467 = vmatpush1.bf16.msra.mxu0 0
      %1468 = vmatprep.subr.bf16.mxu0 0
      %1469 = vmatpush1.bf16.msra.mxu0 0
      %1470 = vmatprep.subr.bf16.mxu0 0
      %1471 = vmatpush1.bf16.msra.mxu0 0
      %1472 = vmatprep.subr.bf16.mxu0 0
      %1473 = vmatpush1.bf16.msra.mxu0 0
      %1474 = vmatprep.subr.bf16.mxu0 0
      %1475 = vmatpush1.bf16.msra.mxu0 0
      %1476 = vmatprep.subr.bf16.mxu0 0
      %1477 = vmatpush1.bf16.msra.mxu0 0
      %1478 = vmatprep.subr.bf16.mxu0 0
      %1479 = vmatpush1.bf16.msra.mxu0 0
      %1480 = vmatprep.subr.bf16.mxu0 0
      %1481 = vmatpush1.bf16.msra.mxu0 0
      %1482 = vmatprep.subr.bf16.mxu0 0
      %1483 = vmatpush1.bf16.msra.mxu0 0
      %1484 = vmatprep.subr.bf16.mxu0 0
      %1485 = vmatpush1.bf16.msra.mxu0 0
      %1486 = vmatprep.subr.bf16.mxu0 0
      %1487 = vmatpush1.bf16.msra.mxu0 0
      %1488 = vmatprep.mubr.bf16.mxu0 0
      %1489 = vmatmul.mubr.bf16.gmra.mrb[0].mxu0 %v1442
      %v1490 = vpop.f32.mrb[0].mxu0
      %v1491 = vadd.f32 0.0, %v1490
      %v1492 = vpop.f32.mrb[0].mxu0
      %v1493 = vpop.f32.mrb[0].mxu0
      %v1494 = vadd.f32 0.0, %v1493
      %v1495 = vpop.f32.mrb[0].mxu0
      %1496 = vmatprep.mubr.bf16.mxu0 0
      %1497 = vmatmul.mubr.bf16.gmra.mrb[0].mxu0 %v1445
      %v1498 = vpop.f32.mrb[0].mxu0
      %v1499 = vadd.f32 0.0, %v1498
      %v1500 = vpop.f32.mrb[0].mxu0
      %v1501 = vpop.f32.mrb[0].mxu0
      %v1502 = vadd.f32 0.0, %v1501
      %v1503 = vpop.f32.mrb[0].mxu0
      %1504 = vmatprep.mubr.bf16.mxu0 0
      %1505 = vmatmul.mubr.bf16.gmra.mrb[0].mxu0 %v1448
      %v1506 = vpop.f32.mrb[0].mxu0
      %v1507 = vadd.f32 0.0, %v1506
      %v1508 = vpop.f32.mrb[0].mxu0
      %v1509 = vpop.f32.mrb[0].mxu0
      %v1510 = vadd.f32 0.0, %v1509
      %v1511 = vpop.f32.mrb[0].mxu0
      %1512 = vmatprep.mubr.bf16.mxu0 0
      %1513 = vmatmul.mubr.bf16.gmra.mrb[0].mxu0 %v1451
      %v1514 = vpop.f32.mrb[0].mxu0
      %v1515 = vadd.f32 0.0, %v1514
      %v1516 = vpop.f32.mrb[0].mxu0
      %v1517 = vpop.f32.mrb[0].mxu0
      %v1518 = vadd.f32 0.0, %v1517
      %v1519 = vpop.f32.mrb[0].mxu0
      %1520 = vmatprep.mubr.bf16.mxu0 0
      %1521 = vmatmul.mubr.bf16.gmra.mrb[0].mxu0 %v1454
      %v1522 = vpop.f32.mrb[0].mxu0
      %v1523 = vadd.f32 0.0, %v1522
      %v1524 = vpop.f32.mrb[0].mxu0
      %v1525 = vpop.f32.mrb[0].mxu0
      %v1526 = vadd.f32 0.0, %v1525
      %v1527 = vpop.f32.mrb[0].mxu0
      %1528 = vdwg.mxu0
      %v1529 = vadd.f32 %v1364, %v1491
      %v1530 = vadd.f32 %v1365, %v1494
      %v1531 = vadd.f32 %v1366, %v1499
      %v1532 = vadd.f32 %v1367, %v1502
      %v1533 = vadd.f32 %v1368, %v1507
      %v1534 = vadd.f32 %v1369, %v1510
      %v1535 = vadd.f32 %v1370, %v1515
      %v1536 = vadd.f32 %v1371, %v1518
      %v1537 = vadd.f32 %v1372, %v1523
      %v1538 = vadd.f32 %v1373, %v1526
      %v1539 = vld [vmem:[%s210 + $0x2c] sm:$0x3]
      %s1540 = scalar_lea.vmem %s215, 128
      %v1541 = vld [vmem:[%s1540] sm:$0xf]
      %v1542 = vld [vmem:[%s1540 + $0x4] sm:$0xf]
      %v1543 = vld [vmem:[%s1540 + $0x8] sm:$0xf]
      %v1544 = vld [vmem:[%s1540 + $0xc] sm:$0xf]
      %v1546 = vunpack.c.l.b16 %v1539
      %v1547 = vpack.c.b16 %v1546, %v1546
      %vm1548 = vsmask.f32 6400
      %v1550 = vshrl.u32 %v1246, 16
      %v1552 = vrot.slane %v1550, 1
      %v1553 = vshll.u32 %v1246, 16
      %v1555 = vrot.slane %v1553, 2
      %v1556 = vor.u32 %v1552, %v1555
      %v1558 = vshrl.u32 %v1247, 16
      %v1560 = vrot.slane %v1558, 1
      %v1561 = vshll.u32 %v1247, 16
      %v1563 = vrot.slane %v1561, 2
      %v1564 = vor.u32 %v1560, %v1563
      %v1565 = vsel %vm1548, %v1556, %v1564
      %v1567 = vshrl.u32 %v1248, 16
      %v1569 = vrot.slane %v1567, 1
      %v1570 = vshll.u32 %v1248, 16
      %v1572 = vrot.slane %v1570, 2
      %v1573 = vor.u32 %v1569, %v1572
      %v1574 = vsel %vm1548, %v1564, %v1573
      %v1576 = vshrl.u32 %v1249, 16
      %v1578 = vrot.slane %v1576, 1
      %v1579 = vshll.u32 %v1249, 16
      %v1581 = vrot.slane %v1579, 2
      %v1582 = vor.u32 %v1578, %v1581
      %v1583 = vsel %vm1548, %v1573, %v1582
      %v1585 = vshrl.u32 %v1250, 16
      %v1587 = vrot.slane %v1585, 1
      %v1588 = vshll.u32 %v1250, 16
      %v1590 = vrot.slane %v1588, 2
      %v1591 = vor.u32 %v1587, %v1590
      %v1592 = vsel %vm1548, %v1582, %v1591
      %v1594 = vshrl.u32 %v1547, 16
      %v1596 = vrot.slane %v1594, 1
      %v1597 = vshll.u32 %v1547, 16
      %v1599 = vrot.slane %v1597, 2
      %v1600 = vor.u32 %v1596, %v1599
      %v1601 = vsel %vm1548, %v1591, %v1600
      %v1606 = vunpack.c.l.b16 %v1541
      %v1607 = vunpack.c.l.b16 %v1542
      %v1608 = vunpack.c.l.b16 %v1543
      %v1609 = vunpack.c.l.b16 %v1544
      %v1610 = vpack.c.b16 %v1607, %v1606
      %v1611 = vpack.c.b16 %v1609, %v1608
      %v1615 = vsel %vm295, %v1565, 0
      %v1618 = vsel %vm295, %v1574, 0
      %v1621 = vsel %vm295, %v1583, 0
      %v1624 = vsel %vm295, %v1592, 0
      %v1627 = vsel %vm295, %v1601, 0
      %1629 = vmatprep.subr.bf16.mxu0 0
      %1630 = vmatpush1.bf16.msra.mxu0 %v1610
      %1631 = vmatprep.subr.bf16.mxu0 0
      %1632 = vmatpush1.bf16.msra.mxu0 %v1611
      %1633 = vmatprep.subr.bf16.mxu0 0
      %1634 = vmatpush1.bf16.msra.mxu0 0
      %1635 = vmatprep.subr.bf16.mxu0 0
      %1636 = vmatpush1.bf16.msra.mxu0 0
      %1637 = vmatprep.subr.bf16.mxu0 0
      %1638 = vmatpush1.bf16.msra.mxu0 0
      %1639 = vmatprep.subr.bf16.mxu0 0
      %1640 = vmatpush1.bf16.msra.mxu0 0
      %1641 = vmatprep.subr.bf16.mxu0 0
      %1642 = vmatpush1.bf16.msra.mxu0 0
      %1643 = vmatprep.subr.bf16.mxu0 0
      %1644 = vmatpush1.bf16.msra.mxu0 0
      %1645 = vmatprep.subr.bf16.mxu0 0
      %1646 = vmatpush1.bf16.msra.mxu0 0
      %1647 = vmatprep.subr.bf16.mxu0 0
      %1648 = vmatpush1.bf16.msra.mxu0 0
      %1649 = vmatprep.subr.bf16.mxu0 0
      %1650 = vmatpush1.bf16.msra.mxu0 0
      %1651 = vmatprep.subr.bf16.mxu0 0
      %1652 = vmatpush1.bf16.msra.mxu0 0
      %1653 = vmatprep.subr.bf16.mxu0 0
      %1654 = vmatpush1.bf16.msra.mxu0 0
      %1655 = vmatprep.subr.bf16.mxu0 0
      %1656 = vmatpush1.bf16.msra.mxu0 0
      %1657 = vmatprep.subr.bf16.mxu0 0
      %1658 = vmatpush1.bf16.msra.mxu0 0
      %1659 = vmatprep.subr.bf16.mxu0 0
      %1660 = vmatpush1.bf16.msra.mxu0 0
      %1661 = vmatprep.mubr.bf16.mxu0 0
      %1662 = vmatmul.mubr.bf16.gmra.mrb[0].mxu0 %v1615
      %v1663 = vpop.f32.mrb[0].mxu0
      %v1664 = vadd.f32 0.0, %v1663
      %v1665 = vpop.f32.mrb[0].mxu0
      %v1666 = vpop.f32.mrb[0].mxu0
      %v1667 = vadd.f32 0.0, %v1666
      %v1668 = vpop.f32.mrb[0].mxu0
      %1669 = vmatprep.mubr.bf16.mxu0 0
      %1670 = vmatmul.mubr.bf16.gmra.mrb[0].mxu0 %v1618
      %v1671 = vpop.f32.mrb[0].mxu0
      %v1672 = vadd.f32 0.0, %v1671
      %v1673 = vpop.f32.mrb[0].mxu0
      %v1674 = vpop.f32.mrb[0].mxu0
      %v1675 = vadd.f32 0.0, %v1674
      %v1676 = vpop.f32.mrb[0].mxu0
      %1677 = vmatprep.mubr.bf16.mxu0 0
      %1678 = vmatmul.mubr.bf16.gmra.mrb[0].mxu0 %v1621
      %v1679 = vpop.f32.mrb[0].mxu0
      %v1680 = vadd.f32 0.0, %v1679
      %v1681 = vpop.f32.mrb[0].mxu0
      %v1682 = vpop.f32.mrb[0].mxu0
      %v1683 = vadd.f32 0.0, %v1682
      %v1684 = vpop.f32.mrb[0].mxu0
      %1685 = vmatprep.mubr.bf16.mxu0 0
      %1686 = vmatmul.mubr.bf16.gmra.mrb[0].mxu0 %v1624
      %v1687 = vpop.f32.mrb[0].mxu0
      %v1688 = vadd.f32 0.0, %v1687
      %v1689 = vpop.f32.mrb[0].mxu0
      %v1690 = vpop.f32.mrb[0].mxu0
      %v1691 = vadd.f32 0.0, %v1690
      %v1692 = vpop.f32.mrb[0].mxu0
      %1693 = vmatprep.mubr.bf16.mxu0 0
      %1694 = vmatmul.mubr.bf16.gmra.mrb[0].mxu0 %v1627
      %v1695 = vpop.f32.mrb[0].mxu0
      %v1696 = vadd.f32 0.0, %v1695
      %v1697 = vpop.f32.mrb[0].mxu0
      %v1698 = vpop.f32.mrb[0].mxu0
      %v1699 = vadd.f32 0.0, %v1698
      %v1700 = vpop.f32.mrb[0].mxu0
      %1701 = vdwg.mxu0
      %v1702 = vadd.f32 %v1529, %v1664
      %v1703 = vadd.f32 %v1530, %v1667
      %v1704 = vadd.f32 %v1531, %v1672
      %v1705 = vadd.f32 %v1532, %v1675
      %v1706 = vadd.f32 %v1533, %v1680
      %v1707 = vadd.f32 %v1534, %v1683
      %v1708 = vadd.f32 %v1535, %v1688
      %v1709 = vadd.f32 %v1536, %v1691
      %v1710 = vadd.f32 %v1537, %v1696
      %v1711 = vadd.f32 %v1538, %v1699
      %v1712 = vld [vmem:[%s218] sm:$0x1]
      %v1714 = vlaneseq
      %v1715 = vshrl.u32 %v1714, 7
      %v1716 = vsub.s32 0, %v1715
      %v1717 = vrot.slane %v1712, %v1716
      %v1719 = vadd.f32 %v1702, %v1717
      %v1720 = vadd.f32 %v1703, %v1717
      %v1721 = vadd.f32 %v1704, %v1717
      %v1722 = vadd.f32 %v1705, %v1717
      %v1723 = vadd.f32 %v1706, %v1717
      %v1724 = vadd.f32 %v1707, %v1717
      %v1725 = vadd.f32 %v1708, %v1717
      %v1726 = vadd.f32 %v1709, %v1717
      %v1727 = vadd.f32 %v1710, %v1717
      %v1728 = vadd.f32 %v1711, %v1717
      %v1729 = vmax.f32 %v1719, 0.0
      %v1730 = vmax.f32 %v1720, 0.0
      %v1731 = vmax.f32 %v1721, 0.0
      %v1732 = vmax.f32 %v1722, 0.0
      %v1733 = vmax.f32 %v1723, 0.0
      %v1734 = vmax.f32 %v1724, 0.0
      %v1735 = vmax.f32 %v1725, 0.0
      %v1736 = vmax.f32 %v1726, 0.0
      %v1737 = vmax.f32 %v1727, 0.0
      %v1738 = vmax.f32 %v1728, 0.0
      %v1739 = vpack.c.bf16 %v1730, %v1729
      %v1740 = vpack.c.bf16 %v1732, %v1731
      %v1741 = vpack.c.bf16 %v1734, %v1733
      %v1742 = vpack.c.bf16 %v1736, %v1735
      %v1743 = vpack.c.bf16 %v1738, %v1737
      %v1749 = vunpack.c.l.b16 %v1739
      %v1750 = vunpack.c.h.b16 %v1739
      %v1751 = vunpack.c.l.b16 %v1740
      %v1752 = vunpack.c.h.b16 %v1740
      %v1753 = vunpack.c.l.b16 %v1741
      %v1754 = vunpack.c.h.b16 %v1741
      %v1755 = vunpack.c.l.b16 %v1742
      %v1756 = vunpack.c.h.b16 %v1742
      %v1757 = vunpack.c.l.b16 %v1743
      %v1758 = vunpack.c.h.b16 %v1743
      %v1759 = vpack.c.b16 %v1749, %v1749
      %v1760 = vpack.c.b16 %v1750, %v1750
      %v1761 = vpack.c.b16 %v1751, %v1751
      %v1762 = vpack.c.b16 %v1752, %v1752
      %v1763 = vpack.c.b16 %v1753, %v1753
      %v1764 = vpack.c.b16 %v1754, %v1754
      %v1765 = vpack.c.b16 %v1755, %v1755
      %v1766 = vpack.c.b16 %v1756, %v1756
      %v1767 = vpack.c.b16 %v1757, %v1757
      %v1768 = vpack.c.b16 %v1758, %v1758
      %vm1779 = vcmask 257024
      %1780 = vst.msk [vmem:[%s226] sm:$0xf] %vm1779, %v1759
      %1781 = vst.msk [vmem:[%s226 + $0x4] sm:$0xf] %vm1779, %v1760
      %1782 = vst.msk [vmem:[%s226 + $0x8] sm:$0xf] %vm1779, %v1761
      %1783 = vst.msk [vmem:[%s226 + $0xc] sm:$0xf] %vm1779, %v1762
      %1784 = vst.msk [vmem:[%s226 + $0x10] sm:$0xf] %vm1779, %v1763
      %1785 = vst.msk [vmem:[%s226 + $0x14] sm:$0xf] %vm1779, %v1764
      %1786 = vst.msk [vmem:[%s226 + $0x18] sm:$0xf] %vm1779, %v1765
      %1787 = vst.msk [vmem:[%s226 + $0x1c] sm:$0xf] %vm1779, %v1766
      %1788 = vst.msk [vmem:[%s226 + $0x20] sm:$0xf] %vm1779, %v1767
      %1789 = vst.msk [vmem:[%s226 + $0x24] sm:$0xf] %vm1779, %v1768
      %p1790 = scmp.lt.s32.totalorder %s18, 1
      %s1791 = scalar_select %p1790, %s18, 1
      %p1792 = scmp.lt.s32.totalorder %s19, 0
      %s1793 = scalar_select %p1792, %s19, 0
      %s1794 = smul.addr %s1791, 10
      %s1795 = sadd.s32 %s1793, %s1794
      %s1796 = smul.addr %s1795, 4
      %s1797 = scalar_lea.vmem %s3, %s1796
      // Predicated region
      $region33: #{bottleneck_forward.4} parent=31 // pred_check
        %p1798 = pneg %p124
      $region34: #{bottleneck_forward.4} parent=31 // pred_check_branch
        %1800 = sbr.rel (%p1798) target = $region36
      $region35: #{bottleneck_forward.4} parent=31 // pred_region
        _
      $region36: #{bottleneck_forward.4} parent=31 // pred_fallthru
        _
    $region32: #{bottleneck_forward.4} parent=5 // pred_fallthru
      _
    %p1801 = scmp.le.s32.totalorder 2, %s9
    // Predicated region
    $region37: #{bottleneck_forward.4} parent=5 // pred_check
      %p1802 = pneg %p1801
    $region38: #{bottleneck_forward.4} parent=5 // pred_check_branch
      %1804 = sbr.rel (%p1802) target = $region40
    $region39: #{bottleneck_forward.4} parent=5 // pred_region
      %s1805 = ssub.s32 %s9, 2
      // Predicated region
      $region41: #{bottleneck_forward.4} parent=39 // pred_check
        %p1806 = pneg %p130
      $region42: #{bottleneck_forward.4} parent=39 // pred_check_branch
        %1808 = sbr.rel (%p1806) target = $region44
      $region43: #{bottleneck_forward.4} parent=39 // pred_region
        %p1809 = scmp.lt.s32.totalorder %s20, 1
        %s1810 = scalar_select %p1809, %s20, 1
        %p1811 = scmp.lt.s32.totalorder %s21, 0
        %s1812 = scalar_select %p1811, %s21, 0
        %s1813 = smul.addr %s1810, 10
        %s1814 = sadd.s32 %s1812, %s1813
        %s1815 = smul.addr %s1814, 4
        %s1816 = scalar_lea.vmem %s3, %s1815
      $region44: #{bottleneck_forward.4} parent=39 // pred_fallthru
        _
    $region40: #{bottleneck_forward.4} parent=5 // pred_fallthru
      _
  $region6: #{bottleneck_forward.4} parent=0 // loop_footer
    %s13 = sadd.s32 1, %s9
  $region7: #{bottleneck_forward.4} parent=0 // loop_footer_branch
    %8 = sbr.rel target = $region3
  $region8: #{bottleneck_forward.4} parent=0 // loop_exit
    _

</llo_original>
